<compile_context>
chip_gen: v7x
topology: tpu7x:2x2x1
jax: 0.10.0
libtpu: 0.0.40
codegen_flags: <defaults>
</compile_context>

<pallas_src>
import jax
import jax.numpy as jnp
import numpy as np
from jax import lax
from jax.experimental import pallas as pl
from jax.experimental.pallas import tpu as pltpu

B_PAD = 8  # sublane-aligned batch rows carried through the recurrence


def lstm_fc_kernel(x_ref, wih_ref, b_ref, wfc_ref, bfc_ref, whh_hbm,
                   out_ref, gx_ref, whh_vmem, dma_sem):
    """Single-invocation kernel: DMA-overlapped setup + unrolled LSTM + FC.

    x_ref    : (T*8, F)     time-major, batch padded to 8 rows per step (VMEM)
    wih_ref  : (F, 4H)      input->gates weight, f32, gate order [i,f,o,g] (VMEM)
    b_ref    : (1, 4H)      combined bias (b_ih + b_hh), [i,f,o,g] (VMEM)
    wfc_ref  : (H, O)       fc weight, pre-transposed (VMEM)
    bfc_ref  : (1, O)       fc bias (VMEM)
    whh_hbm  : (H, 4H)      hidden->gates weight, bf16, [i,f,o,g] (ANY/HBM)
    out_ref  : (8, O)       logits for padded batch rows (VMEM)
    gx_ref   : (T, 8, 4H)   f32 scratch for the hoisted input projection
    whh_vmem : (H, 4H)      bf16 scratch, DMA target for whh
    dma_sem  : DMA semaphore
    """
    T = gx_ref.shape[0]
    Bp = gx_ref.shape[1]
    H = whh_vmem.shape[0]
    F = wih_ref.shape[0]

    # Kick off the Whh HBM->VMEM DMA; hide it behind the input projection.
    whh_copy = pltpu.make_async_copy(whh_hbm, whh_vmem, dma_sem)
    whh_copy.start()

    # Hoisted input projection for all timesteps as F broadcast FMAs on the
    # VPU (contraction dim F=4 is degenerate for the MXU).
    x = x_ref[...]                                      # (T*8, F) f32
    wih = wih_ref[...]                                  # (F, 4H)  f32
    gx = b_ref[...] + x[:, 0:1] * wih[0:1, :]           # (T*8, 4H)
    for f in range(1, F):
        gx = gx + x[:, f:f + 1] * wih[f:f + 1, :]
    gx_ref[...] = gx.reshape(T, Bp, 4 * H)

    # Whh must be resident before the recurrence.
    whh_copy.wait()
    whh = whh_vmem[...]                                 # (H, 4H) bf16

    h = jnp.zeros((Bp, H), jnp.float32)
    c = jnp.zeros((Bp, H), jnp.float32)

    # Static unroll: T is small and fixed, h/c stay in vregs, per-step gate
    # precomputation is re-loaded from VMEM scratch (sublane-aligned (8,4H)
    # tiles), keeping vreg pressure low across the single basic block.
    for t in range(T):
        gates = gx_ref[t] + jnp.dot(h.astype(jnp.bfloat16), whh,
                                    preferred_element_type=jnp.float32)
        s = jax.nn.sigmoid(gates[:, :3 * H])            # i, f, o in one EUP pass
        g = jnp.tanh(gates[:, 3 * H:])                  # g
        i_g = s[:, 0 * H:1 * H]
        f_g = s[:, 1 * H:2 * H]
        o_g = s[:, 2 * H:3 * H]
        c = f_g * c + i_g * g
        h = o_g * jnp.tanh(c)

    # Last-timestep hidden -> fc.  O=5 -> masked store; one-time, negligible.
    out_ref[...] = (jnp.dot(h, wfc_ref[...],
                            preferred_element_type=jnp.float32)
                    + bfc_ref[...]).astype(out_ref.dtype)


def _reorder_gates_last(a, H):
    """Permute PyTorch gate blocks [i,f,g,o] -> [i,f,o,g] along the last axis."""
    i = a[..., 0 * H:1 * H]
    f = a[..., 1 * H:2 * H]
    g = a[..., 2 * H:3 * H]
    o = a[..., 3 * H:4 * H]
    return jnp.concatenate([i, f, o, g], axis=-1)


def prepare_params(w_ih, w_hh, b_ih, b_hh, w_fc, b_fc):
    """One-time parameter prep: transposes, bias fold, gate reorder, bf16 cast."""
    H = w_hh.shape[1]
    O = w_fc.shape[0]
    wih_t = _reorder_gates_last(jnp.transpose(w_ih), H)                  # (F, 4H) f32
    whh_t = _reorder_gates_last(jnp.transpose(w_hh), H)
    whh_t = whh_t.astype(jnp.bfloat16)                                   # (H, 4H) bf16
    b = _reorder_gates_last((b_ih + b_hh).reshape(1, 4 * H), H)          # (1, 4H) f32
    wfc_t = jnp.transpose(w_fc)                                          # (H, O)
    bfc = b_fc.reshape(1, O)                                             # (1, O)
    return (wih_t, whh_t, b, wfc_t, bfc)


@jax.jit
def timeseries_classifier(x, params):
    """x: (B, T, F) float32, params from prepare_params.  Returns logits (B, O)."""
    wih_t, whh_t, b, wfc_t, bfc = params
    B, T, F = x.shape
    H = whh_t.shape[0]
    O = wfc_t.shape[1]

    # Layout plumbing only: time-major flatten with batch padded to 8 sublanes
    # so step t owns the aligned row block [t*8, (t+1)*8).
    x_tm = jnp.transpose(x, (1, 0, 2))                      # (T, B, F)
    if B < B_PAD:
        x_tm = jnp.pad(x_tm, ((0, 0), (0, B_PAD - B), (0, 0)))
    x_2d = x_tm.reshape(T * B_PAD, F)

    vmem = pl.BlockSpec(memory_space=pltpu.MemorySpace.VMEM)
    hbm = pl.BlockSpec(memory_space=pl.ANY)

    out_pad = pl.pallas_call(
        lstm_fc_kernel,
        out_shape=jax.ShapeDtypeStruct((B_PAD, O), x.dtype),
        in_specs=[vmem, vmem, vmem, vmem, vmem, hbm],
        out_specs=vmem,
        scratch_shapes=[
            pltpu.VMEM((T, B_PAD, 4 * H), jnp.float32),     # hoisted gates_x
            pltpu.VMEM((H, 4 * H), jnp.bfloat16),           # Whh DMA target
            pltpu.SemaphoreType.DMA(()),
        ],
    )(x_2d, wih_t, b, wfc_t, bfc, whh_t)
    return out_pad[:B]


def reference(x, w_ih, w_hh, b_ih, b_hh, w_fc, b_fc):
    """Pure-JAX f32 reference matching torch.nn.LSTM + Linear."""
    B, T, F = x.shape
    H = w_hh.shape[1]

    def cell(carry, x_t):
        h, c = carry
        gates = x_t @ w_ih.T + b_ih + h @ w_hh.T + b_hh
        i = jax.nn.sigmoid(gates[:, 0 * H:1 * H])
        f = jax.nn.sigmoid(gates[:, 1 * H:2 * H])
        g = jnp.tanh(gates[:, 2 * H:3 * H])
        o = jax.nn.sigmoid(gates[:, 3 * H:4 * H])
        c = f * c + i * g
        h = o * jnp.tanh(c)
        return (h, c), None

    init = (jnp.zeros((B, H), jnp.float32), jnp.zeros((B, H), jnp.float32))
    (h, _), _ = lax.scan(cell, init, jnp.transpose(x, (1, 0, 2)))
    return h @ w_fc.T + b_fc


if __name__ == "__main__":
    # Module config: n_features=4, hidden_dim=256 (default), output_size=5.
    B, T, F, H, O = 2, 8, 4, 256, 5

    key = jax.random.PRNGKey(0)
    ks = jax.random.split(key, 7)
    scale = 1.0 / np.sqrt(H)  # PyTorch LSTM/Linear default init range

    x = jax.random.normal(ks[0], (B, T, F), dtype=jnp.float32)
    w_ih = jax.random.uniform(ks[1], (4 * H, F), jnp.float32, -scale, scale)
    w_hh = jax.random.uniform(ks[2], (4 * H, H), jnp.float32, -scale, scale)
    b_ih = jax.random.uniform(ks[3], (4 * H,), jnp.float32, -scale, scale)
    b_hh = jax.random.uniform(ks[4], (4 * H,), jnp.float32, -scale, scale)
    w_fc = jax.random.uniform(ks[5], (O, H), jnp.float32, -scale, scale)
    b_fc = jax.random.uniform(ks[6], (O,), jnp.float32, -scale, scale)

    params = prepare_params(w_ih, w_hh, b_ih, b_hh, w_fc, b_fc)  # one-time prep
    params = jax.tree_util.tree_map(jax.block_until_ready, params)

    out = timeseries_classifier(x, params)
    out = jax.block_until_ready(out)

    ref = jax.block_until_ready(reference(x, w_ih, w_hh, b_ih, b_hh, w_fc, b_fc))
    assert out.shape == (B, O), out.shape
    # Tolerance slightly relaxed vs pure-f32: Whh/h are bf16 MXU operands
    # (f32 accumulation), so recurrent rounding compounds over T.
    np.testing.assert_allclose(np.asarray(out), np.asarray(ref),
                               rtol=1e-2, atol=1e-3)

    print("KERNEL_OK")
</pallas_src>

<mosaic_0001>
module attributes {stable_mosaic.version = 11 : i64} {
  func.func @lstm_fc_kernel(%arg0: memref<64x4xf32, #tpu.memory_space<vmem>>, %arg1: memref<4x1024xf32, #tpu.memory_space<vmem>>, %arg2: memref<1x1024xf32, #tpu.memory_space<vmem>>, %arg3: memref<256x5xf32, #tpu.memory_space<vmem>>, %arg4: memref<1x5xf32, #tpu.memory_space<vmem>>, %arg5: memref<256x1024xbf16, #tpu.memory_space<any>>, %arg6: memref<8x5xf32, #tpu.memory_space<vmem>>, %arg7: memref<8x8x1024xf32, #tpu.memory_space<vmem>>, %arg8: memref<256x1024xbf16, #tpu.memory_space<vmem>>, %arg9: memref<!tpu.dma_semaphore, #tpu.memory_space<semaphore_mem>>) attributes {dimension_semantics = [], scalar_prefetch = 0 : i64, scratch_operands = 3 : i64, tpu.core_type = #tpu.core_type<tc>} {
    tpu.enqueue_dma source(%arg5 : memref<256x1024xbf16, #tpu.memory_space<any>>) target(%arg8 : memref<256x1024xbf16, #tpu.memory_space<vmem>>) target_semaphore(%arg9 : memref<!tpu.dma_semaphore, #tpu.memory_space<semaphore_mem>>)
    %c0 = arith.constant 0 : index
    %c0_0 = arith.constant 0 : index
    %0 = vector.load %arg0[%c0, %c0_0] : memref<64x4xf32, #tpu.memory_space<vmem>>, vector<64x4xf32>
    %c0_1 = arith.constant 0 : index
    %c0_2 = arith.constant 0 : index
    %1 = vector.load %arg1[%c0_1, %c0_2] : memref<4x1024xf32, #tpu.memory_space<vmem>>, vector<4x1024xf32>
    %c0_3 = arith.constant 0 : index
    %c0_4 = arith.constant 0 : index
    %2 = vector.load %arg2[%c0_3, %c0_4] : memref<1x1024xf32, #tpu.memory_space<vmem>>, vector<1x1024xf32>
    %3 = vector.extract_strided_slice %0 {offsets = [0, 0], sizes = [64, 1], strides = [1, 1]} : vector<64x4xf32> to vector<64x1xf32>
    %4 = vector.extract_strided_slice %1 {offsets = [0, 0], sizes = [1, 1024], strides = [1, 1]} : vector<4x1024xf32> to vector<1x1024xf32>
    %5 = vector.broadcast %3 : vector<64x1xf32> to vector<64x1024xf32>
    %6 = vector.broadcast %4 : vector<1x1024xf32> to vector<64x1024xf32>
    %7 = arith.mulf %5, %6 : vector<64x1024xf32>
    %8 = vector.broadcast %2 : vector<1x1024xf32> to vector<64x1024xf32>
    %9 = arith.addf %8, %7 : vector<64x1024xf32>
    %10 = vector.extract_strided_slice %0 {offsets = [0, 1], sizes = [64, 1], strides = [1, 1]} : vector<64x4xf32> to vector<64x1xf32>
    %11 = vector.extract_strided_slice %1 {offsets = [1, 0], sizes = [1, 1024], strides = [1, 1]} : vector<4x1024xf32> to vector<1x1024xf32>
    %12 = vector.broadcast %10 : vector<64x1xf32> to vector<64x1024xf32>
    %13 = vector.broadcast %11 : vector<1x1024xf32> to vector<64x1024xf32>
    %14 = arith.mulf %12, %13 : vector<64x1024xf32>
    %15 = arith.addf %9, %14 : vector<64x1024xf32>
    %16 = vector.extract_strided_slice %0 {offsets = [0, 2], sizes = [64, 1], strides = [1, 1]} : vector<64x4xf32> to vector<64x1xf32>
    %17 = vector.extract_strided_slice %1 {offsets = [2, 0], sizes = [1, 1024], strides = [1, 1]} : vector<4x1024xf32> to vector<1x1024xf32>
    %18 = vector.broadcast %16 : vector<64x1xf32> to vector<64x1024xf32>
    %19 = vector.broadcast %17 : vector<1x1024xf32> to vector<64x1024xf32>
    %20 = arith.mulf %18, %19 : vector<64x1024xf32>
    %21 = arith.addf %15, %20 : vector<64x1024xf32>
    %22 = vector.extract_strided_slice %0 {offsets = [0, 3], sizes = [64, 1], strides = [1, 1]} : vector<64x4xf32> to vector<64x1xf32>
    %23 = vector.extract_strided_slice %1 {offsets = [3, 0], sizes = [1, 1024], strides = [1, 1]} : vector<4x1024xf32> to vector<1x1024xf32>
    %24 = vector.broadcast %22 : vector<64x1xf32> to vector<64x1024xf32>
    %25 = vector.broadcast %23 : vector<1x1024xf32> to vector<64x1024xf32>
    %26 = arith.mulf %24, %25 : vector<64x1024xf32>
    %27 = arith.addf %21, %26 : vector<64x1024xf32>
    %28 = vector.shape_cast %27 : vector<64x1024xf32> to vector<8x8x1024xf32>
    %c0_5 = arith.constant 0 : index
    %c0_6 = arith.constant 0 : index
    %c0_7 = arith.constant 0 : index
    %29 = vector.load %arg7[%c0_5, %c0_6, %c0_7] : memref<8x8x1024xf32, #tpu.memory_space<vmem>>, vector<8x8x1024xf32>
    tpu.vector_store %arg7[%c0_5, %c0_6, %c0_7], %28 {strides = array<i32>} : memref<8x8x1024xf32, #tpu.memory_space<vmem>>, vector<8x8x1024xf32>,
    tpu.wait_dma2 semaphore(%arg9 : memref<!tpu.dma_semaphore, #tpu.memory_space<semaphore_mem>>) src(%arg5 : memref<256x1024xbf16, #tpu.memory_space<any>>) dst(%arg8 : memref<256x1024xbf16, #tpu.memory_space<vmem>>)
    %c0_8 = arith.constant 0 : index
    %c0_9 = arith.constant 0 : index
    %30 = vector.load %arg8[%c0_8, %c0_9] : memref<256x1024xbf16, #tpu.memory_space<vmem>>, vector<256x1024xbf16>
    %cst = arith.constant 0.000000e+00 : f32
    %31 = vector.broadcast %cst : f32 to vector<8x256xf32>
    %cst_10 = arith.constant 0.000000e+00 : f32
    %32 = vector.broadcast %cst_10 : f32 to vector<8x256xf32>
    %c0_11 = arith.constant 0 : index
    %c0_12 = arith.constant 0 : index
    %c0_13 = arith.constant 0 : index
    %33 = vector.load %arg7[%c0_11, %c0_12, %c0_13] : memref<8x8x1024xf32, #tpu.memory_space<vmem>>, vector<1x8x1024xf32>
    %34 = vector.shape_cast %33 : vector<1x8x1024xf32> to vector<8x1024xf32>
    %35 = arith.truncf %31 : vector<8x256xf32> to vector<8x256xbf16>
    %cst_14 = arith.constant dense<0.000000e+00> : vector<8x1024xf32>
    %36 = tpu.matmul %35, %30, %cst_14 {dimension_numbers = #tpu.dot_dimension_numbers<[1], [0], [0], [1], [0, 0, 1, 1], [], []>} : vector<8x256xbf16>, vector<256x1024xbf16>, vector<8x1024xf32> -> vector<8x1024xf32>
    %37 = arith.addf %34, %36 : vector<8x1024xf32>
    %38 = vector.extract_strided_slice %37 {offsets = [0, 0], sizes = [8, 768], strides = [1, 1]} : vector<8x1024xf32> to vector<8x768xf32>
    %39 = arith.negf %38 : vector<8x768xf32>
    %40 = math.exp %39 : vector<8x768xf32>
    %cst_15 = arith.constant 1.000000e+00 : f32
    %41 = vector.broadcast %cst_15 : f32 to vector<8x768xf32>
    %42 = arith.addf %41, %40 : vector<8x768xf32>
    %43 = arith.divf %41, %42 : vector<8x768xf32>
    %44 = vector.extract_strided_slice %37 {offsets = [0, 768], sizes = [8, 256], strides = [1, 1]} : vector<8x1024xf32> to vector<8x256xf32>
    %45 = math.tanh %44 : vector<8x256xf32>
    %46 = vector.extract_strided_slice %43 {offsets = [0, 0], sizes = [8, 256], strides = [1, 1]} : vector<8x768xf32> to vector<8x256xf32>
    %47 = vector.extract_strided_slice %43 {offsets = [0, 256], sizes = [8, 256], strides = [1, 1]} : vector<8x768xf32> to vector<8x256xf32>
    %48 = vector.extract_strided_slice %43 {offsets = [0, 512], sizes = [8, 256], strides = [1, 1]} : vector<8x768xf32> to vector<8x256xf32>
    %49 = arith.mulf %47, %32 : vector<8x256xf32>
    %50 = arith.mulf %46, %45 : vector<8x256xf32>
    %51 = arith.addf %49, %50 : vector<8x256xf32>
    %52 = math.tanh %51 : vector<8x256xf32>
    %53 = arith.mulf %48, %52 : vector<8x256xf32>
    %c1 = arith.constant 1 : index
    %c0_16 = arith.constant 0 : index
    %c0_17 = arith.constant 0 : index
    %54 = vector.load %arg7[%c1, %c0_16, %c0_17] : memref<8x8x1024xf32, #tpu.memory_space<vmem>>, vector<1x8x1024xf32>
    %55 = vector.shape_cast %54 : vector<1x8x1024xf32> to vector<8x1024xf32>
    %56 = arith.truncf %53 : vector<8x256xf32> to vector<8x256xbf16>
    %cst_18 = arith.constant dense<0.000000e+00> : vector<8x1024xf32>
    %57 = tpu.matmul %56, %30, %cst_18 {dimension_numbers = #tpu.dot_dimension_numbers<[1], [0], [0], [1], [0, 0, 1, 1], [], []>} : vector<8x256xbf16>, vector<256x1024xbf16>, vector<8x1024xf32> -> vector<8x1024xf32>
    %58 = arith.addf %55, %57 : vector<8x1024xf32>
    %59 = vector.extract_strided_slice %58 {offsets = [0, 0], sizes = [8, 768], strides = [1, 1]} : vector<8x1024xf32> to vector<8x768xf32>
    %60 = arith.negf %59 : vector<8x768xf32>
    %61 = math.exp %60 : vector<8x768xf32>
    %cst_19 = arith.constant 1.000000e+00 : f32
    %62 = vector.broadcast %cst_19 : f32 to vector<8x768xf32>
    %63 = arith.addf %62, %61 : vector<8x768xf32>
    %64 = arith.divf %62, %63 : vector<8x768xf32>
    %65 = vector.extract_strided_slice %58 {offsets = [0, 768], sizes = [8, 256], strides = [1, 1]} : vector<8x1024xf32> to vector<8x256xf32>
    %66 = math.tanh %65 : vector<8x256xf32>
    %67 = vector.extract_strided_slice %64 {offsets = [0, 0], sizes = [8, 256], strides = [1, 1]} : vector<8x768xf32> to vector<8x256xf32>
    %68 = vector.extract_strided_slice %64 {offsets = [0, 256], sizes = [8, 256], strides = [1, 1]} : vector<8x768xf32> to vector<8x256xf32>
    %69 = vector.extract_strided_slice %64 {offsets = [0, 512], sizes = [8, 256], strides = [1, 1]} : vector<8x768xf32> to vector<8x256xf32>
    %70 = arith.mulf %68, %51 : vector<8x256xf32>
    %71 = arith.mulf %67, %66 : vector<8x256xf32>
    %72 = arith.addf %70, %71 : vector<8x256xf32>
    %73 = math.tanh %72 : vector<8x256xf32>
    %74 = arith.mulf %69, %73 : vector<8x256xf32>
    %c2 = arith.constant 2 : index
    %c0_20 = arith.constant 0 : index
    %c0_21 = arith.constant 0 : index
    %75 = vector.load %arg7[%c2, %c0_20, %c0_21] : memref<8x8x1024xf32, #tpu.memory_space<vmem>>, vector<1x8x1024xf32>
    %76 = vector.shape_cast %75 : vector<1x8x1024xf32> to vector<8x1024xf32>
    %77 = arith.truncf %74 : vector<8x256xf32> to vector<8x256xbf16>
    %cst_22 = arith.constant dense<0.000000e+00> : vector<8x1024xf32>
    %78 = tpu.matmul %77, %30, %cst_22 {dimension_numbers = #tpu.dot_dimension_numbers<[1], [0], [0], [1], [0, 0, 1, 1], [], []>} : vector<8x256xbf16>, vector<256x1024xbf16>, vector<8x1024xf32> -> vector<8x1024xf32>
    %79 = arith.addf %76, %78 : vector<8x1024xf32>
    %80 = vector.extract_strided_slice %79 {offsets = [0, 0], sizes = [8, 768], strides = [1, 1]} : vector<8x1024xf32> to vector<8x768xf32>
    %81 = arith.negf %80 : vector<8x768xf32>
    %82 = math.exp %81 : vector<8x768xf32>
    %cst_23 = arith.constant 1.000000e+00 : f32
    %83 = vector.broadcast %cst_23 : f32 to vector<8x768xf32>
    %84 = arith.addf %83, %82 : vector<8x768xf32>
    %85 = arith.divf %83, %84 : vector<8x768xf32>
    %86 = vector.extract_strided_slice %79 {offsets = [0, 768], sizes = [8, 256], strides = [1, 1]} : vector<8x1024xf32> to vector<8x256xf32>
    %87 = math.tanh %86 : vector<8x256xf32>
    %88 = vector.extract_strided_slice %85 {offsets = [0, 0], sizes = [8, 256], strides = [1, 1]} : vector<8x768xf32> to vector<8x256xf32>
    %89 = vector.extract_strided_slice %85 {offsets = [0, 256], sizes = [8, 256], strides = [1, 1]} : vector<8x768xf32> to vector<8x256xf32>
    %90 = vector.extract_strided_slice %85 {offsets = [0, 512], sizes = [8, 256], strides = [1, 1]} : vector<8x768xf32> to vector<8x256xf32>
    %91 = arith.mulf %89, %72 : vector<8x256xf32>
    %92 = arith.mulf %88, %87 : vector<8x256xf32>
    %93 = arith.addf %91, %92 : vector<8x256xf32>
    %94 = math.tanh %93 : vector<8x256xf32>
    %95 = arith.mulf %90, %94 : vector<8x256xf32>
    %c3 = arith.constant 3 : index
    %c0_24 = arith.constant 0 : index
    %c0_25 = arith.constant 0 : index
    %96 = vector.load %arg7[%c3, %c0_24, %c0_25] : memref<8x8x1024xf32, #tpu.memory_space<vmem>>, vector<1x8x1024xf32>
    %97 = vector.shape_cast %96 : vector<1x8x1024xf32> to vector<8x1024xf32>
    %98 = arith.truncf %95 : vector<8x256xf32> to vector<8x256xbf16>
    %cst_26 = arith.constant dense<0.000000e+00> : vector<8x1024xf32>
    %99 = tpu.matmul %98, %30, %cst_26 {dimension_numbers = #tpu.dot_dimension_numbers<[1], [0], [0], [1], [0, 0, 1, 1], [], []>} : vector<8x256xbf16>, vector<256x1024xbf16>, vector<8x1024xf32> -> vector<8x1024xf32>
    %100 = arith.addf %97, %99 : vector<8x1024xf32>
    %101 = vector.extract_strided_slice %100 {offsets = [0, 0], sizes = [8, 768], strides = [1, 1]} : vector<8x1024xf32> to vector<8x768xf32>
    %102 = arith.negf %101 : vector<8x768xf32>
    %103 = math.exp %102 : vector<8x768xf32>
    %cst_27 = arith.constant 1.000000e+00 : f32
    %104 = vector.broadcast %cst_27 : f32 to vector<8x768xf32>
    %105 = arith.addf %104, %103 : vector<8x768xf32>
    %106 = arith.divf %104, %105 : vector<8x768xf32>
    %107 = vector.extract_strided_slice %100 {offsets = [0, 768], sizes = [8, 256], strides = [1, 1]} : vector<8x1024xf32> to vector<8x256xf32>
    %108 = math.tanh %107 : vector<8x256xf32>
    %109 = vector.extract_strided_slice %106 {offsets = [0, 0], sizes = [8, 256], strides = [1, 1]} : vector<8x768xf32> to vector<8x256xf32>
    %110 = vector.extract_strided_slice %106 {offsets = [0, 256], sizes = [8, 256], strides = [1, 1]} : vector<8x768xf32> to vector<8x256xf32>
    %111 = vector.extract_strided_slice %106 {offsets = [0, 512], sizes = [8, 256], strides = [1, 1]} : vector<8x768xf32> to vector<8x256xf32>
    %112 = arith.mulf %110, %93 : vector<8x256xf32>
    %113 = arith.mulf %109, %108 : vector<8x256xf32>
    %114 = arith.addf %112, %113 : vector<8x256xf32>
    %115 = math.tanh %114 : vector<8x256xf32>
    %116 = arith.mulf %111, %115 : vector<8x256xf32>
    %c4 = arith.constant 4 : index
    %c0_28 = arith.constant 0 : index
    %c0_29 = arith.constant 0 : index
    %117 = vector.load %arg7[%c4, %c0_28, %c0_29] : memref<8x8x1024xf32, #tpu.memory_space<vmem>>, vector<1x8x1024xf32>
    %118 = vector.shape_cast %117 : vector<1x8x1024xf32> to vector<8x1024xf32>
    %119 = arith.truncf %116 : vector<8x256xf32> to vector<8x256xbf16>
    %cst_30 = arith.constant dense<0.000000e+00> : vector<8x1024xf32>
    %120 = tpu.matmul %119, %30, %cst_30 {dimension_numbers = #tpu.dot_dimension_numbers<[1], [0], [0], [1], [0, 0, 1, 1], [], []>} : vector<8x256xbf16>, vector<256x1024xbf16>, vector<8x1024xf32> -> vector<8x1024xf32>
    %121 = arith.addf %118, %120 : vector<8x1024xf32>
    %122 = vector.extract_strided_slice %121 {offsets = [0, 0], sizes = [8, 768], strides = [1, 1]} : vector<8x1024xf32> to vector<8x768xf32>
    %123 = arith.negf %122 : vector<8x768xf32>
    %124 = math.exp %123 : vector<8x768xf32>
    %cst_31 = arith.constant 1.000000e+00 : f32
    %125 = vector.broadcast %cst_31 : f32 to vector<8x768xf32>
    %126 = arith.addf %125, %124 : vector<8x768xf32>
    %127 = arith.divf %125, %126 : vector<8x768xf32>
    %128 = vector.extract_strided_slice %121 {offsets = [0, 768], sizes = [8, 256], strides = [1, 1]} : vector<8x1024xf32> to vector<8x256xf32>
    %129 = math.tanh %128 : vector<8x256xf32>
    %130 = vector.extract_strided_slice %127 {offsets = [0, 0], sizes = [8, 256], strides = [1, 1]} : vector<8x768xf32> to vector<8x256xf32>
    %131 = vector.extract_strided_slice %127 {offsets = [0, 256], sizes = [8, 256], strides = [1, 1]} : vector<8x768xf32> to vector<8x256xf32>
    %132 = vector.extract_strided_slice %127 {offsets = [0, 512], sizes = [8, 256], strides = [1, 1]} : vector<8x768xf32> to vector<8x256xf32>
    %133 = arith.mulf %131, %114 : vector<8x256xf32>
    %134 = arith.mulf %130, %129 : vector<8x256xf32>
    %135 = arith.addf %133, %134 : vector<8x256xf32>
    %136 = math.tanh %135 : vector<8x256xf32>
    %137 = arith.mulf %132, %136 : vector<8x256xf32>
    %c5 = arith.constant 5 : index
    %c0_32 = arith.constant 0 : index
    %c0_33 = arith.constant 0 : index
    %138 = vector.load %arg7[%c5, %c0_32, %c0_33] : memref<8x8x1024xf32, #tpu.memory_space<vmem>>, vector<1x8x1024xf32>
    %139 = vector.shape_cast %138 : vector<1x8x1024xf32> to vector<8x1024xf32>
    %140 = arith.truncf %137 : vector<8x256xf32> to vector<8x256xbf16>
    %cst_34 = arith.constant dense<0.000000e+00> : vector<8x1024xf32>
    %141 = tpu.matmul %140, %30, %cst_34 {dimension_numbers = #tpu.dot_dimension_numbers<[1], [0], [0], [1], [0, 0, 1, 1], [], []>} : vector<8x256xbf16>, vector<256x1024xbf16>, vector<8x1024xf32> -> vector<8x1024xf32>
    %142 = arith.addf %139, %141 : vector<8x1024xf32>
    %143 = vector.extract_strided_slice %142 {offsets = [0, 0], sizes = [8, 768], strides = [1, 1]} : vector<8x1024xf32> to vector<8x768xf32>
    %144 = arith.negf %143 : vector<8x768xf32>
    %145 = math.exp %144 : vector<8x768xf32>
    %cst_35 = arith.constant 1.000000e+00 : f32
    %146 = vector.broadcast %cst_35 : f32 to vector<8x768xf32>
    %147 = arith.addf %146, %145 : vector<8x768xf32>
    %148 = arith.divf %146, %147 : vector<8x768xf32>
    %149 = vector.extract_strided_slice %142 {offsets = [0, 768], sizes = [8, 256], strides = [1, 1]} : vector<8x1024xf32> to vector<8x256xf32>
    %150 = math.tanh %149 : vector<8x256xf32>
    %151 = vector.extract_strided_slice %148 {offsets = [0, 0], sizes = [8, 256], strides = [1, 1]} : vector<8x768xf32> to vector<8x256xf32>
    %152 = vector.extract_strided_slice %148 {offsets = [0, 256], sizes = [8, 256], strides = [1, 1]} : vector<8x768xf32> to vector<8x256xf32>
    %153 = vector.extract_strided_slice %148 {offsets = [0, 512], sizes = [8, 256], strides = [1, 1]} : vector<8x768xf32> to vector<8x256xf32>
    %154 = arith.mulf %152, %135 : vector<8x256xf32>
    %155 = arith.mulf %151, %150 : vector<8x256xf32>
    %156 = arith.addf %154, %155 : vector<8x256xf32>
    %157 = math.tanh %156 : vector<8x256xf32>
    %158 = arith.mulf %153, %157 : vector<8x256xf32>
    %c6 = arith.constant 6 : index
    %c0_36 = arith.constant 0 : index
    %c0_37 = arith.constant 0 : index
    %159 = vector.load %arg7[%c6, %c0_36, %c0_37] : memref<8x8x1024xf32, #tpu.memory_space<vmem>>, vector<1x8x1024xf32>
    %160 = vector.shape_cast %159 : vector<1x8x1024xf32> to vector<8x1024xf32>
    %161 = arith.truncf %158 : vector<8x256xf32> to vector<8x256xbf16>
    %cst_38 = arith.constant dense<0.000000e+00> : vector<8x1024xf32>
    %162 = tpu.matmul %161, %30, %cst_38 {dimension_numbers = #tpu.dot_dimension_numbers<[1], [0], [0], [1], [0, 0, 1, 1], [], []>} : vector<8x256xbf16>, vector<256x1024xbf16>, vector<8x1024xf32> -> vector<8x1024xf32>
    %163 = arith.addf %160, %162 : vector<8x1024xf32>
    %164 = vector.extract_strided_slice %163 {offsets = [0, 0], sizes = [8, 768], strides = [1, 1]} : vector<8x1024xf32> to vector<8x768xf32>
    %165 = arith.negf %164 : vector<8x768xf32>
    %166 = math.exp %165 : vector<8x768xf32>
    %cst_39 = arith.constant 1.000000e+00 : f32
    %167 = vector.broadcast %cst_39 : f32 to vector<8x768xf32>
    %168 = arith.addf %167, %166 : vector<8x768xf32>
    %169 = arith.divf %167, %168 : vector<8x768xf32>
    %170 = vector.extract_strided_slice %163 {offsets = [0, 768], sizes = [8, 256], strides = [1, 1]} : vector<8x1024xf32> to vector<8x256xf32>
    %171 = math.tanh %170 : vector<8x256xf32>
    %172 = vector.extract_strided_slice %169 {offsets = [0, 0], sizes = [8, 256], strides = [1, 1]} : vector<8x768xf32> to vector<8x256xf32>
    %173 = vector.extract_strided_slice %169 {offsets = [0, 256], sizes = [8, 256], strides = [1, 1]} : vector<8x768xf32> to vector<8x256xf32>
    %174 = vector.extract_strided_slice %169 {offsets = [0, 512], sizes = [8, 256], strides = [1, 1]} : vector<8x768xf32> to vector<8x256xf32>
    %175 = arith.mulf %173, %156 : vector<8x256xf32>
    %176 = arith.mulf %172, %171 : vector<8x256xf32>
    %177 = arith.addf %175, %176 : vector<8x256xf32>
    %178 = math.tanh %177 : vector<8x256xf32>
    %179 = arith.mulf %174, %178 : vector<8x256xf32>
    %c7 = arith.constant 7 : index
    %c0_40 = arith.constant 0 : index
    %c0_41 = arith.constant 0 : index
    %180 = vector.load %arg7[%c7, %c0_40, %c0_41] : memref<8x8x1024xf32, #tpu.memory_space<vmem>>, vector<1x8x1024xf32>
    %181 = vector.shape_cast %180 : vector<1x8x1024xf32> to vector<8x1024xf32>
    %182 = arith.truncf %179 : vector<8x256xf32> to vector<8x256xbf16>
    %cst_42 = arith.constant dense<0.000000e+00> : vector<8x1024xf32>
    %183 = tpu.matmul %182, %30, %cst_42 {dimension_numbers = #tpu.dot_dimension_numbers<[1], [0], [0], [1], [0, 0, 1, 1], [], []>} : vector<8x256xbf16>, vector<256x1024xbf16>, vector<8x1024xf32> -> vector<8x1024xf32>
    %184 = arith.addf %181, %183 : vector<8x1024xf32>
    %185 = vector.extract_strided_slice %184 {offsets = [0, 0], sizes = [8, 768], strides = [1, 1]} : vector<8x1024xf32> to vector<8x768xf32>
    %186 = arith.negf %185 : vector<8x768xf32>
    %187 = math.exp %186 : vector<8x768xf32>
    %cst_43 = arith.constant 1.000000e+00 : f32
    %188 = vector.broadcast %cst_43 : f32 to vector<8x768xf32>
    %189 = arith.addf %188, %187 : vector<8x768xf32>
    %190 = arith.divf %188, %189 : vector<8x768xf32>
    %191 = vector.extract_strided_slice %184 {offsets = [0, 768], sizes = [8, 256], strides = [1, 1]} : vector<8x1024xf32> to vector<8x256xf32>
    %192 = math.tanh %191 : vector<8x256xf32>
    %193 = vector.extract_strided_slice %190 {offsets = [0, 0], sizes = [8, 256], strides = [1, 1]} : vector<8x768xf32> to vector<8x256xf32>
    %194 = vector.extract_strided_slice %190 {offsets = [0, 256], sizes = [8, 256], strides = [1, 1]} : vector<8x768xf32> to vector<8x256xf32>
    %195 = vector.extract_strided_slice %190 {offsets = [0, 512], sizes = [8, 256], strides = [1, 1]} : vector<8x768xf32> to vector<8x256xf32>
    %196 = arith.mulf %194, %177 : vector<8x256xf32>
    %197 = arith.mulf %193, %192 : vector<8x256xf32>
    %198 = arith.addf %196, %197 : vector<8x256xf32>
    %199 = math.tanh %198 : vector<8x256xf32>
    %200 = arith.mulf %195, %199 : vector<8x256xf32>
    %c0_44 = arith.constant 0 : index
    %c0_45 = arith.constant 0 : index
    %201 = vector.load %arg3[%c0_44, %c0_45] : memref<256x5xf32, #tpu.memory_space<vmem>>, vector<256x5xf32>
    %cst_46 = arith.constant dense<0.000000e+00> : vector<8x5xf32>
    %202 = tpu.matmul %200, %201, %cst_46 {dimension_numbers = #tpu.dot_dimension_numbers<[1], [0], [0], [1], [0, 0, 1, 1], [], []>} : vector<8x256xf32>, vector<256x5xf32>, vector<8x5xf32> -> vector<8x5xf32>
    %c0_47 = arith.constant 0 : index
    %c0_48 = arith.constant 0 : index
    %203 = vector.load %arg4[%c0_47, %c0_48] : memref<1x5xf32, #tpu.memory_space<vmem>>, vector<1x5xf32>
    %204 = vector.broadcast %203 : vector<1x5xf32> to vector<8x5xf32>
    %205 = arith.addf %202, %204 : vector<8x5xf32>
    %c0_49 = arith.constant 0 : index
    %c0_50 = arith.constant 0 : index
    %206 = vector.load %arg6[%c0_49, %c0_50] : memref<8x5xf32, #tpu.memory_space<vmem>>, vector<8x5xf32>
    tpu.vector_store %arg6[%c0_49, %c0_50], %205 {strides = array<i32>} : memref<8x5xf32, #tpu.memory_space<vmem>>, vector<8x5xf32>,
    return
  }
}

</mosaic_0001>

<llo_original>
// kernel: timeseries_classifier.1
$region0: #{timeseries_classifier.1}
  #allocation0 [shape = 'u32[]', space=smem, size = 0x4, offset = 0x4, fixed_abs, tag = 'smem constant byte address 0x4 - core index']
  #allocation1 [shape = 'u32[144,128]{1,0:T(1,128)}', space=vmem, size = 0x12000, scoped, tag = 'internal scratch']
  #allocation2 [shape = 'f32[8,8,1024]{2,1,0:T(8,128)}', space=vmem, size = 0x40000, scoped, tag = 'scratch operand']
  #allocation3 [shape = 'bf16[256,1024]{1,0:T(16,128)(2,1)}', space=vmem, size = 0x80000, scoped, tag = 'scratch operand']
  #allocation4 [shape = 's32[1]{0}', space=sflag, size = 0x4, scoped, tag = 'scratch operand']
  #allocation5 [shape = 's32[]', space=sflag, size = 0x4, offset = 0, fixed_abs, tag = 'sflag constant byte address 0x0 - dummy sync flag']
  %s0 = inlined_call_operand.vmem [shape: f32[64,4], index: 0, kind: input, shape index: {}]
  %s1 = inlined_call_operand.vmem [shape: f32[4,1024], index: 1, kind: input, shape index: {}]
  %s2 = inlined_call_operand.vmem [shape: f32[1,1024], index: 2, kind: input, shape index: {}]
  %s3 = inlined_call_operand.vmem [shape: f32[256,5], index: 3, kind: input, shape index: {}]
  %s4 = inlined_call_operand.vmem [shape: f32[1,5], index: 4, kind: input, shape index: {}]
  %s5 = inlined_call_operand.hbm [shape: bf16[256,1024], index: 5, kind: input, shape index: {}]
  %s6 = inlined_call_operand.vmem [shape: f32[8,5], index: 6, kind: output, shape index: {}]
  %s7 = sld [smem:[#allocation0]]
  $region30: #{timeseries_classifier.1} parent=0
    _
  %s9 = ssub.s32 1, %s7
  %s10 = scalar_select 0, %s9, %s7
  $region1: #{timeseries_classifier.1} parent=0
    #allocation6 [shape = 'u32[9]{0}', space=smem, size = 0x24, scoped, tag = 'DMA stride descriptor']
    // Predicated region
    $region2: #{timeseries_classifier.1} parent=1 // pred_check
      _
    $region3: #{timeseries_classifier.1} parent=1 // pred_check_branch
      %12 = sbr.rel (0) target = $region5
    $region4: #{timeseries_classifier.1} parent=1 // pred_region
      _
    $region5: #{timeseries_classifier.1} parent=1 // pred_fallthru
      _
    // Predicated region
    $region6: #{timeseries_classifier.1} parent=1 // pred_check
      _
    $region7: #{timeseries_classifier.1} parent=1 // pred_check_branch
      %14 = sbr.rel (0) target = $region9
    $region8: #{timeseries_classifier.1} parent=1 // pred_region
      _
    $region9: #{timeseries_classifier.1} parent=1 // pred_fallthru
      _
    // Predicated region
    $region10: #{timeseries_classifier.1} parent=1 // pred_check
      _
    $region11: #{timeseries_classifier.1} parent=1 // pred_check_branch
      %16 = sbr.rel (0) target = $region13
    $region12: #{timeseries_classifier.1} parent=1 // pred_region
      _
    $region13: #{timeseries_classifier.1} parent=1 // pred_fallthru
      _
    // Predicated region
    $region14: #{timeseries_classifier.1} parent=1 // pred_check
      _
    $region15: #{timeseries_classifier.1} parent=1 // pred_check_branch
      %18 = sbr.rel (0) target = $region17
    $region16: #{timeseries_classifier.1} parent=1 // pred_region
      _
    $region17: #{timeseries_classifier.1} parent=1 // pred_fallthru
      _
    // Predicated region
    $region18: #{timeseries_classifier.1} parent=1 // pred_check
      _
    $region19: #{timeseries_classifier.1} parent=1 // pred_check_branch
      %20 = sbr.rel (0) target = $region21
    $region20: #{timeseries_classifier.1} parent=1 // pred_region
      _
    $region21: #{timeseries_classifier.1} parent=1 // pred_fallthru
      _
    %s23 = sshll.u32 1, 14
    %s24 = sxor.u32 4294967295, %s23
    %s26 = sld [smem:[#allocation0]]
    %s27 = sadd.s32 2, %s26
    %s29 = sshll.u32 7, 26
    %s30 = sxor.u32 4294967295, %s29
    %s31 = sand.u32 0, %s30
    %s32 = sshll.u32 %s27, 26
    %s33 = sor.u32 %s31, %s32
    %s34 = sshll.u32 [#allocation3], 4
    %s35 = int_to_ptr.vmem [resolvable:$true] %s34
    %38 = sst [smem:[#allocation6]] 1024
    %s39 = scalar_lea.smem [#allocation6], 1
    %40 = sst [smem:[%s39]] 1024
    %s41 = scalar_lea.smem [#allocation6], 2
    %42 = sst [smem:[%s41]] 8
    %s43 = scalar_lea.smem [#allocation6], 3
    %44 = sst [smem:[%s43]] 64
    %s45 = scalar_lea.smem [#allocation6], 4
    %46 = sst [smem:[%s45]] 128
    %s47 = scalar_lea.smem [#allocation6], 5
    %48 = sst [smem:[%s47]] 2
    %s49 = scalar_lea.smem [#allocation6], 6
    %50 = sst [smem:[%s49]] 512
    %s51 = scalar_lea.smem [#allocation6], 7
    %52 = sst [smem:[%s51]] 64
    %s53 = scalar_lea.smem [#allocation6], 8
    %54 = sst [smem:[%s53]] 4
    %56 = dma.general %s5, 16384, %s35, [#allocation4], [#allocation5], [#allocation6], %s33, 0
    %v57 = vld [vmem:[%s0] sm:$0xff]
    %v58 = vld [vmem:[%s0 + $0x8] sm:$0xff]
    %v59 = vld [vmem:[%s0 + $0x10] sm:$0xff]
    %v60 = vld [vmem:[%s0 + $0x18] sm:$0xff]
    %v61 = vld [vmem:[%s0 + $0x20] sm:$0xff]
    %v62 = vld [vmem:[%s0 + $0x28] sm:$0xff]
    %v63 = vld [vmem:[%s0 + $0x30] sm:$0xff]
    %v64 = vld [vmem:[%s0 + $0x38] sm:$0xff]
    %v65 = vld [vmem:[%s1] sm:$0xff]
    %v66 = vld [vmem:[%s1 + $0x8] sm:$0xff]
    %v67 = vld [vmem:[%s1 + $0x10] sm:$0xff]
    %v68 = vld [vmem:[%s1 + $0x18] sm:$0xff]
    %v69 = vld [vmem:[%s2] sm:$0xff]
    %71 = vset.pattern.permute.xlu0 0
    %72 = vperm.xlu0 %71, %v57
    %v73 = vpop.permute.xlu0 %72
    %76 = vset.pattern.permute.xlu0 0
    %77 = vperm.xlu0 %76, %v58
    %v78 = vpop.permute.xlu0 %77
    %81 = vset.pattern.permute.xlu0 0
    %82 = vperm.xlu0 %81, %v59
    %v83 = vpop.permute.xlu0 %82
    %86 = vset.pattern.permute.xlu0 0
    %87 = vperm.xlu0 %86, %v60
    %v88 = vpop.permute.xlu0 %87
    %91 = vset.pattern.permute.xlu0 0
    %92 = vperm.xlu0 %91, %v61
    %v93 = vpop.permute.xlu0 %92
    %96 = vset.pattern.permute.xlu0 0
    %97 = vperm.xlu0 %96, %v62
    %v98 = vpop.permute.xlu0 %97
    %101 = vset.pattern.permute.xlu0 0
    %102 = vperm.xlu0 %101, %v63
    %v103 = vpop.permute.xlu0 %102
    %106 = vset.pattern.permute.xlu0 0
    %107 = vperm.xlu0 %106, %v64
    %v108 = vpop.permute.xlu0 %107
    %v114 = vlaneseq
    %v115 = vshrl.u32 %v114, 7
    %v116 = vsub.s32 0, %v115
    %v117 = vrot.slane %v65, %v116
    %v118 = vlaneseq
    %v119 = vshrl.u32 %v118, 7
    %v120 = vsub.s32 4, %v119
    %v121 = vrot.slane %v65, %v120
    %v122 = vlaneseq
    %v123 = vshrl.u32 %v122, 7
    %v124 = vsub.s32 0, %v123
    %v125 = vrot.slane %v66, %v124
    %v126 = vlaneseq
    %v127 = vshrl.u32 %v126, 7
    %v128 = vsub.s32 4, %v127
    %v129 = vrot.slane %v66, %v128
    %v130 = vlaneseq
    %v131 = vshrl.u32 %v130, 7
    %v132 = vsub.s32 0, %v131
    %v133 = vrot.slane %v67, %v132
    %v134 = vlaneseq
    %v135 = vshrl.u32 %v134, 7
    %v136 = vsub.s32 4, %v135
    %v137 = vrot.slane %v67, %v136
    %v138 = vlaneseq
    %v139 = vshrl.u32 %v138, 7
    %v140 = vsub.s32 0, %v139
    %v141 = vrot.slane %v68, %v140
    %v142 = vlaneseq
    %v143 = vshrl.u32 %v142, 7
    %v144 = vsub.s32 4, %v143
    %v145 = vrot.slane %v68, %v144
    %v154 = vlaneseq
    %v155 = vshrl.u32 %v154, 7
    %v156 = vsub.s32 0, %v155
    %v157 = vrot.slane %v117, %v156
    %v158 = vlaneseq
    %v159 = vshrl.u32 %v158, 7
    %v160 = vsub.s32 0, %v159
    %v161 = vrot.slane %v121, %v160
    %v162 = vlaneseq
    %v163 = vshrl.u32 %v162, 7
    %v164 = vsub.s32 0, %v163
    %v165 = vrot.slane %v125, %v164
    %v166 = vlaneseq
    %v167 = vshrl.u32 %v166, 7
    %v168 = vsub.s32 0, %v167
    %v169 = vrot.slane %v129, %v168
    %v170 = vlaneseq
    %v171 = vshrl.u32 %v170, 7
    %v172 = vsub.s32 0, %v171
    %v173 = vrot.slane %v133, %v172
    %v174 = vlaneseq
    %v175 = vshrl.u32 %v174, 7
    %v176 = vsub.s32 0, %v175
    %v177 = vrot.slane %v137, %v176
    %v178 = vlaneseq
    %v179 = vshrl.u32 %v178, 7
    %v180 = vsub.s32 0, %v179
    %v181 = vrot.slane %v141, %v180
    %v182 = vlaneseq
    %v183 = vshrl.u32 %v182, 7
    %v184 = vsub.s32 0, %v183
    %v185 = vrot.slane %v145, %v184
    %v186 = vmul.f32 %v73, %v157
    %v187 = vmul.f32 %v73, %v161
    %v188 = vmul.f32 %v73, %v165
    %v189 = vmul.f32 %v73, %v169
    %v190 = vmul.f32 %v73, %v173
    %v191 = vmul.f32 %v73, %v177
    %v192 = vmul.f32 %v73, %v181
    %v193 = vmul.f32 %v73, %v185
    %v194 = vmul.f32 %v78, %v157
    %v195 = vmul.f32 %v78, %v161
    %v196 = vmul.f32 %v78, %v165
    %v197 = vmul.f32 %v78, %v169
    %v198 = vmul.f32 %v78, %v173
    %v199 = vmul.f32 %v78, %v177
    %v200 = vmul.f32 %v78, %v181
    %v201 = vmul.f32 %v78, %v185
    %v202 = vmul.f32 %v83, %v157
    %v203 = vmul.f32 %v83, %v161
    %v204 = vmul.f32 %v83, %v165
    %v205 = vmul.f32 %v83, %v169
    %v206 = vmul.f32 %v83, %v173
    %v207 = vmul.f32 %v83, %v177
    %v208 = vmul.f32 %v83, %v181
    %v209 = vmul.f32 %v83, %v185
    %v210 = vmul.f32 %v88, %v157
    %v211 = vmul.f32 %v88, %v161
    %v212 = vmul.f32 %v88, %v165
    %v213 = vmul.f32 %v88, %v169
    %v214 = vmul.f32 %v88, %v173
    %v215 = vmul.f32 %v88, %v177
    %v216 = vmul.f32 %v88, %v181
    %v217 = vmul.f32 %v88, %v185
    %v218 = vmul.f32 %v93, %v157
    %v219 = vmul.f32 %v93, %v161
    %v220 = vmul.f32 %v93, %v165
    %v221 = vmul.f32 %v93, %v169
    %v222 = vmul.f32 %v93, %v173
    %v223 = vmul.f32 %v93, %v177
    %v224 = vmul.f32 %v93, %v181
    %v225 = vmul.f32 %v93, %v185
    %v226 = vmul.f32 %v98, %v157
    %v227 = vmul.f32 %v98, %v161
    %v228 = vmul.f32 %v98, %v165
    %v229 = vmul.f32 %v98, %v169
    %v230 = vmul.f32 %v98, %v173
    %v231 = vmul.f32 %v98, %v177
    %v232 = vmul.f32 %v98, %v181
    %v233 = vmul.f32 %v98, %v185
    %v234 = vmul.f32 %v103, %v157
    %v235 = vmul.f32 %v103, %v161
    %v236 = vmul.f32 %v103, %v165
    %v237 = vmul.f32 %v103, %v169
    %v238 = vmul.f32 %v103, %v173
    %v239 = vmul.f32 %v103, %v177
    %v240 = vmul.f32 %v103, %v181
    %v241 = vmul.f32 %v103, %v185
    %v242 = vmul.f32 %v108, %v157
    %v243 = vmul.f32 %v108, %v161
    %v244 = vmul.f32 %v108, %v165
    %v245 = vmul.f32 %v108, %v169
    %v246 = vmul.f32 %v108, %v173
    %v247 = vmul.f32 %v108, %v177
    %v248 = vmul.f32 %v108, %v181
    %v249 = vmul.f32 %v108, %v185
    %v251 = vlaneseq
    %v252 = vshrl.u32 %v251, 7
    %v253 = vsub.s32 0, %v252
    %v254 = vrot.slane %v69, %v253
    %v255 = vlaneseq
    %v256 = vshrl.u32 %v255, 7
    %v257 = vsub.s32 1, %v256
    %v258 = vrot.slane %v69, %v257
    %v259 = vlaneseq
    %v260 = vshrl.u32 %v259, 7
    %v261 = vsub.s32 2, %v260
    %v262 = vrot.slane %v69, %v261
    %v263 = vlaneseq
    %v264 = vshrl.u32 %v263, 7
    %v265 = vsub.s32 3, %v264
    %v266 = vrot.slane %v69, %v265
    %v267 = vlaneseq
    %v268 = vshrl.u32 %v267, 7
    %v269 = vsub.s32 4, %v268
    %v270 = vrot.slane %v69, %v269
    %v271 = vlaneseq
    %v272 = vshrl.u32 %v271, 7
    %v273 = vsub.s32 5, %v272
    %v274 = vrot.slane %v69, %v273
    %v275 = vlaneseq
    %v276 = vshrl.u32 %v275, 7
    %v277 = vsub.s32 6, %v276
    %v278 = vrot.slane %v69, %v277
    %v279 = vlaneseq
    %v280 = vshrl.u32 %v279, 7
    %v281 = vsub.s32 7, %v280
    %v282 = vrot.slane %v69, %v281
    %v291 = vadd.f32 %v254, %v186
    %v292 = vadd.f32 %v258, %v187
    %v293 = vadd.f32 %v262, %v188
    %v294 = vadd.f32 %v266, %v189
    %v295 = vadd.f32 %v270, %v190
    %v296 = vadd.f32 %v274, %v191
    %v297 = vadd.f32 %v278, %v192
    %v298 = vadd.f32 %v282, %v193
    %v299 = vadd.f32 %v254, %v194
    %v300 = vadd.f32 %v258, %v195
    %v301 = vadd.f32 %v262, %v196
    %v302 = vadd.f32 %v266, %v197
    %v303 = vadd.f32 %v270, %v198
    %v304 = vadd.f32 %v274, %v199
    %v305 = vadd.f32 %v278, %v200
    %v306 = vadd.f32 %v282, %v201
    %v307 = vadd.f32 %v254, %v202
    %v308 = vadd.f32 %v258, %v203
    %v309 = vadd.f32 %v262, %v204
    %v310 = vadd.f32 %v266, %v205
    %v311 = vadd.f32 %v270, %v206
    %v312 = vadd.f32 %v274, %v207
    %v313 = vadd.f32 %v278, %v208
    %v314 = vadd.f32 %v282, %v209
    %v315 = vadd.f32 %v254, %v210
    %v316 = vadd.f32 %v258, %v211
    %v317 = vadd.f32 %v262, %v212
    %v318 = vadd.f32 %v266, %v213
    %v319 = vadd.f32 %v270, %v214
    %v320 = vadd.f32 %v274, %v215
    %v321 = vadd.f32 %v278, %v216
    %v322 = vadd.f32 %v282, %v217
    %v323 = vadd.f32 %v254, %v218
    %v324 = vadd.f32 %v258, %v219
    %v325 = vadd.f32 %v262, %v220
    %v326 = vadd.f32 %v266, %v221
    %v327 = vadd.f32 %v270, %v222
    %v328 = vadd.f32 %v274, %v223
    %v329 = vadd.f32 %v278, %v224
    %v330 = vadd.f32 %v282, %v225
    %v331 = vadd.f32 %v254, %v226
    %v332 = vadd.f32 %v258, %v227
    %v333 = vadd.f32 %v262, %v228
    %v334 = vadd.f32 %v266, %v229
    %v335 = vadd.f32 %v270, %v230
    %v336 = vadd.f32 %v274, %v231
    %v337 = vadd.f32 %v278, %v232
    %v338 = vadd.f32 %v282, %v233
    %v339 = vadd.f32 %v254, %v234
    %v340 = vadd.f32 %v258, %v235
    %v341 = vadd.f32 %v262, %v236
    %v342 = vadd.f32 %v266, %v237
    %v343 = vadd.f32 %v270, %v238
    %v344 = vadd.f32 %v274, %v239
    %v345 = vadd.f32 %v278, %v240
    %v346 = vadd.f32 %v282, %v241
    %v347 = vadd.f32 %v254, %v242
    %v348 = vadd.f32 %v258, %v243
    %v349 = vadd.f32 %v262, %v244
    %v350 = vadd.f32 %v266, %v245
    %v351 = vadd.f32 %v270, %v246
    %v352 = vadd.f32 %v274, %v247
    %v353 = vadd.f32 %v278, %v248
    %v354 = vadd.f32 %v282, %v249
    %355 = vset.pattern.permute.xlu0 1
    %356 = vperm.xlu0 %355, %v57
    %v357 = vpop.permute.xlu0 %356
    %359 = vset.pattern.permute.xlu0 1
    %360 = vperm.xlu0 %359, %v58
    %v361 = vpop.permute.xlu0 %360
    %363 = vset.pattern.permute.xlu0 1
    %364 = vperm.xlu0 %363, %v59
    %v365 = vpop.permute.xlu0 %364
    %367 = vset.pattern.permute.xlu0 1
    %368 = vperm.xlu0 %367, %v60
    %v369 = vpop.permute.xlu0 %368
    %371 = vset.pattern.permute.xlu0 1
    %372 = vperm.xlu0 %371, %v61
    %v373 = vpop.permute.xlu0 %372
    %375 = vset.pattern.permute.xlu0 1
    %376 = vperm.xlu0 %375, %v62
    %v377 = vpop.permute.xlu0 %376
    %379 = vset.pattern.permute.xlu0 1
    %380 = vperm.xlu0 %379, %v63
    %v381 = vpop.permute.xlu0 %380
    %383 = vset.pattern.permute.xlu0 1
    %384 = vperm.xlu0 %383, %v64
    %v385 = vpop.permute.xlu0 %384
    %v387 = vlaneseq
    %v388 = vshrl.u32 %v387, 7
    %v389 = vsub.s32 1, %v388
    %v390 = vrot.slane %v65, %v389
    %v391 = vlaneseq
    %v392 = vshrl.u32 %v391, 7
    %v393 = vsub.s32 5, %v392
    %v394 = vrot.slane %v65, %v393
    %v395 = vlaneseq
    %v396 = vshrl.u32 %v395, 7
    %v397 = vsub.s32 1, %v396
    %v398 = vrot.slane %v66, %v397
    %v399 = vlaneseq
    %v400 = vshrl.u32 %v399, 7
    %v401 = vsub.s32 5, %v400
    %v402 = vrot.slane %v66, %v401
    %v403 = vlaneseq
    %v404 = vshrl.u32 %v403, 7
    %v405 = vsub.s32 1, %v404
    %v406 = vrot.slane %v67, %v405
    %v407 = vlaneseq
    %v408 = vshrl.u32 %v407, 7
    %v409 = vsub.s32 5, %v408
    %v410 = vrot.slane %v67, %v409
    %v411 = vlaneseq
    %v412 = vshrl.u32 %v411, 7
    %v413 = vsub.s32 1, %v412
    %v414 = vrot.slane %v68, %v413
    %v415 = vlaneseq
    %v416 = vshrl.u32 %v415, 7
    %v417 = vsub.s32 5, %v416
    %v418 = vrot.slane %v68, %v417
    %v427 = vlaneseq
    %v428 = vshrl.u32 %v427, 7
    %v429 = vsub.s32 1, %v428
    %v430 = vrot.slane %v390, %v429
    %v431 = vlaneseq
    %v432 = vshrl.u32 %v431, 7
    %v433 = vsub.s32 1, %v432
    %v434 = vrot.slane %v394, %v433
    %v435 = vlaneseq
    %v436 = vshrl.u32 %v435, 7
    %v437 = vsub.s32 1, %v436
    %v438 = vrot.slane %v398, %v437
    %v439 = vlaneseq
    %v440 = vshrl.u32 %v439, 7
    %v441 = vsub.s32 1, %v440
    %v442 = vrot.slane %v402, %v441
    %v443 = vlaneseq
    %v444 = vshrl.u32 %v443, 7
    %v445 = vsub.s32 1, %v444
    %v446 = vrot.slane %v406, %v445
    %v447 = vlaneseq
    %v448 = vshrl.u32 %v447, 7
    %v449 = vsub.s32 1, %v448
    %v450 = vrot.slane %v410, %v449
    %v451 = vlaneseq
    %v452 = vshrl.u32 %v451, 7
    %v453 = vsub.s32 1, %v452
    %v454 = vrot.slane %v414, %v453
    %v455 = vlaneseq
    %v456 = vshrl.u32 %v455, 7
    %v457 = vsub.s32 1, %v456
    %v458 = vrot.slane %v418, %v457
    %v459 = vmul.f32 %v357, %v430
    %v460 = vmul.f32 %v357, %v434
    %v461 = vmul.f32 %v357, %v438
    %v462 = vmul.f32 %v357, %v442
    %v463 = vmul.f32 %v357, %v446
    %v464 = vmul.f32 %v357, %v450
    %v465 = vmul.f32 %v357, %v454
    %v466 = vmul.f32 %v357, %v458
    %v467 = vmul.f32 %v361, %v430
    %v468 = vmul.f32 %v361, %v434
    %v469 = vmul.f32 %v361, %v438
    %v470 = vmul.f32 %v361, %v442
    %v471 = vmul.f32 %v361, %v446
    %v472 = vmul.f32 %v361, %v450
    %v473 = vmul.f32 %v361, %v454
    %v474 = vmul.f32 %v361, %v458
    %v475 = vmul.f32 %v365, %v430
    %v476 = vmul.f32 %v365, %v434
    %v477 = vmul.f32 %v365, %v438
    %v478 = vmul.f32 %v365, %v442
    %v479 = vmul.f32 %v365, %v446
    %v480 = vmul.f32 %v365, %v450
    %v481 = vmul.f32 %v365, %v454
    %v482 = vmul.f32 %v365, %v458
    %v483 = vmul.f32 %v369, %v430
    %v484 = vmul.f32 %v369, %v434
    %v485 = vmul.f32 %v369, %v438
    %v486 = vmul.f32 %v369, %v442
    %v487 = vmul.f32 %v369, %v446
    %v488 = vmul.f32 %v369, %v450
    %v489 = vmul.f32 %v369, %v454
    %v490 = vmul.f32 %v369, %v458
    %v491 = vmul.f32 %v373, %v430
    %v492 = vmul.f32 %v373, %v434
    %v493 = vmul.f32 %v373, %v438
    %v494 = vmul.f32 %v373, %v442
    %v495 = vmul.f32 %v373, %v446
    %v496 = vmul.f32 %v373, %v450
    %v497 = vmul.f32 %v373, %v454
    %v498 = vmul.f32 %v373, %v458
    %v499 = vmul.f32 %v377, %v430
    %v500 = vmul.f32 %v377, %v434
    %v501 = vmul.f32 %v377, %v438
    %v502 = vmul.f32 %v377, %v442
    %v503 = vmul.f32 %v377, %v446
    %v504 = vmul.f32 %v377, %v450
    %v505 = vmul.f32 %v377, %v454
    %v506 = vmul.f32 %v377, %v458
    %v507 = vmul.f32 %v381, %v430
    %v508 = vmul.f32 %v381, %v434
    %v509 = vmul.f32 %v381, %v438
    %v510 = vmul.f32 %v381, %v442
    %v511 = vmul.f32 %v381, %v446
    %v512 = vmul.f32 %v381, %v450
    %v513 = vmul.f32 %v381, %v454
    %v514 = vmul.f32 %v381, %v458
    %v515 = vmul.f32 %v385, %v430
    %v516 = vmul.f32 %v385, %v434
    %v517 = vmul.f32 %v385, %v438
    %v518 = vmul.f32 %v385, %v442
    %v519 = vmul.f32 %v385, %v446
    %v520 = vmul.f32 %v385, %v450
    %v521 = vmul.f32 %v385, %v454
    %v522 = vmul.f32 %v385, %v458
    %v523 = vadd.f32 %v291, %v459
    %v524 = vadd.f32 %v292, %v460
    %v525 = vadd.f32 %v293, %v461
    %v526 = vadd.f32 %v294, %v462
    %v527 = vadd.f32 %v295, %v463
    %v528 = vadd.f32 %v296, %v464
    %v529 = vadd.f32 %v297, %v465
    %v530 = vadd.f32 %v298, %v466
    %v531 = vadd.f32 %v299, %v467
    %v532 = vadd.f32 %v300, %v468
    %v533 = vadd.f32 %v301, %v469
    %v534 = vadd.f32 %v302, %v470
    %v535 = vadd.f32 %v303, %v471
    %v536 = vadd.f32 %v304, %v472
    %v537 = vadd.f32 %v305, %v473
    %v538 = vadd.f32 %v306, %v474
    %v539 = vadd.f32 %v307, %v475
    %v540 = vadd.f32 %v308, %v476
    %v541 = vadd.f32 %v309, %v477
    %v542 = vadd.f32 %v310, %v478
    %v543 = vadd.f32 %v311, %v479
    %v544 = vadd.f32 %v312, %v480
    %v545 = vadd.f32 %v313, %v481
    %v546 = vadd.f32 %v314, %v482
    %v547 = vadd.f32 %v315, %v483
    %v548 = vadd.f32 %v316, %v484
    %v549 = vadd.f32 %v317, %v485
    %v550 = vadd.f32 %v318, %v486
    %v551 = vadd.f32 %v319, %v487
    %v552 = vadd.f32 %v320, %v488
    %v553 = vadd.f32 %v321, %v489
    %v554 = vadd.f32 %v322, %v490
    %v555 = vadd.f32 %v323, %v491
    %v556 = vadd.f32 %v324, %v492
    %v557 = vadd.f32 %v325, %v493
    %v558 = vadd.f32 %v326, %v494
    %v559 = vadd.f32 %v327, %v495
    %v560 = vadd.f32 %v328, %v496
    %v561 = vadd.f32 %v329, %v497
    %v562 = vadd.f32 %v330, %v498
    %v563 = vadd.f32 %v331, %v499
    %v564 = vadd.f32 %v332, %v500
    %v565 = vadd.f32 %v333, %v501
    %v566 = vadd.f32 %v334, %v502
    %v567 = vadd.f32 %v335, %v503
    %v568 = vadd.f32 %v336, %v504
    %v569 = vadd.f32 %v337, %v505
    %v570 = vadd.f32 %v338, %v506
    %v571 = vadd.f32 %v339, %v507
    %v572 = vadd.f32 %v340, %v508
    %v573 = vadd.f32 %v341, %v509
    %v574 = vadd.f32 %v342, %v510
    %v575 = vadd.f32 %v343, %v511
    %v576 = vadd.f32 %v344, %v512
    %v577 = vadd.f32 %v345, %v513
    %v578 = vadd.f32 %v346, %v514
    %v579 = vadd.f32 %v347, %v515
    %v580 = vadd.f32 %v348, %v516
    %v581 = vadd.f32 %v349, %v517
    %v582 = vadd.f32 %v350, %v518
    %v583 = vadd.f32 %v351, %v519
    %v584 = vadd.f32 %v352, %v520
    %v585 = vadd.f32 %v353, %v521
    %v586 = vadd.f32 %v354, %v522
    %587 = vset.pattern.permute.xlu0 2
    %588 = vperm.xlu0 %587, %v57
    %v589 = vpop.permute.xlu0 %588
    %591 = vset.pattern.permute.xlu0 2
    %592 = vperm.xlu0 %591, %v58
    %v593 = vpop.permute.xlu0 %592
    %595 = vset.pattern.permute.xlu0 2
    %596 = vperm.xlu0 %595, %v59
    %v597 = vpop.permute.xlu0 %596
    %599 = vset.pattern.permute.xlu0 2
    %600 = vperm.xlu0 %599, %v60
    %v601 = vpop.permute.xlu0 %600
    %603 = vset.pattern.permute.xlu0 2
    %604 = vperm.xlu0 %603, %v61
    %v605 = vpop.permute.xlu0 %604
    %607 = vset.pattern.permute.xlu0 2
    %608 = vperm.xlu0 %607, %v62
    %v609 = vpop.permute.xlu0 %608
    %611 = vset.pattern.permute.xlu0 2
    %612 = vperm.xlu0 %611, %v63
    %v613 = vpop.permute.xlu0 %612
    %615 = vset.pattern.permute.xlu0 2
    %616 = vperm.xlu0 %615, %v64
    %v617 = vpop.permute.xlu0 %616
    %v619 = vlaneseq
    %v620 = vshrl.u32 %v619, 7
    %v621 = vsub.s32 2, %v620
    %v622 = vrot.slane %v65, %v621
    %v623 = vlaneseq
    %v624 = vshrl.u32 %v623, 7
    %v625 = vsub.s32 6, %v624
    %v626 = vrot.slane %v65, %v625
    %v627 = vlaneseq
    %v628 = vshrl.u32 %v627, 7
    %v629 = vsub.s32 2, %v628
    %v630 = vrot.slane %v66, %v629
    %v631 = vlaneseq
    %v632 = vshrl.u32 %v631, 7
    %v633 = vsub.s32 6, %v632
    %v634 = vrot.slane %v66, %v633
    %v635 = vlaneseq
    %v636 = vshrl.u32 %v635, 7
    %v637 = vsub.s32 2, %v636
    %v638 = vrot.slane %v67, %v637
    %v639 = vlaneseq
    %v640 = vshrl.u32 %v639, 7
    %v641 = vsub.s32 6, %v640
    %v642 = vrot.slane %v67, %v641
    %v643 = vlaneseq
    %v644 = vshrl.u32 %v643, 7
    %v645 = vsub.s32 2, %v644
    %v646 = vrot.slane %v68, %v645
    %v647 = vlaneseq
    %v648 = vshrl.u32 %v647, 7
    %v649 = vsub.s32 6, %v648
    %v650 = vrot.slane %v68, %v649
    %v659 = vlaneseq
    %v660 = vshrl.u32 %v659, 7
    %v661 = vsub.s32 2, %v660
    %v662 = vrot.slane %v622, %v661
    %v663 = vlaneseq
    %v664 = vshrl.u32 %v663, 7
    %v665 = vsub.s32 2, %v664
    %v666 = vrot.slane %v626, %v665
    %v667 = vlaneseq
    %v668 = vshrl.u32 %v667, 7
    %v669 = vsub.s32 2, %v668
    %v670 = vrot.slane %v630, %v669
    %v671 = vlaneseq
    %v672 = vshrl.u32 %v671, 7
    %v673 = vsub.s32 2, %v672
    %v674 = vrot.slane %v634, %v673
    %v675 = vlaneseq
    %v676 = vshrl.u32 %v675, 7
    %v677 = vsub.s32 2, %v676
    %v678 = vrot.slane %v638, %v677
    %v679 = vlaneseq
    %v680 = vshrl.u32 %v679, 7
    %v681 = vsub.s32 2, %v680
    %v682 = vrot.slane %v642, %v681
    %v683 = vlaneseq
    %v684 = vshrl.u32 %v683, 7
    %v685 = vsub.s32 2, %v684
    %v686 = vrot.slane %v646, %v685
    %v687 = vlaneseq
    %v688 = vshrl.u32 %v687, 7
    %v689 = vsub.s32 2, %v688
    %v690 = vrot.slane %v650, %v689
    %v691 = vmul.f32 %v589, %v662
    %v692 = vmul.f32 %v589, %v666
    %v693 = vmul.f32 %v589, %v670
    %v694 = vmul.f32 %v589, %v674
    %v695 = vmul.f32 %v589, %v678
    %v696 = vmul.f32 %v589, %v682
    %v697 = vmul.f32 %v589, %v686
    %v698 = vmul.f32 %v589, %v690
    %v699 = vmul.f32 %v593, %v662
    %v700 = vmul.f32 %v593, %v666
    %v701 = vmul.f32 %v593, %v670
    %v702 = vmul.f32 %v593, %v674
    %v703 = vmul.f32 %v593, %v678
    %v704 = vmul.f32 %v593, %v682
    %v705 = vmul.f32 %v593, %v686
    %v706 = vmul.f32 %v593, %v690
    %v707 = vmul.f32 %v597, %v662
    %v708 = vmul.f32 %v597, %v666
    %v709 = vmul.f32 %v597, %v670
    %v710 = vmul.f32 %v597, %v674
    %v711 = vmul.f32 %v597, %v678
    %v712 = vmul.f32 %v597, %v682
    %v713 = vmul.f32 %v597, %v686
    %v714 = vmul.f32 %v597, %v690
    %v715 = vmul.f32 %v601, %v662
    %v716 = vmul.f32 %v601, %v666
    %v717 = vmul.f32 %v601, %v670
    %v718 = vmul.f32 %v601, %v674
    %v719 = vmul.f32 %v601, %v678
    %v720 = vmul.f32 %v601, %v682
    %v721 = vmul.f32 %v601, %v686
    %v722 = vmul.f32 %v601, %v690
    %v723 = vmul.f32 %v605, %v662
    %v724 = vmul.f32 %v605, %v666
    %v725 = vmul.f32 %v605, %v670
    %v726 = vmul.f32 %v605, %v674
    %v727 = vmul.f32 %v605, %v678
    %v728 = vmul.f32 %v605, %v682
    %v729 = vmul.f32 %v605, %v686
    %v730 = vmul.f32 %v605, %v690
    %v731 = vmul.f32 %v609, %v662
    %v732 = vmul.f32 %v609, %v666
    %v733 = vmul.f32 %v609, %v670
    %v734 = vmul.f32 %v609, %v674
    %v735 = vmul.f32 %v609, %v678
    %v736 = vmul.f32 %v609, %v682
    %v737 = vmul.f32 %v609, %v686
    %v738 = vmul.f32 %v609, %v690
    %v739 = vmul.f32 %v613, %v662
    %v740 = vmul.f32 %v613, %v666
    %v741 = vmul.f32 %v613, %v670
    %v742 = vmul.f32 %v613, %v674
    %v743 = vmul.f32 %v613, %v678
    %v744 = vmul.f32 %v613, %v682
    %v745 = vmul.f32 %v613, %v686
    %v746 = vmul.f32 %v613, %v690
    %v747 = vmul.f32 %v617, %v662
    %v748 = vmul.f32 %v617, %v666
    %v749 = vmul.f32 %v617, %v670
    %v750 = vmul.f32 %v617, %v674
    %v751 = vmul.f32 %v617, %v678
    %v752 = vmul.f32 %v617, %v682
    %v753 = vmul.f32 %v617, %v686
    %v754 = vmul.f32 %v617, %v690
    %v755 = vadd.f32 %v523, %v691
    %v756 = vadd.f32 %v524, %v692
    %v757 = vadd.f32 %v525, %v693
    %v758 = vadd.f32 %v526, %v694
    %v759 = vadd.f32 %v527, %v695
    %v760 = vadd.f32 %v528, %v696
    %v761 = vadd.f32 %v529, %v697
    %v762 = vadd.f32 %v530, %v698
    %v763 = vadd.f32 %v531, %v699
    %v764 = vadd.f32 %v532, %v700
    %v765 = vadd.f32 %v533, %v701
    %v766 = vadd.f32 %v534, %v702
    %v767 = vadd.f32 %v535, %v703
    %v768 = vadd.f32 %v536, %v704
    %v769 = vadd.f32 %v537, %v705
    %v770 = vadd.f32 %v538, %v706
    %v771 = vadd.f32 %v539, %v707
    %v772 = vadd.f32 %v540, %v708
    %v773 = vadd.f32 %v541, %v709
    %v774 = vadd.f32 %v542, %v710
    %v775 = vadd.f32 %v543, %v711
    %v776 = vadd.f32 %v544, %v712
    %v777 = vadd.f32 %v545, %v713
    %v778 = vadd.f32 %v546, %v714
    %v779 = vadd.f32 %v547, %v715
    %v780 = vadd.f32 %v548, %v716
    %v781 = vadd.f32 %v549, %v717
    %v782 = vadd.f32 %v550, %v718
    %v783 = vadd.f32 %v551, %v719
    %v784 = vadd.f32 %v552, %v720
    %v785 = vadd.f32 %v553, %v721
    %v786 = vadd.f32 %v554, %v722
    %v787 = vadd.f32 %v555, %v723
    %v788 = vadd.f32 %v556, %v724
    %v789 = vadd.f32 %v557, %v725
    %v790 = vadd.f32 %v558, %v726
    %v791 = vadd.f32 %v559, %v727
    %v792 = vadd.f32 %v560, %v728
    %v793 = vadd.f32 %v561, %v729
    %v794 = vadd.f32 %v562, %v730
    %v795 = vadd.f32 %v563, %v731
    %v796 = vadd.f32 %v564, %v732
    %v797 = vadd.f32 %v565, %v733
    %v798 = vadd.f32 %v566, %v734
    %v799 = vadd.f32 %v567, %v735
    %v800 = vadd.f32 %v568, %v736
    %v801 = vadd.f32 %v569, %v737
    %v802 = vadd.f32 %v570, %v738
    %v803 = vadd.f32 %v571, %v739
    %v804 = vadd.f32 %v572, %v740
    %v805 = vadd.f32 %v573, %v741
    %v806 = vadd.f32 %v574, %v742
    %v807 = vadd.f32 %v575, %v743
    %v808 = vadd.f32 %v576, %v744
    %v809 = vadd.f32 %v577, %v745
    %v810 = vadd.f32 %v578, %v746
    %v811 = vadd.f32 %v579, %v747
    %v812 = vadd.f32 %v580, %v748
    %v813 = vadd.f32 %v581, %v749
    %v814 = vadd.f32 %v582, %v750
    %v815 = vadd.f32 %v583, %v751
    %v816 = vadd.f32 %v584, %v752
    %v817 = vadd.f32 %v585, %v753
    %v818 = vadd.f32 %v586, %v754
    %819 = vset.pattern.permute.xlu0 3
    %820 = vperm.xlu0 %819, %v57
    %v821 = vpop.permute.xlu0 %820
    %823 = vset.pattern.permute.xlu0 3
    %824 = vperm.xlu0 %823, %v58
    %v825 = vpop.permute.xlu0 %824
    %827 = vset.pattern.permute.xlu0 3
    %828 = vperm.xlu0 %827, %v59
    %v829 = vpop.permute.xlu0 %828
    %831 = vset.pattern.permute.xlu0 3
    %832 = vperm.xlu0 %831, %v60
    %v833 = vpop.permute.xlu0 %832
    %835 = vset.pattern.permute.xlu0 3
    %836 = vperm.xlu0 %835, %v61
    %v837 = vpop.permute.xlu0 %836
    %839 = vset.pattern.permute.xlu0 3
    %840 = vperm.xlu0 %839, %v62
    %v841 = vpop.permute.xlu0 %840
    %843 = vset.pattern.permute.xlu0 3
    %844 = vperm.xlu0 %843, %v63
    %v845 = vpop.permute.xlu0 %844
    %847 = vset.pattern.permute.xlu0 3
    %848 = vperm.xlu0 %847, %v64
    %v849 = vpop.permute.xlu0 %848
    %v851 = vlaneseq
    %v852 = vshrl.u32 %v851, 7
    %v853 = vsub.s32 3, %v852
    %v854 = vrot.slane %v65, %v853
    %v855 = vlaneseq
    %v856 = vshrl.u32 %v855, 7
    %v857 = vsub.s32 7, %v856
    %v858 = vrot.slane %v65, %v857
    %v859 = vlaneseq
    %v860 = vshrl.u32 %v859, 7
    %v861 = vsub.s32 3, %v860
    %v862 = vrot.slane %v66, %v861
    %v863 = vlaneseq
    %v864 = vshrl.u32 %v863, 7
    %v865 = vsub.s32 7, %v864
    %v866 = vrot.slane %v66, %v865
    %v867 = vlaneseq
    %v868 = vshrl.u32 %v867, 7
    %v869 = vsub.s32 3, %v868
    %v870 = vrot.slane %v67, %v869
    %v871 = vlaneseq
    %v872 = vshrl.u32 %v871, 7
    %v873 = vsub.s32 7, %v872
    %v874 = vrot.slane %v67, %v873
    %v875 = vlaneseq
    %v876 = vshrl.u32 %v875, 7
    %v877 = vsub.s32 3, %v876
    %v878 = vrot.slane %v68, %v877
    %v879 = vlaneseq
    %v880 = vshrl.u32 %v879, 7
    %v881 = vsub.s32 7, %v880
    %v882 = vrot.slane %v68, %v881
    %v891 = vlaneseq
    %v892 = vshrl.u32 %v891, 7
    %v893 = vsub.s32 3, %v892
    %v894 = vrot.slane %v854, %v893
    %v895 = vlaneseq
    %v896 = vshrl.u32 %v895, 7
    %v897 = vsub.s32 3, %v896
    %v898 = vrot.slane %v858, %v897
    %v899 = vlaneseq
    %v900 = vshrl.u32 %v899, 7
    %v901 = vsub.s32 3, %v900
    %v902 = vrot.slane %v862, %v901
    %v903 = vlaneseq
    %v904 = vshrl.u32 %v903, 7
    %v905 = vsub.s32 3, %v904
    %v906 = vrot.slane %v866, %v905
    %v907 = vlaneseq
    %v908 = vshrl.u32 %v907, 7
    %v909 = vsub.s32 3, %v908
    %v910 = vrot.slane %v870, %v909
    %v911 = vlaneseq
    %v912 = vshrl.u32 %v911, 7
    %v913 = vsub.s32 3, %v912
    %v914 = vrot.slane %v874, %v913
    %v915 = vlaneseq
    %v916 = vshrl.u32 %v915, 7
    %v917 = vsub.s32 3, %v916
    %v918 = vrot.slane %v878, %v917
    %v919 = vlaneseq
    %v920 = vshrl.u32 %v919, 7
    %v921 = vsub.s32 3, %v920
    %v922 = vrot.slane %v882, %v921
    %v923 = vmul.f32 %v821, %v894
    %v924 = vmul.f32 %v821, %v898
    %v925 = vmul.f32 %v821, %v902
    %v926 = vmul.f32 %v821, %v906
    %v927 = vmul.f32 %v821, %v910
    %v928 = vmul.f32 %v821, %v914
    %v929 = vmul.f32 %v821, %v918
    %v930 = vmul.f32 %v821, %v922
    %v931 = vmul.f32 %v825, %v894
    %v932 = vmul.f32 %v825, %v898
    %v933 = vmul.f32 %v825, %v902
    %v934 = vmul.f32 %v825, %v906
    %v935 = vmul.f32 %v825, %v910
    %v936 = vmul.f32 %v825, %v914
    %v937 = vmul.f32 %v825, %v918
    %v938 = vmul.f32 %v825, %v922
    %v939 = vmul.f32 %v829, %v894
    %v940 = vmul.f32 %v829, %v898
    %v941 = vmul.f32 %v829, %v902
    %v942 = vmul.f32 %v829, %v906
    %v943 = vmul.f32 %v829, %v910
    %v944 = vmul.f32 %v829, %v914
    %v945 = vmul.f32 %v829, %v918
    %v946 = vmul.f32 %v829, %v922
    %v947 = vmul.f32 %v833, %v894
    %v948 = vmul.f32 %v833, %v898
    %v949 = vmul.f32 %v833, %v902
    %v950 = vmul.f32 %v833, %v906
    %v951 = vmul.f32 %v833, %v910
    %v952 = vmul.f32 %v833, %v914
    %v953 = vmul.f32 %v833, %v918
    %v954 = vmul.f32 %v833, %v922
    %v955 = vmul.f32 %v837, %v894
    %v956 = vmul.f32 %v837, %v898
    %v957 = vmul.f32 %v837, %v902
    %v958 = vmul.f32 %v837, %v906
    %v959 = vmul.f32 %v837, %v910
    %v960 = vmul.f32 %v837, %v914
    %v961 = vmul.f32 %v837, %v918
    %v962 = vmul.f32 %v837, %v922
    %v963 = vmul.f32 %v841, %v894
    %v964 = vmul.f32 %v841, %v898
    %v965 = vmul.f32 %v841, %v902
    %v966 = vmul.f32 %v841, %v906
    %v967 = vmul.f32 %v841, %v910
    %v968 = vmul.f32 %v841, %v914
    %v969 = vmul.f32 %v841, %v918
    %v970 = vmul.f32 %v841, %v922
    %v971 = vmul.f32 %v845, %v894
    %v972 = vmul.f32 %v845, %v898
    %v973 = vmul.f32 %v845, %v902
    %v974 = vmul.f32 %v845, %v906
    %v975 = vmul.f32 %v845, %v910
    %v976 = vmul.f32 %v845, %v914
    %v977 = vmul.f32 %v845, %v918
    %v978 = vmul.f32 %v845, %v922
    %v979 = vmul.f32 %v849, %v894
    %v980 = vmul.f32 %v849, %v898
    %v981 = vmul.f32 %v849, %v902
    %v982 = vmul.f32 %v849, %v906
    %v983 = vmul.f32 %v849, %v910
    %v984 = vmul.f32 %v849, %v914
    %v985 = vmul.f32 %v849, %v918
    %v986 = vmul.f32 %v849, %v922
    %v987 = vadd.f32 %v755, %v923
    %v988 = vadd.f32 %v756, %v924
    %v989 = vadd.f32 %v757, %v925
    %v990 = vadd.f32 %v758, %v926
    %v991 = vadd.f32 %v759, %v927
    %v992 = vadd.f32 %v760, %v928
    %v993 = vadd.f32 %v761, %v929
    %v994 = vadd.f32 %v762, %v930
    %v995 = vadd.f32 %v763, %v931
    %v996 = vadd.f32 %v764, %v932
    %v997 = vadd.f32 %v765, %v933
    %v998 = vadd.f32 %v766, %v934
    %v999 = vadd.f32 %v767, %v935
    %v1000 = vadd.f32 %v768, %v936
    %v1001 = vadd.f32 %v769, %v937
    %v1002 = vadd.f32 %v770, %v938
    %v1003 = vadd.f32 %v771, %v939
    %v1004 = vadd.f32 %v772, %v940
    %v1005 = vadd.f32 %v773, %v941
    %v1006 = vadd.f32 %v774, %v942
    %v1007 = vadd.f32 %v775, %v943
    %v1008 = vadd.f32 %v776, %v944
    %v1009 = vadd.f32 %v777, %v945
    %v1010 = vadd.f32 %v778, %v946
    %v1011 = vadd.f32 %v779, %v947
    %v1012 = vadd.f32 %v780, %v948
    %v1013 = vadd.f32 %v781, %v949
    %v1014 = vadd.f32 %v782, %v950
    %v1015 = vadd.f32 %v783, %v951
    %v1016 = vadd.f32 %v784, %v952
    %v1017 = vadd.f32 %v785, %v953
    %v1018 = vadd.f32 %v786, %v954
    %v1019 = vadd.f32 %v787, %v955
    %v1020 = vadd.f32 %v788, %v956
    %v1021 = vadd.f32 %v789, %v957
    %v1022 = vadd.f32 %v790, %v958
    %v1023 = vadd.f32 %v791, %v959
    %v1024 = vadd.f32 %v792, %v960
    %v1025 = vadd.f32 %v793, %v961
    %v1026 = vadd.f32 %v794, %v962
    %v1027 = vadd.f32 %v795, %v963
    %v1028 = vadd.f32 %v796, %v964
    %v1029 = vadd.f32 %v797, %v965
    %v1030 = vadd.f32 %v798, %v966
    %v1031 = vadd.f32 %v799, %v967
    %v1032 = vadd.f32 %v800, %v968
    %v1033 = vadd.f32 %v801, %v969
    %v1034 = vadd.f32 %v802, %v970
    %v1035 = vadd.f32 %v803, %v971
    %v1036 = vadd.f32 %v804, %v972
    %v1037 = vadd.f32 %v805, %v973
    %v1038 = vadd.f32 %v806, %v974
    %v1039 = vadd.f32 %v807, %v975
    %v1040 = vadd.f32 %v808, %v976
    %v1041 = vadd.f32 %v809, %v977
    %v1042 = vadd.f32 %v810, %v978
    %v1043 = vadd.f32 %v811, %v979
    %v1044 = vadd.f32 %v812, %v980
    %v1045 = vadd.f32 %v813, %v981
    %v1046 = vadd.f32 %v814, %v982
    %v1047 = vadd.f32 %v815, %v983
    %v1048 = vadd.f32 %v816, %v984
    %v1049 = vadd.f32 %v817, %v985
    %v1050 = vadd.f32 %v818, %v986
    %1051 = vst [vmem:[#allocation2] sm:$0xff] %v987
    %1052 = vst [vmem:[#allocation2 + $0x8] sm:$0xff] %v988
    %1053 = vst [vmem:[#allocation2 + $0x10] sm:$0xff] %v989
    %1054 = vst [vmem:[#allocation2 + $0x18] sm:$0xff] %v990
    %1055 = vst [vmem:[#allocation2 + $0x20] sm:$0xff] %v991
    %1056 = vst [vmem:[#allocation2 + $0x28] sm:$0xff] %v992
    %1057 = vst [vmem:[#allocation2 + $0x30] sm:$0xff] %v993
    %1058 = vst [vmem:[#allocation2 + $0x38] sm:$0xff] %v994
    %1059 = vst [vmem:[#allocation2 + $0x40] sm:$0xff] %v995
    %1060 = vst [vmem:[#allocation2 + $0x48] sm:$0xff] %v996
    %1061 = vst [vmem:[#allocation2 + $0x50] sm:$0xff] %v997
    %1062 = vst [vmem:[#allocation2 + $0x58] sm:$0xff] %v998
    %1063 = vst [vmem:[#allocation2 + $0x60] sm:$0xff] %v999
    %1064 = vst [vmem:[#allocation2 + $0x68] sm:$0xff] %v1000
    %1065 = vst [vmem:[#allocation2 + $0x70] sm:$0xff] %v1001
    %1066 = vst [vmem:[#allocation2 + $0x78] sm:$0xff] %v1002
    %1067 = vst [vmem:[#allocation2 + $0x80] sm:$0xff] %v1003
    %1068 = vst [vmem:[#allocation2 + $0x88] sm:$0xff] %v1004
    %1069 = vst [vmem:[#allocation2 + $0x90] sm:$0xff] %v1005
    %1070 = vst [vmem:[#allocation2 + $0x98] sm:$0xff] %v1006
    %1071 = vst [vmem:[#allocation2 + $0xa0] sm:$0xff] %v1007
    %1072 = vst [vmem:[#allocation2 + $0xa8] sm:$0xff] %v1008
    %1073 = vst [vmem:[#allocation2 + $0xb0] sm:$0xff] %v1009
    %1074 = vst [vmem:[#allocation2 + $0xb8] sm:$0xff] %v1010
    %1075 = vst [vmem:[#allocation2 + $0xc0] sm:$0xff] %v1011
    %1076 = vst [vmem:[#allocation2 + $0xc8] sm:$0xff] %v1012
    %1077 = vst [vmem:[#allocation2 + $0xd0] sm:$0xff] %v1013
    %1078 = vst [vmem:[#allocation2 + $0xd8] sm:$0xff] %v1014
    %1079 = vst [vmem:[#allocation2 + $0xe0] sm:$0xff] %v1015
    %1080 = vst [vmem:[#allocation2 + $0xe8] sm:$0xff] %v1016
    %1081 = vst [vmem:[#allocation2 + $0xf0] sm:$0xff] %v1017
    %1082 = vst [vmem:[#allocation2 + $0xf8] sm:$0xff] %v1018
    %1083 = vst [vmem:[#allocation2 + $0x100] sm:$0xff] %v1019
    %1084 = vst [vmem:[#allocation2 + $0x108] sm:$0xff] %v1020
    %1085 = vst [vmem:[#allocation2 + $0x110] sm:$0xff] %v1021
    %1086 = vst [vmem:[#allocation2 + $0x118] sm:$0xff] %v1022
    %1087 = vst [vmem:[#allocation2 + $0x120] sm:$0xff] %v1023
    %1088 = vst [vmem:[#allocation2 + $0x128] sm:$0xff] %v1024
    %1089 = vst [vmem:[#allocation2 + $0x130] sm:$0xff] %v1025
    %1090 = vst [vmem:[#allocation2 + $0x138] sm:$0xff] %v1026
    %1091 = vst [vmem:[#allocation2 + $0x140] sm:$0xff] %v1027
    %1092 = vst [vmem:[#allocation2 + $0x148] sm:$0xff] %v1028
    %1093 = vst [vmem:[#allocation2 + $0x150] sm:$0xff] %v1029
    %1094 = vst [vmem:[#allocation2 + $0x158] sm:$0xff] %v1030
    %1095 = vst [vmem:[#allocation2 + $0x160] sm:$0xff] %v1031
    %1096 = vst [vmem:[#allocation2 + $0x168] sm:$0xff] %v1032
    %1097 = vst [vmem:[#allocation2 + $0x170] sm:$0xff] %v1033
    %1098 = vst [vmem:[#allocation2 + $0x178] sm:$0xff] %v1034
    %1099 = vst [vmem:[#allocation2 + $0x180] sm:$0xff] %v1035
    %1100 = vst [vmem:[#allocation2 + $0x188] sm:$0xff] %v1036
    %1101 = vst [vmem:[#allocation2 + $0x190] sm:$0xff] %v1037
    %1102 = vst [vmem:[#allocation2 + $0x198] sm:$0xff] %v1038
    %1103 = vst [vmem:[#allocation2 + $0x1a0] sm:$0xff] %v1039
    %1104 = vst [vmem:[#allocation2 + $0x1a8] sm:$0xff] %v1040
    %1105 = vst [vmem:[#allocation2 + $0x1b0] sm:$0xff] %v1041
    %1106 = vst [vmem:[#allocation2 + $0x1b8] sm:$0xff] %v1042
    %1107 = vst [vmem:[#allocation2 + $0x1c0] sm:$0xff] %v1043
    %1108 = vst [vmem:[#allocation2 + $0x1c8] sm:$0xff] %v1044
    %1109 = vst [vmem:[#allocation2 + $0x1d0] sm:$0xff] %v1045
    %1110 = vst [vmem:[#allocation2 + $0x1d8] sm:$0xff] %v1046
    %1111 = vst [vmem:[#allocation2 + $0x1e0] sm:$0xff] %v1047
    %1112 = vst [vmem:[#allocation2 + $0x1e8] sm:$0xff] %v1048
    %1113 = vst [vmem:[#allocation2 + $0x1f0] sm:$0xff] %v1049
    %1114 = vst [vmem:[#allocation2 + $0x1f8] sm:$0xff] %v1050
    %s1115 = smul.u32 4, 32
    %s1116 = smul.u32 %s1115, 8
    %s1117 = sshll.u32 %s1116, 4
    %1118 = dma.done [#allocation4], %s1117
    %v1119 = vld [vmem:[#allocation3] sm:$0xff]
    %v1120 = vld [vmem:[#allocation3 + $0x8] sm:$0xff]
    %v1121 = vld [vmem:[#allocation3 + $0x10] sm:$0xff]
    %v1122 = vld [vmem:[#allocation3 + $0x18] sm:$0xff]
    %v1123 = vld [vmem:[#allocation3 + $0x20] sm:$0xff]
    %v1124 = vld [vmem:[#allocation3 + $0x28] sm:$0xff]
    %v1125 = vld [vmem:[#allocation3 + $0x30] sm:$0xff]
    %v1126 = vld [vmem:[#allocation3 + $0x38] sm:$0xff]
    %v1127 = vld [vmem:[#allocation3 + $0x40] sm:$0xff]
    %v1128 = vld [vmem:[#allocation3 + $0x48] sm:$0xff]
    %v1129 = vld [vmem:[#allocation3 + $0x50] sm:$0xff]
    %v1130 = vld [vmem:[#allocation3 + $0x58] sm:$0xff]
    %v1131 = vld [vmem:[#allocation3 + $0x60] sm:$0xff]
    %v1132 = vld [vmem:[#allocation3 + $0x68] sm:$0xff]
    %v1133 = vld [vmem:[#allocation3 + $0x70] sm:$0xff]
    %v1134 = vld [vmem:[#allocation3 + $0x78] sm:$0xff]
    %v1135 = vld [vmem:[#allocation3 + $0x80] sm:$0xff]
    %v1136 = vld [vmem:[#allocation3 + $0x88] sm:$0xff]
    %v1137 = vld [vmem:[#allocation3 + $0x90] sm:$0xff]
    %v1138 = vld [vmem:[#allocation3 + $0x98] sm:$0xff]
    %v1139 = vld [vmem:[#allocation3 + $0xa0] sm:$0xff]
    %v1140 = vld [vmem:[#allocation3 + $0xa8] sm:$0xff]
    %v1141 = vld [vmem:[#allocation3 + $0xb0] sm:$0xff]
    %v1142 = vld [vmem:[#allocation3 + $0xb8] sm:$0xff]
    %v1143 = vld [vmem:[#allocation3 + $0xc0] sm:$0xff]
    %v1144 = vld [vmem:[#allocation3 + $0xc8] sm:$0xff]
    %v1145 = vld [vmem:[#allocation3 + $0xd0] sm:$0xff]
    %v1146 = vld [vmem:[#allocation3 + $0xd8] sm:$0xff]
    %v1147 = vld [vmem:[#allocation3 + $0xe0] sm:$0xff]
    %v1148 = vld [vmem:[#allocation3 + $0xe8] sm:$0xff]
    %v1149 = vld [vmem:[#allocation3 + $0xf0] sm:$0xff]
    %v1150 = vld [vmem:[#allocation3 + $0xf8] sm:$0xff]
    %v1151 = vld [vmem:[#allocation3 + $0x100] sm:$0xff]
    %v1152 = vld [vmem:[#allocation3 + $0x108] sm:$0xff]
    %v1153 = vld [vmem:[#allocation3 + $0x110] sm:$0xff]
    %v1154 = vld [vmem:[#allocation3 + $0x118] sm:$0xff]
    %v1155 = vld [vmem:[#allocation3 + $0x120] sm:$0xff]
    %v1156 = vld [vmem:[#allocation3 + $0x128] sm:$0xff]
    %v1157 = vld [vmem:[#allocation3 + $0x130] sm:$0xff]
    %v1158 = vld [vmem:[#allocation3 + $0x138] sm:$0xff]
    %v1159 = vld [vmem:[#allocation3 + $0x140] sm:$0xff]
    %v1160 = vld [vmem:[#allocation3 + $0x148] sm:$0xff]
    %v1161 = vld [vmem:[#allocation3 + $0x150] sm:$0xff]
    %v1162 = vld [vmem:[#allocation3 + $0x158] sm:$0xff]
    %v1163 = vld [vmem:[#allocation3 + $0x160] sm:$0xff]
    %v1164 = vld [vmem:[#allocation3 + $0x168] sm:$0xff]
    %v1165 = vld [vmem:[#allocation3 + $0x170] sm:$0xff]
    %v1166 = vld [vmem:[#allocation3 + $0x178] sm:$0xff]
    %v1167 = vld [vmem:[#allocation3 + $0x180] sm:$0xff]
    %v1168 = vld [vmem:[#allocation3 + $0x188] sm:$0xff]
    %v1169 = vld [vmem:[#allocation3 + $0x190] sm:$0xff]
    %v1170 = vld [vmem:[#allocation3 + $0x198] sm:$0xff]
    %v1171 = vld [vmem:[#allocation3 + $0x1a0] sm:$0xff]
    %v1172 = vld [vmem:[#allocation3 + $0x1a8] sm:$0xff]
    %v1173 = vld [vmem:[#allocation3 + $0x1b0] sm:$0xff]
    %v1174 = vld [vmem:[#allocation3 + $0x1b8] sm:$0xff]
    %v1175 = vld [vmem:[#allocation3 + $0x1c0] sm:$0xff]
    %v1176 = vld [vmem:[#allocation3 + $0x1c8] sm:$0xff]
    %v1177 = vld [vmem:[#allocation3 + $0x1d0] sm:$0xff]
    %v1178 = vld [vmem:[#allocation3 + $0x1d8] sm:$0xff]
    %v1179 = vld [vmem:[#allocation3 + $0x1e0] sm:$0xff]
    %v1180 = vld [vmem:[#allocation3 + $0x1e8] sm:$0xff]
    %v1181 = vld [vmem:[#allocation3 + $0x1f0] sm:$0xff]
    %v1182 = vld [vmem:[#allocation3 + $0x1f8] sm:$0xff]
    %v1183 = vld [vmem:[#allocation3 + $0x200] sm:$0xff]
    %v1184 = vld [vmem:[#allocation3 + $0x208] sm:$0xff]
    %v1185 = vld [vmem:[#allocation3 + $0x210] sm:$0xff]
    %v1186 = vld [vmem:[#allocation3 + $0x218] sm:$0xff]
    %v1187 = vld [vmem:[#allocation3 + $0x220] sm:$0xff]
    %v1188 = vld [vmem:[#allocation3 + $0x228] sm:$0xff]
    %v1189 = vld [vmem:[#allocation3 + $0x230] sm:$0xff]
    %v1190 = vld [vmem:[#allocation3 + $0x238] sm:$0xff]
    %v1191 = vld [vmem:[#allocation3 + $0x240] sm:$0xff]
    %v1192 = vld [vmem:[#allocation3 + $0x248] sm:$0xff]
    %v1193 = vld [vmem:[#allocation3 + $0x250] sm:$0xff]
    %v1194 = vld [vmem:[#allocation3 + $0x258] sm:$0xff]
    %v1195 = vld [vmem:[#allocation3 + $0x260] sm:$0xff]
    %v1196 = vld [vmem:[#allocation3 + $0x268] sm:$0xff]
    %v1197 = vld [vmem:[#allocation3 + $0x270] sm:$0xff]
    %v1198 = vld [vmem:[#allocation3 + $0x278] sm:$0xff]
    %v1199 = vld [vmem:[#allocation3 + $0x280] sm:$0xff]
    %v1200 = vld [vmem:[#allocation3 + $0x288] sm:$0xff]
    %v1201 = vld [vmem:[#allocation3 + $0x290] sm:$0xff]
    %v1202 = vld [vmem:[#allocation3 + $0x298] sm:$0xff]
    %v1203 = vld [vmem:[#allocation3 + $0x2a0] sm:$0xff]
    %v1204 = vld [vmem:[#allocation3 + $0x2a8] sm:$0xff]
    %v1205 = vld [vmem:[#allocation3 + $0x2b0] sm:$0xff]
    %v1206 = vld [vmem:[#allocation3 + $0x2b8] sm:$0xff]
    %v1207 = vld [vmem:[#allocation3 + $0x2c0] sm:$0xff]
    %v1208 = vld [vmem:[#allocation3 + $0x2c8] sm:$0xff]
    %v1209 = vld [vmem:[#allocation3 + $0x2d0] sm:$0xff]
    %v1210 = vld [vmem:[#allocation3 + $0x2d8] sm:$0xff]
    %v1211 = vld [vmem:[#allocation3 + $0x2e0] sm:$0xff]
    %v1212 = vld [vmem:[#allocation3 + $0x2e8] sm:$0xff]
    %v1213 = vld [vmem:[#allocation3 + $0x2f0] sm:$0xff]
    %v1214 = vld [vmem:[#allocation3 + $0x2f8] sm:$0xff]
    %v1215 = vld [vmem:[#allocation3 + $0x300] sm:$0xff]
    %v1216 = vld [vmem:[#allocation3 + $0x308] sm:$0xff]
    %v1217 = vld [vmem:[#allocation3 + $0x310] sm:$0xff]
    %v1218 = vld [vmem:[#allocation3 + $0x318] sm:$0xff]
    %v1219 = vld [vmem:[#allocation3 + $0x320] sm:$0xff]
    %v1220 = vld [vmem:[#allocation3 + $0x328] sm:$0xff]
    %v1221 = vld [vmem:[#allocation3 + $0x330] sm:$0xff]
    %v1222 = vld [vmem:[#allocation3 + $0x338] sm:$0xff]
    %v1223 = vld [vmem:[#allocation3 + $0x340] sm:$0xff]
    %v1224 = vld [vmem:[#allocation3 + $0x348] sm:$0xff]
    %v1225 = vld [vmem:[#allocation3 + $0x350] sm:$0xff]
    %v1226 = vld [vmem:[#allocation3 + $0x358] sm:$0xff]
    %v1227 = vld [vmem:[#allocation3 + $0x360] sm:$0xff]
    %v1228 = vld [vmem:[#allocation3 + $0x368] sm:$0xff]
    %v1229 = vld [vmem:[#allocation3 + $0x370] sm:$0xff]
    %v1230 = vld [vmem:[#allocation3 + $0x378] sm:$0xff]
    %v1231 = vld [vmem:[#allocation3 + $0x380] sm:$0xff]
    %v1232 = vld [vmem:[#allocation3 + $0x388] sm:$0xff]
    %v1233 = vld [vmem:[#allocation3 + $0x390] sm:$0xff]
    %v1234 = vld [vmem:[#allocation3 + $0x398] sm:$0xff]
    %v1235 = vld [vmem:[#allocation3 + $0x3a0] sm:$0xff]
    %v1236 = vld [vmem:[#allocation3 + $0x3a8] sm:$0xff]
    %v1237 = vld [vmem:[#allocation3 + $0x3b0] sm:$0xff]
    %v1238 = vld [vmem:[#allocation3 + $0x3b8] sm:$0xff]
    %v1239 = vld [vmem:[#allocation3 + $0x3c0] sm:$0xff]
    %v1240 = vld [vmem:[#allocation3 + $0x3c8] sm:$0xff]
    %v1241 = vld [vmem:[#allocation3 + $0x3d0] sm:$0xff]
    %v1242 = vld [vmem:[#allocation3 + $0x3d8] sm:$0xff]
    %v1243 = vld [vmem:[#allocation3 + $0x3e0] sm:$0xff]
    %v1244 = vld [vmem:[#allocation3 + $0x3e8] sm:$0xff]
    %v1245 = vld [vmem:[#allocation3 + $0x3f0] sm:$0xff]
    %v1246 = vld [vmem:[#allocation3 + $0x3f8] sm:$0xff]
    %v1247 = vld [vmem:[#allocation2] sm:$0xff]
    %v1248 = vld [vmem:[#allocation2 + $0x8] sm:$0xff]
    %v1249 = vld [vmem:[#allocation2 + $0x10] sm:$0xff]
    %v1250 = vld [vmem:[#allocation2 + $0x18] sm:$0xff]
    %v1251 = vld [vmem:[#allocation2 + $0x20] sm:$0xff]
    %v1252 = vld [vmem:[#allocation2 + $0x28] sm:$0xff]
    %v1253 = vld [vmem:[#allocation2 + $0x30] sm:$0xff]
    %v1254 = vld [vmem:[#allocation2 + $0x38] sm:$0xff]
    %1255 = vmatprep.subr.bf16.mxu0 %v1120
    %1256 = vmatpush1.bf16.msra.mxu0 %v1119
    %1257 = vmatprep.subr.bf16.mxu0 %v1128
    %1258 = vmatpush1.bf16.msra.mxu0 %v1127
    %1259 = vmatprep.subr.bf16.mxu0 %v1136
    %1260 = vmatpush1.bf16.msra.mxu0 %v1135
    %1261 = vmatprep.subr.bf16.mxu0 %v1144
    %1262 = vmatpush1.bf16.msra.mxu0 %v1143
    %1263 = vmatprep.subr.bf16.mxu0 %v1152
    %1264 = vmatpush1.bf16.msra.mxu0 %v1151
    %1265 = vmatprep.subr.bf16.mxu0 %v1160
    %1266 = vmatpush1.bf16.msra.mxu0 %v1159
    %1267 = vmatprep.subr.bf16.mxu0 %v1168
    %1268 = vmatpush1.bf16.msra.mxu0 %v1167
    %1269 = vmatprep.subr.bf16.mxu0 %v1176
    %1270 = vmatpush1.bf16.msra.mxu0 %v1175
    %1271 = vmatprep.subr.bf16.mxu0 %v1184
    %1272 = vmatpush1.bf16.msra.mxu0 %v1183
    %1273 = vmatprep.subr.bf16.mxu0 %v1192
    %1274 = vmatpush1.bf16.msra.mxu0 %v1191
    %1275 = vmatprep.subr.bf16.mxu0 %v1200
    %1276 = vmatpush1.bf16.msra.mxu0 %v1199
    %1277 = vmatprep.subr.bf16.mxu0 %v1208
    %1278 = vmatpush1.bf16.msra.mxu0 %v1207
    %1279 = vmatprep.subr.bf16.mxu0 %v1216
    %1280 = vmatpush1.bf16.msra.mxu0 %v1215
    %1281 = vmatprep.subr.bf16.mxu0 %v1224
    %1282 = vmatpush1.bf16.msra.mxu0 %v1223
    %1283 = vmatprep.subr.bf16.mxu0 %v1232
    %1284 = vmatpush1.bf16.msra.mxu0 %v1231
    %1285 = vmatprep.subr.bf16.mxu0 %v1240
    %1286 = vmatpush1.bf16.msra.mxu0 %v1239
    %1287 = vmatprep.mubr.bf16.mxu0 0
    %1288 = vmatmul.mubr.bf16.gmra.mrb[0].mxu0 0
    %v1289 = vpop.f32.mrb[0].mxu0
    %v1290 = vadd.f32 0.0, %v1289
    %v1291 = vpop.f32.mrb[0].mxu0
    %v1292 = vadd.f32 0.0, %v1291
    %v1293 = vpop.f32.mrb[0].mxu0
    %v1294 = vpop.f32.mrb[0].mxu0
    %1295 = vdwg.mxu0
    %1296 = vmatprep.subr.bf16.mxu0 %v1122
    %1297 = vmatpush1.bf16.msra.mxu0 %v1121
    %1298 = vmatprep.subr.bf16.mxu0 %v1130
    %1299 = vmatpush1.bf16.msra.mxu0 %v1129
    %1300 = vmatprep.subr.bf16.mxu0 %v1138
    %1301 = vmatpush1.bf16.msra.mxu0 %v1137
    %1302 = vmatprep.subr.bf16.mxu0 %v1146
    %1303 = vmatpush1.bf16.msra.mxu0 %v1145
    %1304 = vmatprep.subr.bf16.mxu0 %v1154
    %1305 = vmatpush1.bf16.msra.mxu0 %v1153
    %1306 = vmatprep.subr.bf16.mxu0 %v1162
    %1307 = vmatpush1.bf16.msra.mxu0 %v1161
    %1308 = vmatprep.subr.bf16.mxu0 %v1170
    %1309 = vmatpush1.bf16.msra.mxu0 %v1169
    %1310 = vmatprep.subr.bf16.mxu0 %v1178
    %1311 = vmatpush1.bf16.msra.mxu0 %v1177
    %1312 = vmatprep.subr.bf16.mxu0 %v1186
    %1313 = vmatpush1.bf16.msra.mxu0 %v1185
    %1314 = vmatprep.subr.bf16.mxu0 %v1194
    %1315 = vmatpush1.bf16.msra.mxu0 %v1193
    %1316 = vmatprep.subr.bf16.mxu0 %v1202
    %1317 = vmatpush1.bf16.msra.mxu0 %v1201
    %1318 = vmatprep.subr.bf16.mxu0 %v1210
    %1319 = vmatpush1.bf16.msra.mxu0 %v1209
    %1320 = vmatprep.subr.bf16.mxu0 %v1218
    %1321 = vmatpush1.bf16.msra.mxu0 %v1217
    %1322 = vmatprep.subr.bf16.mxu0 %v1226
    %1323 = vmatpush1.bf16.msra.mxu0 %v1225
    %1324 = vmatprep.subr.bf16.mxu0 %v1234
    %1325 = vmatpush1.bf16.msra.mxu0 %v1233
    %1326 = vmatprep.subr.bf16.mxu0 %v1242
    %1327 = vmatpush1.bf16.msra.mxu0 %v1241
    %1328 = vmatprep.mubr.bf16.mxu0 0
    %1329 = vmatmul.mubr.bf16.gmra.mrb[0].mxu0 0
    %v1330 = vpop.f32.mrb[0].mxu0
    %v1331 = vadd.f32 0.0, %v1330
    %v1332 = vpop.f32.mrb[0].mxu0
    %v1333 = vadd.f32 0.0, %v1332
    %v1334 = vpop.f32.mrb[0].mxu0
    %v1335 = vpop.f32.mrb[0].mxu0
    %1336 = vdwg.mxu0
    %1337 = vmatprep.subr.bf16.mxu0 %v1124
    %1338 = vmatpush1.bf16.msra.mxu0 %v1123
    %1339 = vmatprep.subr.bf16.mxu0 %v1132
    %1340 = vmatpush1.bf16.msra.mxu0 %v1131
    %1341 = vmatprep.subr.bf16.mxu0 %v1140
    %1342 = vmatpush1.bf16.msra.mxu0 %v1139
    %1343 = vmatprep.subr.bf16.mxu0 %v1148
    %1344 = vmatpush1.bf16.msra.mxu0 %v1147
    %1345 = vmatprep.subr.bf16.mxu0 %v1156
    %1346 = vmatpush1.bf16.msra.mxu0 %v1155
    %1347 = vmatprep.subr.bf16.mxu0 %v1164
    %1348 = vmatpush1.bf16.msra.mxu0 %v1163
    %1349 = vmatprep.subr.bf16.mxu0 %v1172
    %1350 = vmatpush1.bf16.msra.mxu0 %v1171
    %1351 = vmatprep.subr.bf16.mxu0 %v1180
    %1352 = vmatpush1.bf16.msra.mxu0 %v1179
    %1353 = vmatprep.subr.bf16.mxu0 %v1188
    %1354 = vmatpush1.bf16.msra.mxu0 %v1187
    %1355 = vmatprep.subr.bf16.mxu0 %v1196
    %1356 = vmatpush1.bf16.msra.mxu0 %v1195
    %1357 = vmatprep.subr.bf16.mxu0 %v1204
    %1358 = vmatpush1.bf16.msra.mxu0 %v1203
    %1359 = vmatprep.subr.bf16.mxu0 %v1212
    %1360 = vmatpush1.bf16.msra.mxu0 %v1211
    %1361 = vmatprep.subr.bf16.mxu0 %v1220
    %1362 = vmatpush1.bf16.msra.mxu0 %v1219
    %1363 = vmatprep.subr.bf16.mxu0 %v1228
    %1364 = vmatpush1.bf16.msra.mxu0 %v1227
    %1365 = vmatprep.subr.bf16.mxu0 %v1236
    %1366 = vmatpush1.bf16.msra.mxu0 %v1235
    %1367 = vmatprep.subr.bf16.mxu0 %v1244
    %1368 = vmatpush1.bf16.msra.mxu0 %v1243
    %1369 = vmatprep.mubr.bf16.mxu0 0
    %1370 = vmatmul.mubr.bf16.gmra.mrb[0].mxu0 0
    %v1371 = vpop.f32.mrb[0].mxu0
    %v1372 = vadd.f32 0.0, %v1371
    %v1373 = vpop.f32.mrb[0].mxu0
    %v1374 = vadd.f32 0.0, %v1373
    %v1375 = vpop.f32.mrb[0].mxu0
    %v1376 = vpop.f32.mrb[0].mxu0
    %1377 = vdwg.mxu0
    %1378 = vmatprep.subr.bf16.mxu0 %v1126
    %1379 = vmatpush1.bf16.msra.mxu0 %v1125
    %1380 = vmatprep.subr.bf16.mxu0 %v1134
    %1381 = vmatpush1.bf16.msra.mxu0 %v1133
    %1382 = vmatprep.subr.bf16.mxu0 %v1142
    %1383 = vmatpush1.bf16.msra.mxu0 %v1141
    %1384 = vmatprep.subr.bf16.mxu0 %v1150
    %1385 = vmatpush1.bf16.msra.mxu0 %v1149
    %1386 = vmatprep.subr.bf16.mxu0 %v1158
    %1387 = vmatpush1.bf16.msra.mxu0 %v1157
    %1388 = vmatprep.subr.bf16.mxu0 %v1166
    %1389 = vmatpush1.bf16.msra.mxu0 %v1165
    %1390 = vmatprep.subr.bf16.mxu0 %v1174
    %1391 = vmatpush1.bf16.msra.mxu0 %v1173
    %1392 = vmatprep.subr.bf16.mxu0 %v1182
    %1393 = vmatpush1.bf16.msra.mxu0 %v1181
    %1394 = vmatprep.subr.bf16.mxu0 %v1190
    %1395 = vmatpush1.bf16.msra.mxu0 %v1189
    %1396 = vmatprep.subr.bf16.mxu0 %v1198
    %1397 = vmatpush1.bf16.msra.mxu0 %v1197
    %1398 = vmatprep.subr.bf16.mxu0 %v1206
    %1399 = vmatpush1.bf16.msra.mxu0 %v1205
    %1400 = vmatprep.subr.bf16.mxu0 %v1214
    %1401 = vmatpush1.bf16.msra.mxu0 %v1213
    %1402 = vmatprep.subr.bf16.mxu0 %v1222
    %1403 = vmatpush1.bf16.msra.mxu0 %v1221
    %1404 = vmatprep.subr.bf16.mxu0 %v1230
    %1405 = vmatpush1.bf16.msra.mxu0 %v1229
    %1406 = vmatprep.subr.bf16.mxu0 %v1238
    %1407 = vmatpush1.bf16.msra.mxu0 %v1237
    %1408 = vmatprep.subr.bf16.mxu0 %v1246
    %1409 = vmatpush1.bf16.msra.mxu0 %v1245
    %1410 = vmatprep.mubr.bf16.mxu0 0
    %1411 = vmatmul.mubr.bf16.gmra.mrb[0].mxu0 0
    %v1412 = vpop.f32.mrb[0].mxu0
    %v1413 = vadd.f32 0.0, %v1412
    %v1414 = vpop.f32.mrb[0].mxu0
    %v1415 = vadd.f32 0.0, %v1414
    %v1416 = vpop.f32.mrb[0].mxu0
    %v1417 = vpop.f32.mrb[0].mxu0
    %1418 = vdwg.mxu0
    %v1419 = vadd.f32 %v1247, %v1290
    %v1420 = vadd.f32 %v1248, %v1292
    %v1421 = vadd.f32 %v1249, %v1331
    %v1422 = vadd.f32 %v1250, %v1333
    %v1423 = vadd.f32 %v1251, %v1372
    %v1424 = vadd.f32 %v1252, %v1374
    %v1425 = vadd.f32 %v1253, %v1413
    %v1426 = vadd.f32 %v1254, %v1415
    %v1427 = vxor.u32 %v1419, 2147483648
    %v1428 = vxor.u32 %v1420, 2147483648
    %v1429 = vxor.u32 %v1421, 2147483648
    %v1430 = vxor.u32 %v1422, 2147483648
    %v1431 = vxor.u32 %v1423, 2147483648
    %v1432 = vxor.u32 %v1424, 2147483648
    %v1433 = vmul.f32 %v1427, 1.442695
    %v1434 = vpow.pop %v1433
    %v1435 = vmul.f32 %v1428, 1.442695
    %v1436 = vpow.pop %v1435
    %v1437 = vmul.f32 %v1429, 1.442695
    %v1438 = vpow.pop %v1437
    %v1439 = vmul.f32 %v1430, 1.442695
    %v1440 = vpow.pop %v1439
    %v1441 = vmul.f32 %v1431, 1.442695
    %v1442 = vpow.pop %v1441
    %v1443 = vmul.f32 %v1432, 1.442695
    %v1444 = vpow.pop %v1443
    %v1445 = vadd.f32 %v1434, 1.0
    %v1446 = vadd.f32 %v1436, 1.0
    %v1447 = vadd.f32 %v1438, 1.0
    %v1448 = vadd.f32 %v1440, 1.0
    %v1449 = vadd.f32 %v1442, 1.0
    %v1450 = vadd.f32 %v1444, 1.0
    %v1451 = vrcp.pop %v1445
    %v1452 = vmul.f32 1.0, %v1451
    %v1453 = vrcp.pop %v1446
    %v1454 = vmul.f32 1.0, %v1453
    %v1455 = vrcp.pop %v1447
    %v1456 = vmul.f32 1.0, %v1455
    %v1457 = vrcp.pop %v1448
    %v1458 = vmul.f32 1.0, %v1457
    %v1459 = vrcp.pop %v1449
    %v1460 = vmul.f32 1.0, %v1459
    %v1461 = vrcp.pop %v1450
    %v1462 = vmul.f32 1.0, %v1461
    %v1463 = vtanh.pop %v1425
    %v1464 = vtanh.pop %v1426
    %v1465 = vmul.f32 %v1456, 0.0
    %v1466 = vmul.f32 %v1458, 0.0
    %v1467 = vmul.f32 %v1452, %v1463
    %v1468 = vmul.f32 %v1454, %v1464
    %v1469 = vadd.f32 %v1465, %v1467
    %v1470 = vadd.f32 %v1466, %v1468
    %v1471 = vtanh.pop %v1469
    %v1472 = vtanh.pop %v1470
    %v1473 = vmul.f32 %v1460, %v1471
    %v1474 = vmul.f32 %v1462, %v1472
    %s1475 = scalar_lea.vmem [#allocation2], 64
    %v1476 = vld [vmem:[%s1475] sm:$0xff]
    %v1477 = vld [vmem:[%s1475 + $0x8] sm:$0xff]
    %v1478 = vld [vmem:[%s1475 + $0x10] sm:$0xff]
    %v1479 = vld [vmem:[%s1475 + $0x18] sm:$0xff]
    %v1480 = vld [vmem:[%s1475 + $0x20] sm:$0xff]
    %v1481 = vld [vmem:[%s1475 + $0x28] sm:$0xff]
    %v1482 = vld [vmem:[%s1475 + $0x30] sm:$0xff]
    %v1483 = vld [vmem:[%s1475 + $0x38] sm:$0xff]
    %v1484 = vpack.c.bf16 %v1473, %v1473
    %v1485 = vpack.c.bf16 %v1474, %v1474
    %1486 = vmatprep.subr.bf16.mxu0 %v1120
    %1487 = vmatpush1.bf16.msra.mxu0 %v1119
    %1488 = vmatprep.subr.bf16.mxu0 %v1128
    %1489 = vmatpush1.bf16.msra.mxu0 %v1127
    %1490 = vmatprep.subr.bf16.mxu0 %v1136
    %1491 = vmatpush1.bf16.msra.mxu0 %v1135
    %1492 = vmatprep.subr.bf16.mxu0 %v1144
    %1493 = vmatpush1.bf16.msra.mxu0 %v1143
    %1494 = vmatprep.subr.bf16.mxu0 %v1152
    %1495 = vmatpush1.bf16.msra.mxu0 %v1151
    %1496 = vmatprep.subr.bf16.mxu0 %v1160
    %1497 = vmatpush1.bf16.msra.mxu0 %v1159
    %1498 = vmatprep.subr.bf16.mxu0 %v1168
    %1499 = vmatpush1.bf16.msra.mxu0 %v1167
    %1500 = vmatprep.subr.bf16.mxu0 %v1176
    %1501 = vmatpush1.bf16.msra.mxu0 %v1175
    %1502 = vmatprep.subr.bf16.mxu0 %v1184
    %1503 = vmatpush1.bf16.msra.mxu0 %v1183
    %1504 = vmatprep.subr.bf16.mxu0 %v1192
    %1505 = vmatpush1.bf16.msra.mxu0 %v1191
    %1506 = vmatprep.subr.bf16.mxu0 %v1200
    %1507 = vmatpush1.bf16.msra.mxu0 %v1199
    %1508 = vmatprep.subr.bf16.mxu0 %v1208
    %1509 = vmatpush1.bf16.msra.mxu0 %v1207
    %1510 = vmatprep.subr.bf16.mxu0 %v1216
    %1511 = vmatpush1.bf16.msra.mxu0 %v1215
    %1512 = vmatprep.subr.bf16.mxu0 %v1224
    %1513 = vmatpush1.bf16.msra.mxu0 %v1223
    %1514 = vmatprep.subr.bf16.mxu0 %v1232
    %1515 = vmatpush1.bf16.msra.mxu0 %v1231
    %1516 = vmatprep.subr.bf16.mxu0 %v1240
    %1517 = vmatpush1.bf16.msra.mxu0 %v1239
    %1518 = vmatprep.mubr.bf16.mxu0 %v1485
    %1519 = vmatmul.mubr.bf16.gmra.mrb[0].mxu0 %v1484
    %v1520 = vpop.f32.mrb[0].mxu0
    %v1521 = vadd.f32 0.0, %v1520
    %v1522 = vpop.f32.mrb[0].mxu0
    %v1523 = vadd.f32 0.0, %v1522
    %v1524 = vpop.f32.mrb[0].mxu0
    %v1525 = vpop.f32.mrb[0].mxu0
    %1526 = vdwg.mxu0
    %1527 = vmatprep.subr.bf16.mxu0 %v1122
    %1528 = vmatpush1.bf16.msra.mxu0 %v1121
    %1529 = vmatprep.subr.bf16.mxu0 %v1130
    %1530 = vmatpush1.bf16.msra.mxu0 %v1129
    %1531 = vmatprep.subr.bf16.mxu0 %v1138
    %1532 = vmatpush1.bf16.msra.mxu0 %v1137
    %1533 = vmatprep.subr.bf16.mxu0 %v1146
    %1534 = vmatpush1.bf16.msra.mxu0 %v1145
    %1535 = vmatprep.subr.bf16.mxu0 %v1154
    %1536 = vmatpush1.bf16.msra.mxu0 %v1153
    %1537 = vmatprep.subr.bf16.mxu0 %v1162
    %1538 = vmatpush1.bf16.msra.mxu0 %v1161
    %1539 = vmatprep.subr.bf16.mxu0 %v1170
    %1540 = vmatpush1.bf16.msra.mxu0 %v1169
    %1541 = vmatprep.subr.bf16.mxu0 %v1178
    %1542 = vmatpush1.bf16.msra.mxu0 %v1177
    %1543 = vmatprep.subr.bf16.mxu0 %v1186
    %1544 = vmatpush1.bf16.msra.mxu0 %v1185
    %1545 = vmatprep.subr.bf16.mxu0 %v1194
    %1546 = vmatpush1.bf16.msra.mxu0 %v1193
    %1547 = vmatprep.subr.bf16.mxu0 %v1202
    %1548 = vmatpush1.bf16.msra.mxu0 %v1201
    %1549 = vmatprep.subr.bf16.mxu0 %v1210
    %1550 = vmatpush1.bf16.msra.mxu0 %v1209
    %1551 = vmatprep.subr.bf16.mxu0 %v1218
    %1552 = vmatpush1.bf16.msra.mxu0 %v1217
    %1553 = vmatprep.subr.bf16.mxu0 %v1226
    %1554 = vmatpush1.bf16.msra.mxu0 %v1225
    %1555 = vmatprep.subr.bf16.mxu0 %v1234
    %1556 = vmatpush1.bf16.msra.mxu0 %v1233
    %1557 = vmatprep.subr.bf16.mxu0 %v1242
    %1558 = vmatpush1.bf16.msra.mxu0 %v1241
    %1559 = vmatprep.mubr.bf16.mxu0 %v1485
    %1560 = vmatmul.mubr.bf16.gmra.mrb[0].mxu0 %v1484
    %v1561 = vpop.f32.mrb[0].mxu0
    %v1562 = vadd.f32 0.0, %v1561
    %v1563 = vpop.f32.mrb[0].mxu0
    %v1564 = vadd.f32 0.0, %v1563
    %v1565 = vpop.f32.mrb[0].mxu0
    %v1566 = vpop.f32.mrb[0].mxu0
    %1567 = vdwg.mxu0
    %1568 = vmatprep.subr.bf16.mxu0 %v1124
    %1569 = vmatpush1.bf16.msra.mxu0 %v1123
    %1570 = vmatprep.subr.bf16.mxu0 %v1132
    %1571 = vmatpush1.bf16.msra.mxu0 %v1131
    %1572 = vmatprep.subr.bf16.mxu0 %v1140
    %1573 = vmatpush1.bf16.msra.mxu0 %v1139
    %1574 = vmatprep.subr.bf16.mxu0 %v1148
    %1575 = vmatpush1.bf16.msra.mxu0 %v1147
    %1576 = vmatprep.subr.bf16.mxu0 %v1156
    %1577 = vmatpush1.bf16.msra.mxu0 %v1155
    %1578 = vmatprep.subr.bf16.mxu0 %v1164
    %1579 = vmatpush1.bf16.msra.mxu0 %v1163
    %1580 = vmatprep.subr.bf16.mxu0 %v1172
    %1581 = vmatpush1.bf16.msra.mxu0 %v1171
    %1582 = vmatprep.subr.bf16.mxu0 %v1180
    %1583 = vmatpush1.bf16.msra.mxu0 %v1179
    %1584 = vmatprep.subr.bf16.mxu0 %v1188
    %1585 = vmatpush1.bf16.msra.mxu0 %v1187
    %1586 = vmatprep.subr.bf16.mxu0 %v1196
    %1587 = vmatpush1.bf16.msra.mxu0 %v1195
    %1588 = vmatprep.subr.bf16.mxu0 %v1204
    %1589 = vmatpush1.bf16.msra.mxu0 %v1203
    %1590 = vmatprep.subr.bf16.mxu0 %v1212
    %1591 = vmatpush1.bf16.msra.mxu0 %v1211
    %1592 = vmatprep.subr.bf16.mxu0 %v1220
    %1593 = vmatpush1.bf16.msra.mxu0 %v1219
    %1594 = vmatprep.subr.bf16.mxu0 %v1228
    %1595 = vmatpush1.bf16.msra.mxu0 %v1227
    %1596 = vmatprep.subr.bf16.mxu0 %v1236
    %1597 = vmatpush1.bf16.msra.mxu0 %v1235
    %1598 = vmatprep.subr.bf16.mxu0 %v1244
    %1599 = vmatpush1.bf16.msra.mxu0 %v1243
    %1600 = vmatprep.mubr.bf16.mxu0 %v1485
    %1601 = vmatmul.mubr.bf16.gmra.mrb[0].mxu0 %v1484
    %v1602 = vpop.f32.mrb[0].mxu0
    %v1603 = vadd.f32 0.0, %v1602
    %v1604 = vpop.f32.mrb[0].mxu0
    %v1605 = vadd.f32 0.0, %v1604
    %v1606 = vpop.f32.mrb[0].mxu0
    %v1607 = vpop.f32.mrb[0].mxu0
    %1608 = vdwg.mxu0
    %1609 = vmatprep.subr.bf16.mxu0 %v1126
    %1610 = vmatpush1.bf16.msra.mxu0 %v1125
    %1611 = vmatprep.subr.bf16.mxu0 %v1134
    %1612 = vmatpush1.bf16.msra.mxu0 %v1133
    %1613 = vmatprep.subr.bf16.mxu0 %v1142
    %1614 = vmatpush1.bf16.msra.mxu0 %v1141
    %1615 = vmatprep.subr.bf16.mxu0 %v1150
    %1616 = vmatpush1.bf16.msra.mxu0 %v1149
    %1617 = vmatprep.subr.bf16.mxu0 %v1158
    %1618 = vmatpush1.bf16.msra.mxu0 %v1157
    %1619 = vmatprep.subr.bf16.mxu0 %v1166
    %1620 = vmatpush1.bf16.msra.mxu0 %v1165
    %1621 = vmatprep.subr.bf16.mxu0 %v1174
    %1622 = vmatpush1.bf16.msra.mxu0 %v1173
    %1623 = vmatprep.subr.bf16.mxu0 %v1182
    %1624 = vmatpush1.bf16.msra.mxu0 %v1181
    %1625 = vmatprep.subr.bf16.mxu0 %v1190
    %1626 = vmatpush1.bf16.msra.mxu0 %v1189
    %1627 = vmatprep.subr.bf16.mxu0 %v1198
    %1628 = vmatpush1.bf16.msra.mxu0 %v1197
    %1629 = vmatprep.subr.bf16.mxu0 %v1206
    %1630 = vmatpush1.bf16.msra.mxu0 %v1205
    %1631 = vmatprep.subr.bf16.mxu0 %v1214
    %1632 = vmatpush1.bf16.msra.mxu0 %v1213
    %1633 = vmatprep.subr.bf16.mxu0 %v1222
    %1634 = vmatpush1.bf16.msra.mxu0 %v1221
    %1635 = vmatprep.subr.bf16.mxu0 %v1230
    %1636 = vmatpush1.bf16.msra.mxu0 %v1229
    %1637 = vmatprep.subr.bf16.mxu0 %v1238
    %1638 = vmatpush1.bf16.msra.mxu0 %v1237
    %1639 = vmatprep.subr.bf16.mxu0 %v1246
    %1640 = vmatpush1.bf16.msra.mxu0 %v1245
    %1641 = vmatprep.mubr.bf16.mxu0 %v1485
    %1642 = vmatmul.mubr.bf16.gmra.mrb[0].mxu0 %v1484
    %v1643 = vpop.f32.mrb[0].mxu0
    %v1644 = vadd.f32 0.0, %v1643
    %v1645 = vpop.f32.mrb[0].mxu0
    %v1646 = vadd.f32 0.0, %v1645
    %v1647 = vpop.f32.mrb[0].mxu0
    %v1648 = vpop.f32.mrb[0].mxu0
    %1649 = vdwg.mxu0
    %v1650 = vadd.f32 %v1476, %v1521
    %v1651 = vadd.f32 %v1477, %v1523
    %v1652 = vadd.f32 %v1478, %v1562
    %v1653 = vadd.f32 %v1479, %v1564
    %v1654 = vadd.f32 %v1480, %v1603
    %v1655 = vadd.f32 %v1481, %v1605
    %v1656 = vadd.f32 %v1482, %v1644
    %v1657 = vadd.f32 %v1483, %v1646
    %v1658 = vxor.u32 %v1650, 2147483648
    %v1659 = vxor.u32 %v1651, 2147483648
    %v1660 = vxor.u32 %v1652, 2147483648
    %v1661 = vxor.u32 %v1653, 2147483648
    %v1662 = vxor.u32 %v1654, 2147483648
    %v1663 = vxor.u32 %v1655, 2147483648
    %v1664 = vmul.f32 %v1658, 1.442695
    %v1665 = vpow.pop %v1664
    %v1666 = vmul.f32 %v1659, 1.442695
    %v1667 = vpow.pop %v1666
    %v1668 = vmul.f32 %v1660, 1.442695
    %v1669 = vpow.pop %v1668
    %v1670 = vmul.f32 %v1661, 1.442695
    %v1671 = vpow.pop %v1670
    %v1672 = vmul.f32 %v1662, 1.442695
    %v1673 = vpow.pop %v1672
    %v1674 = vmul.f32 %v1663, 1.442695
    %v1675 = vpow.pop %v1674
    %v1676 = vadd.f32 %v1665, 1.0
    %v1677 = vadd.f32 %v1667, 1.0
    %v1678 = vadd.f32 %v1669, 1.0
    %v1679 = vadd.f32 %v1671, 1.0
    %v1680 = vadd.f32 %v1673, 1.0
    %v1681 = vadd.f32 %v1675, 1.0
    %v1682 = vrcp.pop %v1676
    %v1683 = vmul.f32 1.0, %v1682
    %v1684 = vrcp.pop %v1677
    %v1685 = vmul.f32 1.0, %v1684
    %v1686 = vrcp.pop %v1678
    %v1687 = vmul.f32 1.0, %v1686
    %v1688 = vrcp.pop %v1679
    %v1689 = vmul.f32 1.0, %v1688
    %v1690 = vrcp.pop %v1680
    %v1691 = vmul.f32 1.0, %v1690
    %v1692 = vrcp.pop %v1681
    %v1693 = vmul.f32 1.0, %v1692
    %v1694 = vtanh.pop %v1656
    %v1695 = vtanh.pop %v1657
    %v1696 = vmul.f32 %v1687, %v1469
    %v1697 = vmul.f32 %v1689, %v1470
    %v1698 = vmul.f32 %v1683, %v1694
    %v1699 = vmul.f32 %v1685, %v1695
    %v1700 = vadd.f32 %v1696, %v1698
    %v1701 = vadd.f32 %v1697, %v1699
    %v1702 = vtanh.pop %v1700
    %v1703 = vtanh.pop %v1701
    %v1704 = vmul.f32 %v1691, %v1702
    %v1705 = vmul.f32 %v1693, %v1703
    %s1706 = scalar_lea.vmem [#allocation2], 128
    %v1707 = vld [vmem:[%s1706] sm:$0xff]
    %v1708 = vld [vmem:[%s1706 + $0x8] sm:$0xff]
    %v1709 = vld [vmem:[%s1706 + $0x10] sm:$0xff]
    %v1710 = vld [vmem:[%s1706 + $0x18] sm:$0xff]
    %v1711 = vld [vmem:[%s1706 + $0x20] sm:$0xff]
    %v1712 = vld [vmem:[%s1706 + $0x28] sm:$0xff]
    %v1713 = vld [vmem:[%s1706 + $0x30] sm:$0xff]
    %v1714 = vld [vmem:[%s1706 + $0x38] sm:$0xff]
    %v1715 = vpack.c.bf16 %v1704, %v1704
    %v1716 = vpack.c.bf16 %v1705, %v1705
    %1717 = vmatprep.subr.bf16.mxu0 %v1120
    %1718 = vmatpush1.bf16.msra.mxu0 %v1119
    %1719 = vmatprep.subr.bf16.mxu0 %v1128
    %1720 = vmatpush1.bf16.msra.mxu0 %v1127
    %1721 = vmatprep.subr.bf16.mxu0 %v1136
    %1722 = vmatpush1.bf16.msra.mxu0 %v1135
    %1723 = vmatprep.subr.bf16.mxu0 %v1144
    %1724 = vmatpush1.bf16.msra.mxu0 %v1143
    %1725 = vmatprep.subr.bf16.mxu0 %v1152
    %1726 = vmatpush1.bf16.msra.mxu0 %v1151
    %1727 = vmatprep.subr.bf16.mxu0 %v1160
    %1728 = vmatpush1.bf16.msra.mxu0 %v1159
    %1729 = vmatprep.subr.bf16.mxu0 %v1168
    %1730 = vmatpush1.bf16.msra.mxu0 %v1167
    %1731 = vmatprep.subr.bf16.mxu0 %v1176
    %1732 = vmatpush1.bf16.msra.mxu0 %v1175
    %1733 = vmatprep.subr.bf16.mxu0 %v1184
    %1734 = vmatpush1.bf16.msra.mxu0 %v1183
    %1735 = vmatprep.subr.bf16.mxu0 %v1192
    %1736 = vmatpush1.bf16.msra.mxu0 %v1191
    %1737 = vmatprep.subr.bf16.mxu0 %v1200
    %1738 = vmatpush1.bf16.msra.mxu0 %v1199
    %1739 = vmatprep.subr.bf16.mxu0 %v1208
    %1740 = vmatpush1.bf16.msra.mxu0 %v1207
    %1741 = vmatprep.subr.bf16.mxu0 %v1216
    %1742 = vmatpush1.bf16.msra.mxu0 %v1215
    %1743 = vmatprep.subr.bf16.mxu0 %v1224
    %1744 = vmatpush1.bf16.msra.mxu0 %v1223
    %1745 = vmatprep.subr.bf16.mxu0 %v1232
    %1746 = vmatpush1.bf16.msra.mxu0 %v1231
    %1747 = vmatprep.subr.bf16.mxu0 %v1240
    %1748 = vmatpush1.bf16.msra.mxu0 %v1239
    %1749 = vmatprep.mubr.bf16.mxu0 %v1716
    %1750 = vmatmul.mubr.bf16.gmra.mrb[0].mxu0 %v1715
    %v1751 = vpop.f32.mrb[0].mxu0
    %v1752 = vadd.f32 0.0, %v1751
    %v1753 = vpop.f32.mrb[0].mxu0
    %v1754 = vadd.f32 0.0, %v1753
    %v1755 = vpop.f32.mrb[0].mxu0
    %v1756 = vpop.f32.mrb[0].mxu0
    %1757 = vdwg.mxu0
    %1758 = vmatprep.subr.bf16.mxu0 %v1122
    %1759 = vmatpush1.bf16.msra.mxu0 %v1121
    %1760 = vmatprep.subr.bf16.mxu0 %v1130
    %1761 = vmatpush1.bf16.msra.mxu0 %v1129
    %1762 = vmatprep.subr.bf16.mxu0 %v1138
    %1763 = vmatpush1.bf16.msra.mxu0 %v1137
    %1764 = vmatprep.subr.bf16.mxu0 %v1146
    %1765 = vmatpush1.bf16.msra.mxu0 %v1145
    %1766 = vmatprep.subr.bf16.mxu0 %v1154
    %1767 = vmatpush1.bf16.msra.mxu0 %v1153
    %1768 = vmatprep.subr.bf16.mxu0 %v1162
    %1769 = vmatpush1.bf16.msra.mxu0 %v1161
    %1770 = vmatprep.subr.bf16.mxu0 %v1170
    %1771 = vmatpush1.bf16.msra.mxu0 %v1169
    %1772 = vmatprep.subr.bf16.mxu0 %v1178
    %1773 = vmatpush1.bf16.msra.mxu0 %v1177
    %1774 = vmatprep.subr.bf16.mxu0 %v1186
    %1775 = vmatpush1.bf16.msra.mxu0 %v1185
    %1776 = vmatprep.subr.bf16.mxu0 %v1194
    %1777 = vmatpush1.bf16.msra.mxu0 %v1193
    %1778 = vmatprep.subr.bf16.mxu0 %v1202
    %1779 = vmatpush1.bf16.msra.mxu0 %v1201
    %1780 = vmatprep.subr.bf16.mxu0 %v1210
    %1781 = vmatpush1.bf16.msra.mxu0 %v1209
    %1782 = vmatprep.subr.bf16.mxu0 %v1218
    %1783 = vmatpush1.bf16.msra.mxu0 %v1217
    %1784 = vmatprep.subr.bf16.mxu0 %v1226
    %1785 = vmatpush1.bf16.msra.mxu0 %v1225
    %1786 = vmatprep.subr.bf16.mxu0 %v1234
    %1787 = vmatpush1.bf16.msra.mxu0 %v1233
    %1788 = vmatprep.subr.bf16.mxu0 %v1242
    %1789 = vmatpush1.bf16.msra.mxu0 %v1241
    %1790 = vmatprep.mubr.bf16.mxu0 %v1716
    %1791 = vmatmul.mubr.bf16.gmra.mrb[0].mxu0 %v1715
    %v1792 = vpop.f32.mrb[0].mxu0
    %v1793 = vadd.f32 0.0, %v1792
    %v1794 = vpop.f32.mrb[0].mxu0
    %v1795 = vadd.f32 0.0, %v1794
    %v1796 = vpop.f32.mrb[0].mxu0
    %v1797 = vpop.f32.mrb[0].mxu0
    %1798 = vdwg.mxu0
    %1799 = vmatprep.subr.bf16.mxu0 %v1124
    %1800 = vmatpush1.bf16.msra.mxu0 %v1123
    %1801 = vmatprep.subr.bf16.mxu0 %v1132
    %1802 = vmatpush1.bf16.msra.mxu0 %v1131
    %1803 = vmatprep.subr.bf16.mxu0 %v1140
    %1804 = vmatpush1.bf16.msra.mxu0 %v1139
    %1805 = vmatprep.subr.bf16.mxu0 %v1148
    %1806 = vmatpush1.bf16.msra.mxu0 %v1147
    %1807 = vmatprep.subr.bf16.mxu0 %v1156
    %1808 = vmatpush1.bf16.msra.mxu0 %v1155
    %1809 = vmatprep.subr.bf16.mxu0 %v1164
    %1810 = vmatpush1.bf16.msra.mxu0 %v1163
    %1811 = vmatprep.subr.bf16.mxu0 %v1172
    %1812 = vmatpush1.bf16.msra.mxu0 %v1171
    %1813 = vmatprep.subr.bf16.mxu0 %v1180
    %1814 = vmatpush1.bf16.msra.mxu0 %v1179
    %1815 = vmatprep.subr.bf16.mxu0 %v1188
    %1816 = vmatpush1.bf16.msra.mxu0 %v1187
    %1817 = vmatprep.subr.bf16.mxu0 %v1196
    %1818 = vmatpush1.bf16.msra.mxu0 %v1195
    %1819 = vmatprep.subr.bf16.mxu0 %v1204
    %1820 = vmatpush1.bf16.msra.mxu0 %v1203
    %1821 = vmatprep.subr.bf16.mxu0 %v1212
    %1822 = vmatpush1.bf16.msra.mxu0 %v1211
    %1823 = vmatprep.subr.bf16.mxu0 %v1220
    %1824 = vmatpush1.bf16.msra.mxu0 %v1219
    %1825 = vmatprep.subr.bf16.mxu0 %v1228
    %1826 = vmatpush1.bf16.msra.mxu0 %v1227
    %1827 = vmatprep.subr.bf16.mxu0 %v1236
    %1828 = vmatpush1.bf16.msra.mxu0 %v1235
    %1829 = vmatprep.subr.bf16.mxu0 %v1244
    %1830 = vmatpush1.bf16.msra.mxu0 %v1243
    %1831 = vmatprep.mubr.bf16.mxu0 %v1716
    %1832 = vmatmul.mubr.bf16.gmra.mrb[0].mxu0 %v1715
    %v1833 = vpop.f32.mrb[0].mxu0
    %v1834 = vadd.f32 0.0, %v1833
    %v1835 = vpop.f32.mrb[0].mxu0
    %v1836 = vadd.f32 0.0, %v1835
    %v1837 = vpop.f32.mrb[0].mxu0
    %v1838 = vpop.f32.mrb[0].mxu0
    %1839 = vdwg.mxu0
    %1840 = vmatprep.subr.bf16.mxu0 %v1126
    %1841 = vmatpush1.bf16.msra.mxu0 %v1125
    %1842 = vmatprep.subr.bf16.mxu0 %v1134
    %1843 = vmatpush1.bf16.msra.mxu0 %v1133
    %1844 = vmatprep.subr.bf16.mxu0 %v1142
    %1845 = vmatpush1.bf16.msra.mxu0 %v1141
    %1846 = vmatprep.subr.bf16.mxu0 %v1150
    %1847 = vmatpush1.bf16.msra.mxu0 %v1149
    %1848 = vmatprep.subr.bf16.mxu0 %v1158
    %1849 = vmatpush1.bf16.msra.mxu0 %v1157
    %1850 = vmatprep.subr.bf16.mxu0 %v1166
    %1851 = vmatpush1.bf16.msra.mxu0 %v1165
    %1852 = vmatprep.subr.bf16.mxu0 %v1174
    %1853 = vmatpush1.bf16.msra.mxu0 %v1173
    %1854 = vmatprep.subr.bf16.mxu0 %v1182
    %1855 = vmatpush1.bf16.msra.mxu0 %v1181
    %1856 = vmatprep.subr.bf16.mxu0 %v1190
    %1857 = vmatpush1.bf16.msra.mxu0 %v1189
    %1858 = vmatprep.subr.bf16.mxu0 %v1198
    %1859 = vmatpush1.bf16.msra.mxu0 %v1197
    %1860 = vmatprep.subr.bf16.mxu0 %v1206
    %1861 = vmatpush1.bf16.msra.mxu0 %v1205
    %1862 = vmatprep.subr.bf16.mxu0 %v1214
    %1863 = vmatpush1.bf16.msra.mxu0 %v1213
    %1864 = vmatprep.subr.bf16.mxu0 %v1222
    %1865 = vmatpush1.bf16.msra.mxu0 %v1221
    %1866 = vmatprep.subr.bf16.mxu0 %v1230
    %1867 = vmatpush1.bf16.msra.mxu0 %v1229
    %1868 = vmatprep.subr.bf16.mxu0 %v1238
    %1869 = vmatpush1.bf16.msra.mxu0 %v1237
    %1870 = vmatprep.subr.bf16.mxu0 %v1246
    %1871 = vmatpush1.bf16.msra.mxu0 %v1245
    %1872 = vmatprep.mubr.bf16.mxu0 %v1716
    %1873 = vmatmul.mubr.bf16.gmra.mrb[0].mxu0 %v1715
    %v1874 = vpop.f32.mrb[0].mxu0
    %v1875 = vadd.f32 0.0, %v1874
    %v1876 = vpop.f32.mrb[0].mxu0
    %v1877 = vadd.f32 0.0, %v1876
    %v1878 = vpop.f32.mrb[0].mxu0
    %v1879 = vpop.f32.mrb[0].mxu0
    %1880 = vdwg.mxu0
    %v1881 = vadd.f32 %v1707, %v1752
    %v1882 = vadd.f32 %v1708, %v1754
    %v1883 = vadd.f32 %v1709, %v1793
    %v1884 = vadd.f32 %v1710, %v1795
    %v1885 = vadd.f32 %v1711, %v1834
    %v1886 = vadd.f32 %v1712, %v1836
    %v1887 = vadd.f32 %v1713, %v1875
    %v1888 = vadd.f32 %v1714, %v1877
    %v1889 = vxor.u32 %v1881, 2147483648
    %v1890 = vxor.u32 %v1882, 2147483648
    %v1891 = vxor.u32 %v1883, 2147483648
    %v1892 = vxor.u32 %v1884, 2147483648
    %v1893 = vxor.u32 %v1885, 2147483648
    %v1894 = vxor.u32 %v1886, 2147483648
    %v1895 = vmul.f32 %v1889, 1.442695
    %v1896 = vpow.pop %v1895
    %v1897 = vmul.f32 %v1890, 1.442695
    %v1898 = vpow.pop %v1897
    %v1899 = vmul.f32 %v1891, 1.442695
    %v1900 = vpow.pop %v1899
    %v1901 = vmul.f32 %v1892, 1.442695
    %v1902 = vpow.pop %v1901
    %v1903 = vmul.f32 %v1893, 1.442695
    %v1904 = vpow.pop %v1903
    %v1905 = vmul.f32 %v1894, 1.442695
    %v1906 = vpow.pop %v1905
    %v1907 = vadd.f32 %v1896, 1.0
    %v1908 = vadd.f32 %v1898, 1.0
    %v1909 = vadd.f32 %v1900, 1.0
    %v1910 = vadd.f32 %v1902, 1.0
    %v1911 = vadd.f32 %v1904, 1.0
    %v1912 = vadd.f32 %v1906, 1.0
    %v1913 = vrcp.pop %v1907
    %v1914 = vmul.f32 1.0, %v1913
    %v1915 = vrcp.pop %v1908
    %v1916 = vmul.f32 1.0, %v1915
    %v1917 = vrcp.pop %v1909
    %v1918 = vmul.f32 1.0, %v1917
    %v1919 = vrcp.pop %v1910
    %v1920 = vmul.f32 1.0, %v1919
    %v1921 = vrcp.pop %v1911
    %v1922 = vmul.f32 1.0, %v1921
    %v1923 = vrcp.pop %v1912
    %v1924 = vmul.f32 1.0, %v1923
    %v1925 = vtanh.pop %v1887
    %v1926 = vtanh.pop %v1888
    %v1927 = vmul.f32 %v1918, %v1700
    %v1928 = vmul.f32 %v1920, %v1701
    %v1929 = vmul.f32 %v1914, %v1925
    %v1930 = vmul.f32 %v1916, %v1926
    %v1931 = vadd.f32 %v1927, %v1929
    %v1932 = vadd.f32 %v1928, %v1930
    %v1933 = vtanh.pop %v1931
    %v1934 = vtanh.pop %v1932
    %v1935 = vmul.f32 %v1922, %v1933
    %v1936 = vmul.f32 %v1924, %v1934
    %s1937 = scalar_lea.vmem [#allocation2], 192
    %v1938 = vld [vmem:[%s1937] sm:$0xff]
    %v1939 = vld [vmem:[%s1937 + $0x8] sm:$0xff]
    %v1940 = vld [vmem:[%s1937 + $0x10] sm:$0xff]
    %v1941 = vld [vmem:[%s1937 + $0x18] sm:$0xff]
    %v1942 = vld [vmem:[%s1937 + $0x20] sm:$0xff]
    %v1943 = vld [vmem:[%s1937 + $0x28] sm:$0xff]
    %v1944 = vld [vmem:[%s1937 + $0x30] sm:$0xff]
    %v1945 = vld [vmem:[%s1937 + $0x38] sm:$0xff]
    %v1946 = vpack.c.bf16 %v1935, %v1935
    %v1947 = vpack.c.bf16 %v1936, %v1936
    %1948 = vmatprep.subr.bf16.mxu0 %v1120
    %1949 = vmatpush1.bf16.msra.mxu0 %v1119
    %1950 = vmatprep.subr.bf16.mxu0 %v1128
    %1951 = vmatpush1.bf16.msra.mxu0 %v1127
    %1952 = vmatprep.subr.bf16.mxu0 %v1136
    %1953 = vmatpush1.bf16.msra.mxu0 %v1135
    %1954 = vmatprep.subr.bf16.mxu0 %v1144
    %1955 = vmatpush1.bf16.msra.mxu0 %v1143
    %1956 = vmatprep.subr.bf16.mxu0 %v1152
    %1957 = vmatpush1.bf16.msra.mxu0 %v1151
    %1958 = vmatprep.subr.bf16.mxu0 %v1160
    %1959 = vmatpush1.bf16.msra.mxu0 %v1159
    %1960 = vmatprep.subr.bf16.mxu0 %v1168
    %1961 = vmatpush1.bf16.msra.mxu0 %v1167
    %1962 = vmatprep.subr.bf16.mxu0 %v1176
    %1963 = vmatpush1.bf16.msra.mxu0 %v1175
    %1964 = vmatprep.subr.bf16.mxu0 %v1184
    %1965 = vmatpush1.bf16.msra.mxu0 %v1183
    %1966 = vmatprep.subr.bf16.mxu0 %v1192
    %1967 = vmatpush1.bf16.msra.mxu0 %v1191
    %1968 = vmatprep.subr.bf16.mxu0 %v1200
    %1969 = vmatpush1.bf16.msra.mxu0 %v1199
    %1970 = vmatprep.subr.bf16.mxu0 %v1208
    %1971 = vmatpush1.bf16.msra.mxu0 %v1207
    %1972 = vmatprep.subr.bf16.mxu0 %v1216
    %1973 = vmatpush1.bf16.msra.mxu0 %v1215
    %1974 = vmatprep.subr.bf16.mxu0 %v1224
    %1975 = vmatpush1.bf16.msra.mxu0 %v1223
    %1976 = vmatprep.subr.bf16.mxu0 %v1232
    %1977 = vmatpush1.bf16.msra.mxu0 %v1231
    %1978 = vmatprep.subr.bf16.mxu0 %v1240
    %1979 = vmatpush1.bf16.msra.mxu0 %v1239
    %1980 = vmatprep.mubr.bf16.mxu0 %v1947
    %1981 = vmatmul.mubr.bf16.gmra.mrb[0].mxu0 %v1946
    %v1982 = vpop.f32.mrb[0].mxu0
    %v1983 = vadd.f32 0.0, %v1982
    %v1984 = vpop.f32.mrb[0].mxu0
    %v1985 = vadd.f32 0.0, %v1984
    %v1986 = vpop.f32.mrb[0].mxu0
    %v1987 = vpop.f32.mrb[0].mxu0
    %1988 = vdwg.mxu0
    %1989 = vmatprep.subr.bf16.mxu0 %v1122
    %1990 = vmatpush1.bf16.msra.mxu0 %v1121
    %1991 = vmatprep.subr.bf16.mxu0 %v1130
    %1992 = vmatpush1.bf16.msra.mxu0 %v1129
    %1993 = vmatprep.subr.bf16.mxu0 %v1138
    %1994 = vmatpush1.bf16.msra.mxu0 %v1137
    %1995 = vmatprep.subr.bf16.mxu0 %v1146
    %1996 = vmatpush1.bf16.msra.mxu0 %v1145
    %1997 = vmatprep.subr.bf16.mxu0 %v1154
    %1998 = vmatpush1.bf16.msra.mxu0 %v1153
    %1999 = vmatprep.subr.bf16.mxu0 %v1162
    %2000 = vmatpush1.bf16.msra.mxu0 %v1161
    %2001 = vmatprep.subr.bf16.mxu0 %v1170
    %2002 = vmatpush1.bf16.msra.mxu0 %v1169
    %2003 = vmatprep.subr.bf16.mxu0 %v1178
    %2004 = vmatpush1.bf16.msra.mxu0 %v1177
    %2005 = vmatprep.subr.bf16.mxu0 %v1186
    %2006 = vmatpush1.bf16.msra.mxu0 %v1185
    %2007 = vmatprep.subr.bf16.mxu0 %v1194
    %2008 = vmatpush1.bf16.msra.mxu0 %v1193
    %2009 = vmatprep.subr.bf16.mxu0 %v1202
    %2010 = vmatpush1.bf16.msra.mxu0 %v1201
    %2011 = vmatprep.subr.bf16.mxu0 %v1210
    %2012 = vmatpush1.bf16.msra.mxu0 %v1209
    %2013 = vmatprep.subr.bf16.mxu0 %v1218
    %2014 = vmatpush1.bf16.msra.mxu0 %v1217
    %2015 = vmatprep.subr.bf16.mxu0 %v1226
    %2016 = vmatpush1.bf16.msra.mxu0 %v1225
    %2017 = vmatprep.subr.bf16.mxu0 %v1234
    %2018 = vmatpush1.bf16.msra.mxu0 %v1233
    %2019 = vmatprep.subr.bf16.mxu0 %v1242
    %2020 = vmatpush1.bf16.msra.mxu0 %v1241
    %2021 = vmatprep.mubr.bf16.mxu0 %v1947
    %2022 = vmatmul.mubr.bf16.gmra.mrb[0].mxu0 %v1946
    %v2023 = vpop.f32.mrb[0].mxu0
    %v2024 = vadd.f32 0.0, %v2023
    %v2025 = vpop.f32.mrb[0].mxu0
    %v2026 = vadd.f32 0.0, %v2025
    %v2027 = vpop.f32.mrb[0].mxu0
    %v2028 = vpop.f32.mrb[0].mxu0
    %2029 = vdwg.mxu0
    %2030 = vmatprep.subr.bf16.mxu0 %v1124
    %2031 = vmatpush1.bf16.msra.mxu0 %v1123
    %2032 = vmatprep.subr.bf16.mxu0 %v1132
    %2033 = vmatpush1.bf16.msra.mxu0 %v1131
    %2034 = vmatprep.subr.bf16.mxu0 %v1140
    %2035 = vmatpush1.bf16.msra.mxu0 %v1139
    %2036 = vmatprep.subr.bf16.mxu0 %v1148
    %2037 = vmatpush1.bf16.msra.mxu0 %v1147
    %2038 = vmatprep.subr.bf16.mxu0 %v1156
    %2039 = vmatpush1.bf16.msra.mxu0 %v1155
    %2040 = vmatprep.subr.bf16.mxu0 %v1164
    %2041 = vmatpush1.bf16.msra.mxu0 %v1163
    %2042 = vmatprep.subr.bf16.mxu0 %v1172
    %2043 = vmatpush1.bf16.msra.mxu0 %v1171
    %2044 = vmatprep.subr.bf16.mxu0 %v1180
    %2045 = vmatpush1.bf16.msra.mxu0 %v1179
    %2046 = vmatprep.subr.bf16.mxu0 %v1188
    %2047 = vmatpush1.bf16.msra.mxu0 %v1187
    %2048 = vmatprep.subr.bf16.mxu0 %v1196
    %2049 = vmatpush1.bf16.msra.mxu0 %v1195
    %2050 = vmatprep.subr.bf16.mxu0 %v1204
    %2051 = vmatpush1.bf16.msra.mxu0 %v1203
    %2052 = vmatprep.subr.bf16.mxu0 %v1212
    %2053 = vmatpush1.bf16.msra.mxu0 %v1211
    %2054 = vmatprep.subr.bf16.mxu0 %v1220
    %2055 = vmatpush1.bf16.msra.mxu0 %v1219
    %2056 = vmatprep.subr.bf16.mxu0 %v1228
    %2057 = vmatpush1.bf16.msra.mxu0 %v1227
    %2058 = vmatprep.subr.bf16.mxu0 %v1236
    %2059 = vmatpush1.bf16.msra.mxu0 %v1235
    %2060 = vmatprep.subr.bf16.mxu0 %v1244
    %2061 = vmatpush1.bf16.msra.mxu0 %v1243
    %2062 = vmatprep.mubr.bf16.mxu0 %v1947
    %2063 = vmatmul.mubr.bf16.gmra.mrb[0].mxu0 %v1946
    %v2064 = vpop.f32.mrb[0].mxu0
    %v2065 = vadd.f32 0.0, %v2064
    %v2066 = vpop.f32.mrb[0].mxu0
    %v2067 = vadd.f32 0.0, %v2066
    %v2068 = vpop.f32.mrb[0].mxu0
    %v2069 = vpop.f32.mrb[0].mxu0
    %2070 = vdwg.mxu0
    %2071 = vmatprep.subr.bf16.mxu0 %v1126
    %2072 = vmatpush1.bf16.msra.mxu0 %v1125
    %2073 = vmatprep.subr.bf16.mxu0 %v1134
    %2074 = vmatpush1.bf16.msra.mxu0 %v1133
    %2075 = vmatprep.subr.bf16.mxu0 %v1142
    %2076 = vmatpush1.bf16.msra.mxu0 %v1141
    %2077 = vmatprep.subr.bf16.mxu0 %v1150
    %2078 = vmatpush1.bf16.msra.mxu0 %v1149
    %2079 = vmatprep.subr.bf16.mxu0 %v1158
    %2080 = vmatpush1.bf16.msra.mxu0 %v1157
    %2081 = vmatprep.subr.bf16.mxu0 %v1166
    %2082 = vmatpush1.bf16.msra.mxu0 %v1165
    %2083 = vmatprep.subr.bf16.mxu0 %v1174
    %2084 = vmatpush1.bf16.msra.mxu0 %v1173
    %2085 = vmatprep.subr.bf16.mxu0 %v1182
    %2086 = vmatpush1.bf16.msra.mxu0 %v1181
    %2087 = vmatprep.subr.bf16.mxu0 %v1190
    %2088 = vmatpush1.bf16.msra.mxu0 %v1189
    %2089 = vmatprep.subr.bf16.mxu0 %v1198
    %2090 = vmatpush1.bf16.msra.mxu0 %v1197
    %2091 = vmatprep.subr.bf16.mxu0 %v1206
    %2092 = vmatpush1.bf16.msra.mxu0 %v1205
    %2093 = vmatprep.subr.bf16.mxu0 %v1214
    %2094 = vmatpush1.bf16.msra.mxu0 %v1213
    %2095 = vmatprep.subr.bf16.mxu0 %v1222
    %2096 = vmatpush1.bf16.msra.mxu0 %v1221
    %2097 = vmatprep.subr.bf16.mxu0 %v1230
    %2098 = vmatpush1.bf16.msra.mxu0 %v1229
    %2099 = vmatprep.subr.bf16.mxu0 %v1238
    %2100 = vmatpush1.bf16.msra.mxu0 %v1237
    %2101 = vmatprep.subr.bf16.mxu0 %v1246
    %2102 = vmatpush1.bf16.msra.mxu0 %v1245
    %2103 = vmatprep.mubr.bf16.mxu0 %v1947
    %2104 = vmatmul.mubr.bf16.gmra.mrb[0].mxu0 %v1946
    %v2105 = vpop.f32.mrb[0].mxu0
    %v2106 = vadd.f32 0.0, %v2105
    %v2107 = vpop.f32.mrb[0].mxu0
    %v2108 = vadd.f32 0.0, %v2107
    %v2109 = vpop.f32.mrb[0].mxu0
    %v2110 = vpop.f32.mrb[0].mxu0
    %2111 = vdwg.mxu0
    %v2112 = vadd.f32 %v1938, %v1983
    %v2113 = vadd.f32 %v1939, %v1985
    %v2114 = vadd.f32 %v1940, %v2024
    %v2115 = vadd.f32 %v1941, %v2026
    %v2116 = vadd.f32 %v1942, %v2065
    %v2117 = vadd.f32 %v1943, %v2067
    %v2118 = vadd.f32 %v1944, %v2106
    %v2119 = vadd.f32 %v1945, %v2108
    %v2120 = vxor.u32 %v2112, 2147483648
    %v2121 = vxor.u32 %v2113, 2147483648
    %v2122 = vxor.u32 %v2114, 2147483648
    %v2123 = vxor.u32 %v2115, 2147483648
    %v2124 = vxor.u32 %v2116, 2147483648
    %v2125 = vxor.u32 %v2117, 2147483648
    %v2126 = vmul.f32 %v2120, 1.442695
    %v2127 = vpow.pop %v2126
    %v2128 = vmul.f32 %v2121, 1.442695
    %v2129 = vpow.pop %v2128
    %v2130 = vmul.f32 %v2122, 1.442695
    %v2131 = vpow.pop %v2130
    %v2132 = vmul.f32 %v2123, 1.442695
    %v2133 = vpow.pop %v2132
    %v2134 = vmul.f32 %v2124, 1.442695
    %v2135 = vpow.pop %v2134
    %v2136 = vmul.f32 %v2125, 1.442695
    %v2137 = vpow.pop %v2136
    %v2138 = vadd.f32 %v2127, 1.0
    %v2139 = vadd.f32 %v2129, 1.0
    %v2140 = vadd.f32 %v2131, 1.0
    %v2141 = vadd.f32 %v2133, 1.0
    %v2142 = vadd.f32 %v2135, 1.0
    %v2143 = vadd.f32 %v2137, 1.0
    %v2144 = vrcp.pop %v2138
    %v2145 = vmul.f32 1.0, %v2144
    %v2146 = vrcp.pop %v2139
    %v2147 = vmul.f32 1.0, %v2146
    %v2148 = vrcp.pop %v2140
    %v2149 = vmul.f32 1.0, %v2148
    %v2150 = vrcp.pop %v2141
    %v2151 = vmul.f32 1.0, %v2150
    %v2152 = vrcp.pop %v2142
    %v2153 = vmul.f32 1.0, %v2152
    %v2154 = vrcp.pop %v2143
    %v2155 = vmul.f32 1.0, %v2154
    %v2156 = vtanh.pop %v2118
    %v2157 = vtanh.pop %v2119
    %v2158 = vmul.f32 %v2149, %v1931
    %v2159 = vmul.f32 %v2151, %v1932
    %v2160 = vmul.f32 %v2145, %v2156
    %v2161 = vmul.f32 %v2147, %v2157
    %v2162 = vadd.f32 %v2158, %v2160
    %v2163 = vadd.f32 %v2159, %v2161
    %v2164 = vtanh.pop %v2162
    %v2165 = vtanh.pop %v2163
    %v2166 = vmul.f32 %v2153, %v2164
    %v2167 = vmul.f32 %v2155, %v2165
    %s2168 = scalar_lea.vmem [#allocation2], 256
    %v2169 = vld [vmem:[%s2168] sm:$0xff]
    %v2170 = vld [vmem:[%s2168 + $0x8] sm:$0xff]
    %v2171 = vld [vmem:[%s2168 + $0x10] sm:$0xff]
    %v2172 = vld [vmem:[%s2168 + $0x18] sm:$0xff]
    %v2173 = vld [vmem:[%s2168 + $0x20] sm:$0xff]
    %v2174 = vld [vmem:[%s2168 + $0x28] sm:$0xff]
    %v2175 = vld [vmem:[%s2168 + $0x30] sm:$0xff]
    %v2176 = vld [vmem:[%s2168 + $0x38] sm:$0xff]
    %v2177 = vpack.c.bf16 %v2166, %v2166
    %v2178 = vpack.c.bf16 %v2167, %v2167
    %2179 = vmatprep.subr.bf16.mxu0 %v1120
    %2180 = vmatpush1.bf16.msra.mxu0 %v1119
    %2181 = vmatprep.subr.bf16.mxu0 %v1128
    %2182 = vmatpush1.bf16.msra.mxu0 %v1127
    %2183 = vmatprep.subr.bf16.mxu0 %v1136
    %2184 = vmatpush1.bf16.msra.mxu0 %v1135
    %2185 = vmatprep.subr.bf16.mxu0 %v1144
    %2186 = vmatpush1.bf16.msra.mxu0 %v1143
    %2187 = vmatprep.subr.bf16.mxu0 %v1152
    %2188 = vmatpush1.bf16.msra.mxu0 %v1151
    %2189 = vmatprep.subr.bf16.mxu0 %v1160
    %2190 = vmatpush1.bf16.msra.mxu0 %v1159
    %2191 = vmatprep.subr.bf16.mxu0 %v1168
    %2192 = vmatpush1.bf16.msra.mxu0 %v1167
    %2193 = vmatprep.subr.bf16.mxu0 %v1176
    %2194 = vmatpush1.bf16.msra.mxu0 %v1175
    %2195 = vmatprep.subr.bf16.mxu0 %v1184
    %2196 = vmatpush1.bf16.msra.mxu0 %v1183
    %2197 = vmatprep.subr.bf16.mxu0 %v1192
    %2198 = vmatpush1.bf16.msra.mxu0 %v1191
    %2199 = vmatprep.subr.bf16.mxu0 %v1200
    %2200 = vmatpush1.bf16.msra.mxu0 %v1199
    %2201 = vmatprep.subr.bf16.mxu0 %v1208
    %2202 = vmatpush1.bf16.msra.mxu0 %v1207
    %2203 = vmatprep.subr.bf16.mxu0 %v1216
    %2204 = vmatpush1.bf16.msra.mxu0 %v1215
    %2205 = vmatprep.subr.bf16.mxu0 %v1224
    %2206 = vmatpush1.bf16.msra.mxu0 %v1223
    %2207 = vmatprep.subr.bf16.mxu0 %v1232
    %2208 = vmatpush1.bf16.msra.mxu0 %v1231
    %2209 = vmatprep.subr.bf16.mxu0 %v1240
    %2210 = vmatpush1.bf16.msra.mxu0 %v1239
    %2211 = vmatprep.mubr.bf16.mxu0 %v2178
    %2212 = vmatmul.mubr.bf16.gmra.mrb[0].mxu0 %v2177
    %v2213 = vpop.f32.mrb[0].mxu0
    %v2214 = vadd.f32 0.0, %v2213
    %v2215 = vpop.f32.mrb[0].mxu0
    %v2216 = vadd.f32 0.0, %v2215
    %v2217 = vpop.f32.mrb[0].mxu0
    %v2218 = vpop.f32.mrb[0].mxu0
    %2219 = vdwg.mxu0
    %2220 = vmatprep.subr.bf16.mxu0 %v1122
    %2221 = vmatpush1.bf16.msra.mxu0 %v1121
    %2222 = vmatprep.subr.bf16.mxu0 %v1130
    %2223 = vmatpush1.bf16.msra.mxu0 %v1129
    %2224 = vmatprep.subr.bf16.mxu0 %v1138
    %2225 = vmatpush1.bf16.msra.mxu0 %v1137
    %2226 = vmatprep.subr.bf16.mxu0 %v1146
    %2227 = vmatpush1.bf16.msra.mxu0 %v1145
    %2228 = vmatprep.subr.bf16.mxu0 %v1154
    %2229 = vmatpush1.bf16.msra.mxu0 %v1153
    %2230 = vmatprep.subr.bf16.mxu0 %v1162
    %2231 = vmatpush1.bf16.msra.mxu0 %v1161
    %2232 = vmatprep.subr.bf16.mxu0 %v1170
    %2233 = vmatpush1.bf16.msra.mxu0 %v1169
    %2234 = vmatprep.subr.bf16.mxu0 %v1178
    %2235 = vmatpush1.bf16.msra.mxu0 %v1177
    %2236 = vmatprep.subr.bf16.mxu0 %v1186
    %2237 = vmatpush1.bf16.msra.mxu0 %v1185
    %2238 = vmatprep.subr.bf16.mxu0 %v1194
    %2239 = vmatpush1.bf16.msra.mxu0 %v1193
    %2240 = vmatprep.subr.bf16.mxu0 %v1202
    %2241 = vmatpush1.bf16.msra.mxu0 %v1201
    %2242 = vmatprep.subr.bf16.mxu0 %v1210
    %2243 = vmatpush1.bf16.msra.mxu0 %v1209
    %2244 = vmatprep.subr.bf16.mxu0 %v1218
    %2245 = vmatpush1.bf16.msra.mxu0 %v1217
    %2246 = vmatprep.subr.bf16.mxu0 %v1226
    %2247 = vmatpush1.bf16.msra.mxu0 %v1225
    %2248 = vmatprep.subr.bf16.mxu0 %v1234
    %2249 = vmatpush1.bf16.msra.mxu0 %v1233
    %2250 = vmatprep.subr.bf16.mxu0 %v1242
    %2251 = vmatpush1.bf16.msra.mxu0 %v1241
    %2252 = vmatprep.mubr.bf16.mxu0 %v2178
    %2253 = vmatmul.mubr.bf16.gmra.mrb[0].mxu0 %v2177
    %v2254 = vpop.f32.mrb[0].mxu0
    %v2255 = vadd.f32 0.0, %v2254
    %v2256 = vpop.f32.mrb[0].mxu0
    %v2257 = vadd.f32 0.0, %v2256
    %v2258 = vpop.f32.mrb[0].mxu0
    %v2259 = vpop.f32.mrb[0].mxu0
    %2260 = vdwg.mxu0
    %2261 = vmatprep.subr.bf16.mxu0 %v1124
    %2262 = vmatpush1.bf16.msra.mxu0 %v1123
    %2263 = vmatprep.subr.bf16.mxu0 %v1132
    %2264 = vmatpush1.bf16.msra.mxu0 %v1131
    %2265 = vmatprep.subr.bf16.mxu0 %v1140
    %2266 = vmatpush1.bf16.msra.mxu0 %v1139
    %2267 = vmatprep.subr.bf16.mxu0 %v1148
    %2268 = vmatpush1.bf16.msra.mxu0 %v1147
    %2269 = vmatprep.subr.bf16.mxu0 %v1156
    %2270 = vmatpush1.bf16.msra.mxu0 %v1155
    %2271 = vmatprep.subr.bf16.mxu0 %v1164
    %2272 = vmatpush1.bf16.msra.mxu0 %v1163
    %2273 = vmatprep.subr.bf16.mxu0 %v1172
    %2274 = vmatpush1.bf16.msra.mxu0 %v1171
    %2275 = vmatprep.subr.bf16.mxu0 %v1180
    %2276 = vmatpush1.bf16.msra.mxu0 %v1179
    %2277 = vmatprep.subr.bf16.mxu0 %v1188
    %2278 = vmatpush1.bf16.msra.mxu0 %v1187
    %2279 = vmatprep.subr.bf16.mxu0 %v1196
    %2280 = vmatpush1.bf16.msra.mxu0 %v1195
    %2281 = vmatprep.subr.bf16.mxu0 %v1204
    %2282 = vmatpush1.bf16.msra.mxu0 %v1203
    %2283 = vmatprep.subr.bf16.mxu0 %v1212
    %2284 = vmatpush1.bf16.msra.mxu0 %v1211
    %2285 = vmatprep.subr.bf16.mxu0 %v1220
    %2286 = vmatpush1.bf16.msra.mxu0 %v1219
    %2287 = vmatprep.subr.bf16.mxu0 %v1228
    %2288 = vmatpush1.bf16.msra.mxu0 %v1227
    %2289 = vmatprep.subr.bf16.mxu0 %v1236
    %2290 = vmatpush1.bf16.msra.mxu0 %v1235
    %2291 = vmatprep.subr.bf16.mxu0 %v1244
    %2292 = vmatpush1.bf16.msra.mxu0 %v1243
    %2293 = vmatprep.mubr.bf16.mxu0 %v2178
    %2294 = vmatmul.mubr.bf16.gmra.mrb[0].mxu0 %v2177
    %v2295 = vpop.f32.mrb[0].mxu0
    %v2296 = vadd.f32 0.0, %v2295
    %v2297 = vpop.f32.mrb[0].mxu0
    %v2298 = vadd.f32 0.0, %v2297
    %v2299 = vpop.f32.mrb[0].mxu0
    %v2300 = vpop.f32.mrb[0].mxu0
    %2301 = vdwg.mxu0
    %2302 = vmatprep.subr.bf16.mxu0 %v1126
    %2303 = vmatpush1.bf16.msra.mxu0 %v1125
    %2304 = vmatprep.subr.bf16.mxu0 %v1134
    %2305 = vmatpush1.bf16.msra.mxu0 %v1133
    %2306 = vmatprep.subr.bf16.mxu0 %v1142
    %2307 = vmatpush1.bf16.msra.mxu0 %v1141
    %2308 = vmatprep.subr.bf16.mxu0 %v1150
    %2309 = vmatpush1.bf16.msra.mxu0 %v1149
    %2310 = vmatprep.subr.bf16.mxu0 %v1158
    %2311 = vmatpush1.bf16.msra.mxu0 %v1157
    %2312 = vmatprep.subr.bf16.mxu0 %v1166
    %2313 = vmatpush1.bf16.msra.mxu0 %v1165
    %2314 = vmatprep.subr.bf16.mxu0 %v1174
    %2315 = vmatpush1.bf16.msra.mxu0 %v1173
    %2316 = vmatprep.subr.bf16.mxu0 %v1182
    %2317 = vmatpush1.bf16.msra.mxu0 %v1181
    %2318 = vmatprep.subr.bf16.mxu0 %v1190
    %2319 = vmatpush1.bf16.msra.mxu0 %v1189
    %2320 = vmatprep.subr.bf16.mxu0 %v1198
    %2321 = vmatpush1.bf16.msra.mxu0 %v1197
    %2322 = vmatprep.subr.bf16.mxu0 %v1206
    %2323 = vmatpush1.bf16.msra.mxu0 %v1205
    %2324 = vmatprep.subr.bf16.mxu0 %v1214
    %2325 = vmatpush1.bf16.msra.mxu0 %v1213
    %2326 = vmatprep.subr.bf16.mxu0 %v1222
    %2327 = vmatpush1.bf16.msra.mxu0 %v1221
    %2328 = vmatprep.subr.bf16.mxu0 %v1230
    %2329 = vmatpush1.bf16.msra.mxu0 %v1229
    %2330 = vmatprep.subr.bf16.mxu0 %v1238
    %2331 = vmatpush1.bf16.msra.mxu0 %v1237
    %2332 = vmatprep.subr.bf16.mxu0 %v1246
    %2333 = vmatpush1.bf16.msra.mxu0 %v1245
    %2334 = vmatprep.mubr.bf16.mxu0 %v2178
    %2335 = vmatmul.mubr.bf16.gmra.mrb[0].mxu0 %v2177
    %v2336 = vpop.f32.mrb[0].mxu0
    %v2337 = vadd.f32 0.0, %v2336
    %v2338 = vpop.f32.mrb[0].mxu0
    %v2339 = vadd.f32 0.0, %v2338
    %v2340 = vpop.f32.mrb[0].mxu0
    %v2341 = vpop.f32.mrb[0].mxu0
    %2342 = vdwg.mxu0
    %v2343 = vadd.f32 %v2169, %v2214
    %v2344 = vadd.f32 %v2170, %v2216
    %v2345 = vadd.f32 %v2171, %v2255
    %v2346 = vadd.f32 %v2172, %v2257
    %v2347 = vadd.f32 %v2173, %v2296
    %v2348 = vadd.f32 %v2174, %v2298
    %v2349 = vadd.f32 %v2175, %v2337
    %v2350 = vadd.f32 %v2176, %v2339
    %v2351 = vxor.u32 %v2343, 2147483648
    %v2352 = vxor.u32 %v2344, 2147483648
    %v2353 = vxor.u32 %v2345, 2147483648
    %v2354 = vxor.u32 %v2346, 2147483648
    %v2355 = vxor.u32 %v2347, 2147483648
    %v2356 = vxor.u32 %v2348, 2147483648
    %v2357 = vmul.f32 %v2351, 1.442695
    %v2358 = vpow.pop %v2357
    %v2359 = vmul.f32 %v2352, 1.442695
    %v2360 = vpow.pop %v2359
    %v2361 = vmul.f32 %v2353, 1.442695
    %v2362 = vpow.pop %v2361
    %v2363 = vmul.f32 %v2354, 1.442695
    %v2364 = vpow.pop %v2363
    %v2365 = vmul.f32 %v2355, 1.442695
    %v2366 = vpow.pop %v2365
    %v2367 = vmul.f32 %v2356, 1.442695
    %v2368 = vpow.pop %v2367
    %v2369 = vadd.f32 %v2358, 1.0
    %v2370 = vadd.f32 %v2360, 1.0
    %v2371 = vadd.f32 %v2362, 1.0
    %v2372 = vadd.f32 %v2364, 1.0
    %v2373 = vadd.f32 %v2366, 1.0
    %v2374 = vadd.f32 %v2368, 1.0
    %v2375 = vrcp.pop %v2369
    %v2376 = vmul.f32 1.0, %v2375
    %v2377 = vrcp.pop %v2370
    %v2378 = vmul.f32 1.0, %v2377
    %v2379 = vrcp.pop %v2371
    %v2380 = vmul.f32 1.0, %v2379
    %v2381 = vrcp.pop %v2372
    %v2382 = vmul.f32 1.0, %v2381
    %v2383 = vrcp.pop %v2373
    %v2384 = vmul.f32 1.0, %v2383
    %v2385 = vrcp.pop %v2374
    %v2386 = vmul.f32 1.0, %v2385
    %v2387 = vtanh.pop %v2349
    %v2388 = vtanh.pop %v2350
    %v2389 = vmul.f32 %v2380, %v2162
    %v2390 = vmul.f32 %v2382, %v2163
    %v2391 = vmul.f32 %v2376, %v2387
    %v2392 = vmul.f32 %v2378, %v2388
    %v2393 = vadd.f32 %v2389, %v2391
    %v2394 = vadd.f32 %v2390, %v2392
    %v2395 = vtanh.pop %v2393
    %v2396 = vtanh.pop %v2394
    %v2397 = vmul.f32 %v2384, %v2395
    %v2398 = vmul.f32 %v2386, %v2396
    %s2399 = scalar_lea.vmem [#allocation2], 320
    %v2400 = vld [vmem:[%s2399] sm:$0xff]
    %v2401 = vld [vmem:[%s2399 + $0x8] sm:$0xff]
    %v2402 = vld [vmem:[%s2399 + $0x10] sm:$0xff]
    %v2403 = vld [vmem:[%s2399 + $0x18] sm:$0xff]
    %v2404 = vld [vmem:[%s2399 + $0x20] sm:$0xff]
    %v2405 = vld [vmem:[%s2399 + $0x28] sm:$0xff]
    %v2406 = vld [vmem:[%s2399 + $0x30] sm:$0xff]
    %v2407 = vld [vmem:[%s2399 + $0x38] sm:$0xff]
    %v2408 = vpack.c.bf16 %v2397, %v2397
    %v2409 = vpack.c.bf16 %v2398, %v2398
    %2410 = vmatprep.subr.bf16.mxu0 %v1120
    %2411 = vmatpush1.bf16.msra.mxu0 %v1119
    %2412 = vmatprep.subr.bf16.mxu0 %v1128
    %2413 = vmatpush1.bf16.msra.mxu0 %v1127
    %2414 = vmatprep.subr.bf16.mxu0 %v1136
    %2415 = vmatpush1.bf16.msra.mxu0 %v1135
    %2416 = vmatprep.subr.bf16.mxu0 %v1144
    %2417 = vmatpush1.bf16.msra.mxu0 %v1143
    %2418 = vmatprep.subr.bf16.mxu0 %v1152
    %2419 = vmatpush1.bf16.msra.mxu0 %v1151
    %2420 = vmatprep.subr.bf16.mxu0 %v1160
    %2421 = vmatpush1.bf16.msra.mxu0 %v1159
    %2422 = vmatprep.subr.bf16.mxu0 %v1168
    %2423 = vmatpush1.bf16.msra.mxu0 %v1167
    %2424 = vmatprep.subr.bf16.mxu0 %v1176
    %2425 = vmatpush1.bf16.msra.mxu0 %v1175
    %2426 = vmatprep.subr.bf16.mxu0 %v1184
    %2427 = vmatpush1.bf16.msra.mxu0 %v1183
    %2428 = vmatprep.subr.bf16.mxu0 %v1192
    %2429 = vmatpush1.bf16.msra.mxu0 %v1191
    %2430 = vmatprep.subr.bf16.mxu0 %v1200
    %2431 = vmatpush1.bf16.msra.mxu0 %v1199
    %2432 = vmatprep.subr.bf16.mxu0 %v1208
    %2433 = vmatpush1.bf16.msra.mxu0 %v1207
    %2434 = vmatprep.subr.bf16.mxu0 %v1216
    %2435 = vmatpush1.bf16.msra.mxu0 %v1215
    %2436 = vmatprep.subr.bf16.mxu0 %v1224
    %2437 = vmatpush1.bf16.msra.mxu0 %v1223
    %2438 = vmatprep.subr.bf16.mxu0 %v1232
    %2439 = vmatpush1.bf16.msra.mxu0 %v1231
    %2440 = vmatprep.subr.bf16.mxu0 %v1240
    %2441 = vmatpush1.bf16.msra.mxu0 %v1239
    %2442 = vmatprep.mubr.bf16.mxu0 %v2409
    %2443 = vmatmul.mubr.bf16.gmra.mrb[0].mxu0 %v2408
    %v2444 = vpop.f32.mrb[0].mxu0
    %v2445 = vadd.f32 0.0, %v2444
    %v2446 = vpop.f32.mrb[0].mxu0
    %v2447 = vadd.f32 0.0, %v2446
    %v2448 = vpop.f32.mrb[0].mxu0
    %v2449 = vpop.f32.mrb[0].mxu0
    %2450 = vdwg.mxu0
    %2451 = vmatprep.subr.bf16.mxu0 %v1122
    %2452 = vmatpush1.bf16.msra.mxu0 %v1121
    %2453 = vmatprep.subr.bf16.mxu0 %v1130
    %2454 = vmatpush1.bf16.msra.mxu0 %v1129
    %2455 = vmatprep.subr.bf16.mxu0 %v1138
    %2456 = vmatpush1.bf16.msra.mxu0 %v1137
    %2457 = vmatprep.subr.bf16.mxu0 %v1146
    %2458 = vmatpush1.bf16.msra.mxu0 %v1145
    %2459 = vmatprep.subr.bf16.mxu0 %v1154
    %2460 = vmatpush1.bf16.msra.mxu0 %v1153
    %2461 = vmatprep.subr.bf16.mxu0 %v1162
    %2462 = vmatpush1.bf16.msra.mxu0 %v1161
    %2463 = vmatprep.subr.bf16.mxu0 %v1170
    %2464 = vmatpush1.bf16.msra.mxu0 %v1169
    %2465 = vmatprep.subr.bf16.mxu0 %v1178
    %2466 = vmatpush1.bf16.msra.mxu0 %v1177
    %2467 = vmatprep.subr.bf16.mxu0 %v1186
    %2468 = vmatpush1.bf16.msra.mxu0 %v1185
    %2469 = vmatprep.subr.bf16.mxu0 %v1194
    %2470 = vmatpush1.bf16.msra.mxu0 %v1193
    %2471 = vmatprep.subr.bf16.mxu0 %v1202
    %2472 = vmatpush1.bf16.msra.mxu0 %v1201
    %2473 = vmatprep.subr.bf16.mxu0 %v1210
    %2474 = vmatpush1.bf16.msra.mxu0 %v1209
    %2475 = vmatprep.subr.bf16.mxu0 %v1218
    %2476 = vmatpush1.bf16.msra.mxu0 %v1217
    %2477 = vmatprep.subr.bf16.mxu0 %v1226
    %2478 = vmatpush1.bf16.msra.mxu0 %v1225
    %2479 = vmatprep.subr.bf16.mxu0 %v1234
    %2480 = vmatpush1.bf16.msra.mxu0 %v1233
    %2481 = vmatprep.subr.bf16.mxu0 %v1242
    %2482 = vmatpush1.bf16.msra.mxu0 %v1241
    %2483 = vmatprep.mubr.bf16.mxu0 %v2409
    %2484 = vmatmul.mubr.bf16.gmra.mrb[0].mxu0 %v2408
    %v2485 = vpop.f32.mrb[0].mxu0
    %v2486 = vadd.f32 0.0, %v2485
    %v2487 = vpop.f32.mrb[0].mxu0
    %v2488 = vadd.f32 0.0, %v2487
    %v2489 = vpop.f32.mrb[0].mxu0
    %v2490 = vpop.f32.mrb[0].mxu0
    %2491 = vdwg.mxu0
    %2492 = vmatprep.subr.bf16.mxu0 %v1124
    %2493 = vmatpush1.bf16.msra.mxu0 %v1123
    %2494 = vmatprep.subr.bf16.mxu0 %v1132
    %2495 = vmatpush1.bf16.msra.mxu0 %v1131
    %2496 = vmatprep.subr.bf16.mxu0 %v1140
    %2497 = vmatpush1.bf16.msra.mxu0 %v1139
    %2498 = vmatprep.subr.bf16.mxu0 %v1148
    %2499 = vmatpush1.bf16.msra.mxu0 %v1147
    %2500 = vmatprep.subr.bf16.mxu0 %v1156
    %2501 = vmatpush1.bf16.msra.mxu0 %v1155
    %2502 = vmatprep.subr.bf16.mxu0 %v1164
    %2503 = vmatpush1.bf16.msra.mxu0 %v1163
    %2504 = vmatprep.subr.bf16.mxu0 %v1172
    %2505 = vmatpush1.bf16.msra.mxu0 %v1171
    %2506 = vmatprep.subr.bf16.mxu0 %v1180
    %2507 = vmatpush1.bf16.msra.mxu0 %v1179
    %2508 = vmatprep.subr.bf16.mxu0 %v1188
    %2509 = vmatpush1.bf16.msra.mxu0 %v1187
    %2510 = vmatprep.subr.bf16.mxu0 %v1196
    %2511 = vmatpush1.bf16.msra.mxu0 %v1195
    %2512 = vmatprep.subr.bf16.mxu0 %v1204
    %2513 = vmatpush1.bf16.msra.mxu0 %v1203
    %2514 = vmatprep.subr.bf16.mxu0 %v1212
    %2515 = vmatpush1.bf16.msra.mxu0 %v1211
    %2516 = vmatprep.subr.bf16.mxu0 %v1220
    %2517 = vmatpush1.bf16.msra.mxu0 %v1219
    %2518 = vmatprep.subr.bf16.mxu0 %v1228
    %2519 = vmatpush1.bf16.msra.mxu0 %v1227
    %2520 = vmatprep.subr.bf16.mxu0 %v1236
    %2521 = vmatpush1.bf16.msra.mxu0 %v1235
    %2522 = vmatprep.subr.bf16.mxu0 %v1244
    %2523 = vmatpush1.bf16.msra.mxu0 %v1243
    %2524 = vmatprep.mubr.bf16.mxu0 %v2409
    %2525 = vmatmul.mubr.bf16.gmra.mrb[0].mxu0 %v2408
    %v2526 = vpop.f32.mrb[0].mxu0
    %v2527 = vadd.f32 0.0, %v2526
    %v2528 = vpop.f32.mrb[0].mxu0
    %v2529 = vadd.f32 0.0, %v2528
    %v2530 = vpop.f32.mrb[0].mxu0
    %v2531 = vpop.f32.mrb[0].mxu0
    %2532 = vdwg.mxu0
    %2533 = vmatprep.subr.bf16.mxu0 %v1126
    %2534 = vmatpush1.bf16.msra.mxu0 %v1125
    %2535 = vmatprep.subr.bf16.mxu0 %v1134
    %2536 = vmatpush1.bf16.msra.mxu0 %v1133
    %2537 = vmatprep.subr.bf16.mxu0 %v1142
    %2538 = vmatpush1.bf16.msra.mxu0 %v1141
    %2539 = vmatprep.subr.bf16.mxu0 %v1150
    %2540 = vmatpush1.bf16.msra.mxu0 %v1149
    %2541 = vmatprep.subr.bf16.mxu0 %v1158
    %2542 = vmatpush1.bf16.msra.mxu0 %v1157
    %2543 = vmatprep.subr.bf16.mxu0 %v1166
    %2544 = vmatpush1.bf16.msra.mxu0 %v1165
    %2545 = vmatprep.subr.bf16.mxu0 %v1174
    %2546 = vmatpush1.bf16.msra.mxu0 %v1173
    %2547 = vmatprep.subr.bf16.mxu0 %v1182
    %2548 = vmatpush1.bf16.msra.mxu0 %v1181
    %2549 = vmatprep.subr.bf16.mxu0 %v1190
    %2550 = vmatpush1.bf16.msra.mxu0 %v1189
    %2551 = vmatprep.subr.bf16.mxu0 %v1198
    %2552 = vmatpush1.bf16.msra.mxu0 %v1197
    %2553 = vmatprep.subr.bf16.mxu0 %v1206
    %2554 = vmatpush1.bf16.msra.mxu0 %v1205
    %2555 = vmatprep.subr.bf16.mxu0 %v1214
    %2556 = vmatpush1.bf16.msra.mxu0 %v1213
    %2557 = vmatprep.subr.bf16.mxu0 %v1222
    %2558 = vmatpush1.bf16.msra.mxu0 %v1221
    %2559 = vmatprep.subr.bf16.mxu0 %v1230
    %2560 = vmatpush1.bf16.msra.mxu0 %v1229
    %2561 = vmatprep.subr.bf16.mxu0 %v1238
    %2562 = vmatpush1.bf16.msra.mxu0 %v1237
    %2563 = vmatprep.subr.bf16.mxu0 %v1246
    %2564 = vmatpush1.bf16.msra.mxu0 %v1245
    %2565 = vmatprep.mubr.bf16.mxu0 %v2409
    %2566 = vmatmul.mubr.bf16.gmra.mrb[0].mxu0 %v2408
    %v2567 = vpop.f32.mrb[0].mxu0
    %v2568 = vadd.f32 0.0, %v2567
    %v2569 = vpop.f32.mrb[0].mxu0
    %v2570 = vadd.f32 0.0, %v2569
    %v2571 = vpop.f32.mrb[0].mxu0
    %v2572 = vpop.f32.mrb[0].mxu0
    %2573 = vdwg.mxu0
    %v2574 = vadd.f32 %v2400, %v2445
    %v2575 = vadd.f32 %v2401, %v2447
    %v2576 = vadd.f32 %v2402, %v2486
    %v2577 = vadd.f32 %v2403, %v2488
    %v2578 = vadd.f32 %v2404, %v2527
    %v2579 = vadd.f32 %v2405, %v2529
    %v2580 = vadd.f32 %v2406, %v2568
    %v2581 = vadd.f32 %v2407, %v2570
    %v2582 = vxor.u32 %v2574, 2147483648
    %v2583 = vxor.u32 %v2575, 2147483648
    %v2584 = vxor.u32 %v2576, 2147483648
    %v2585 = vxor.u32 %v2577, 2147483648
    %v2586 = vxor.u32 %v2578, 2147483648
    %v2587 = vxor.u32 %v2579, 2147483648
    %v2588 = vmul.f32 %v2582, 1.442695
    %v2589 = vpow.pop %v2588
    %v2590 = vmul.f32 %v2583, 1.442695
    %v2591 = vpow.pop %v2590
    %v2592 = vmul.f32 %v2584, 1.442695
    %v2593 = vpow.pop %v2592
    %v2594 = vmul.f32 %v2585, 1.442695
    %v2595 = vpow.pop %v2594
    %v2596 = vmul.f32 %v2586, 1.442695
    %v2597 = vpow.pop %v2596
    %v2598 = vmul.f32 %v2587, 1.442695
    %v2599 = vpow.pop %v2598
    %v2600 = vadd.f32 %v2589, 1.0
    %v2601 = vadd.f32 %v2591, 1.0
    %v2602 = vadd.f32 %v2593, 1.0
    %v2603 = vadd.f32 %v2595, 1.0
    %v2604 = vadd.f32 %v2597, 1.0
    %v2605 = vadd.f32 %v2599, 1.0
    %v2606 = vrcp.pop %v2600
    %v2607 = vmul.f32 1.0, %v2606
    %v2608 = vrcp.pop %v2601
    %v2609 = vmul.f32 1.0, %v2608
    %v2610 = vrcp.pop %v2602
    %v2611 = vmul.f32 1.0, %v2610
    %v2612 = vrcp.pop %v2603
    %v2613 = vmul.f32 1.0, %v2612
    %v2614 = vrcp.pop %v2604
    %v2615 = vmul.f32 1.0, %v2614
    %v2616 = vrcp.pop %v2605
    %v2617 = vmul.f32 1.0, %v2616
    %v2618 = vtanh.pop %v2580
    %v2619 = vtanh.pop %v2581
    %v2620 = vmul.f32 %v2611, %v2393
    %v2621 = vmul.f32 %v2613, %v2394
    %v2622 = vmul.f32 %v2607, %v2618
    %v2623 = vmul.f32 %v2609, %v2619
    %v2624 = vadd.f32 %v2620, %v2622
    %v2625 = vadd.f32 %v2621, %v2623
    %v2626 = vtanh.pop %v2624
    %v2627 = vtanh.pop %v2625
    %v2628 = vmul.f32 %v2615, %v2626
    %v2629 = vmul.f32 %v2617, %v2627
    %s2630 = scalar_lea.vmem [#allocation2], 384
    %v2631 = vld [vmem:[%s2630] sm:$0xff]
    %v2632 = vld [vmem:[%s2630 + $0x8] sm:$0xff]
    %v2633 = vld [vmem:[%s2630 + $0x10] sm:$0xff]
    %v2634 = vld [vmem:[%s2630 + $0x18] sm:$0xff]
    %v2635 = vld [vmem:[%s2630 + $0x20] sm:$0xff]
    %v2636 = vld [vmem:[%s2630 + $0x28] sm:$0xff]
    %v2637 = vld [vmem:[%s2630 + $0x30] sm:$0xff]
    %v2638 = vld [vmem:[%s2630 + $0x38] sm:$0xff]
    %v2639 = vpack.c.bf16 %v2628, %v2628
    %v2640 = vpack.c.bf16 %v2629, %v2629
    %2641 = vmatprep.subr.bf16.mxu0 %v1120
    %2642 = vmatpush1.bf16.msra.mxu0 %v1119
    %2643 = vmatprep.subr.bf16.mxu0 %v1128
    %2644 = vmatpush1.bf16.msra.mxu0 %v1127
    %2645 = vmatprep.subr.bf16.mxu0 %v1136
    %2646 = vmatpush1.bf16.msra.mxu0 %v1135
    %2647 = vmatprep.subr.bf16.mxu0 %v1144
    %2648 = vmatpush1.bf16.msra.mxu0 %v1143
    %2649 = vmatprep.subr.bf16.mxu0 %v1152
    %2650 = vmatpush1.bf16.msra.mxu0 %v1151
    %2651 = vmatprep.subr.bf16.mxu0 %v1160
    %2652 = vmatpush1.bf16.msra.mxu0 %v1159
    %2653 = vmatprep.subr.bf16.mxu0 %v1168
    %2654 = vmatpush1.bf16.msra.mxu0 %v1167
    %2655 = vmatprep.subr.bf16.mxu0 %v1176
    %2656 = vmatpush1.bf16.msra.mxu0 %v1175
    %2657 = vmatprep.subr.bf16.mxu0 %v1184
    %2658 = vmatpush1.bf16.msra.mxu0 %v1183
    %2659 = vmatprep.subr.bf16.mxu0 %v1192
    %2660 = vmatpush1.bf16.msra.mxu0 %v1191
    %2661 = vmatprep.subr.bf16.mxu0 %v1200
    %2662 = vmatpush1.bf16.msra.mxu0 %v1199
    %2663 = vmatprep.subr.bf16.mxu0 %v1208
    %2664 = vmatpush1.bf16.msra.mxu0 %v1207
    %2665 = vmatprep.subr.bf16.mxu0 %v1216
    %2666 = vmatpush1.bf16.msra.mxu0 %v1215
    %2667 = vmatprep.subr.bf16.mxu0 %v1224
    %2668 = vmatpush1.bf16.msra.mxu0 %v1223
    %2669 = vmatprep.subr.bf16.mxu0 %v1232
    %2670 = vmatpush1.bf16.msra.mxu0 %v1231
    %2671 = vmatprep.subr.bf16.mxu0 %v1240
    %2672 = vmatpush1.bf16.msra.mxu0 %v1239
    %2673 = vmatprep.mubr.bf16.mxu0 %v2640
    %2674 = vmatmul.mubr.bf16.gmra.mrb[0].mxu0 %v2639
    %v2675 = vpop.f32.mrb[0].mxu0
    %v2676 = vadd.f32 0.0, %v2675
    %v2677 = vpop.f32.mrb[0].mxu0
    %v2678 = vadd.f32 0.0, %v2677
    %v2679 = vpop.f32.mrb[0].mxu0
    %v2680 = vpop.f32.mrb[0].mxu0
    %2681 = vdwg.mxu0
    %2682 = vmatprep.subr.bf16.mxu0 %v1122
    %2683 = vmatpush1.bf16.msra.mxu0 %v1121
    %2684 = vmatprep.subr.bf16.mxu0 %v1130
    %2685 = vmatpush1.bf16.msra.mxu0 %v1129
    %2686 = vmatprep.subr.bf16.mxu0 %v1138
    %2687 = vmatpush1.bf16.msra.mxu0 %v1137
    %2688 = vmatprep.subr.bf16.mxu0 %v1146
    %2689 = vmatpush1.bf16.msra.mxu0 %v1145
    %2690 = vmatprep.subr.bf16.mxu0 %v1154
    %2691 = vmatpush1.bf16.msra.mxu0 %v1153
    %2692 = vmatprep.subr.bf16.mxu0 %v1162
    %2693 = vmatpush1.bf16.msra.mxu0 %v1161
    %2694 = vmatprep.subr.bf16.mxu0 %v1170
    %2695 = vmatpush1.bf16.msra.mxu0 %v1169
    %2696 = vmatprep.subr.bf16.mxu0 %v1178
    %2697 = vmatpush1.bf16.msra.mxu0 %v1177
    %2698 = vmatprep.subr.bf16.mxu0 %v1186
    %2699 = vmatpush1.bf16.msra.mxu0 %v1185
    %2700 = vmatprep.subr.bf16.mxu0 %v1194
    %2701 = vmatpush1.bf16.msra.mxu0 %v1193
    %2702 = vmatprep.subr.bf16.mxu0 %v1202
    %2703 = vmatpush1.bf16.msra.mxu0 %v1201
    %2704 = vmatprep.subr.bf16.mxu0 %v1210
    %2705 = vmatpush1.bf16.msra.mxu0 %v1209
    %2706 = vmatprep.subr.bf16.mxu0 %v1218
    %2707 = vmatpush1.bf16.msra.mxu0 %v1217
    %2708 = vmatprep.subr.bf16.mxu0 %v1226
    %2709 = vmatpush1.bf16.msra.mxu0 %v1225
    %2710 = vmatprep.subr.bf16.mxu0 %v1234
    %2711 = vmatpush1.bf16.msra.mxu0 %v1233
    %2712 = vmatprep.subr.bf16.mxu0 %v1242
    %2713 = vmatpush1.bf16.msra.mxu0 %v1241
    %2714 = vmatprep.mubr.bf16.mxu0 %v2640
    %2715 = vmatmul.mubr.bf16.gmra.mrb[0].mxu0 %v2639
    %v2716 = vpop.f32.mrb[0].mxu0
    %v2717 = vadd.f32 0.0, %v2716
    %v2718 = vpop.f32.mrb[0].mxu0
    %v2719 = vadd.f32 0.0, %v2718
    %v2720 = vpop.f32.mrb[0].mxu0
    %v2721 = vpop.f32.mrb[0].mxu0
    %2722 = vdwg.mxu0
    %2723 = vmatprep.subr.bf16.mxu0 %v1124
    %2724 = vmatpush1.bf16.msra.mxu0 %v1123
    %2725 = vmatprep.subr.bf16.mxu0 %v1132
    %2726 = vmatpush1.bf16.msra.mxu0 %v1131
    %2727 = vmatprep.subr.bf16.mxu0 %v1140
    %2728 = vmatpush1.bf16.msra.mxu0 %v1139
    %2729 = vmatprep.subr.bf16.mxu0 %v1148
    %2730 = vmatpush1.bf16.msra.mxu0 %v1147
    %2731 = vmatprep.subr.bf16.mxu0 %v1156
    %2732 = vmatpush1.bf16.msra.mxu0 %v1155
    %2733 = vmatprep.subr.bf16.mxu0 %v1164
    %2734 = vmatpush1.bf16.msra.mxu0 %v1163
    %2735 = vmatprep.subr.bf16.mxu0 %v1172
    %2736 = vmatpush1.bf16.msra.mxu0 %v1171
    %2737 = vmatprep.subr.bf16.mxu0 %v1180
    %2738 = vmatpush1.bf16.msra.mxu0 %v1179
    %2739 = vmatprep.subr.bf16.mxu0 %v1188
    %2740 = vmatpush1.bf16.msra.mxu0 %v1187
    %2741 = vmatprep.subr.bf16.mxu0 %v1196
    %2742 = vmatpush1.bf16.msra.mxu0 %v1195
    %2743 = vmatprep.subr.bf16.mxu0 %v1204
    %2744 = vmatpush1.bf16.msra.mxu0 %v1203
    %2745 = vmatprep.subr.bf16.mxu0 %v1212
    %2746 = vmatpush1.bf16.msra.mxu0 %v1211
    %2747 = vmatprep.subr.bf16.mxu0 %v1220
    %2748 = vmatpush1.bf16.msra.mxu0 %v1219
    %2749 = vmatprep.subr.bf16.mxu0 %v1228
    %2750 = vmatpush1.bf16.msra.mxu0 %v1227
    %2751 = vmatprep.subr.bf16.mxu0 %v1236
    %2752 = vmatpush1.bf16.msra.mxu0 %v1235
    %2753 = vmatprep.subr.bf16.mxu0 %v1244
    %2754 = vmatpush1.bf16.msra.mxu0 %v1243
    %2755 = vmatprep.mubr.bf16.mxu0 %v2640
    %2756 = vmatmul.mubr.bf16.gmra.mrb[0].mxu0 %v2639
    %v2757 = vpop.f32.mrb[0].mxu0
    %v2758 = vadd.f32 0.0, %v2757
    %v2759 = vpop.f32.mrb[0].mxu0
    %v2760 = vadd.f32 0.0, %v2759
    %v2761 = vpop.f32.mrb[0].mxu0
    %v2762 = vpop.f32.mrb[0].mxu0
    %2763 = vdwg.mxu0
    %2764 = vmatprep.subr.bf16.mxu0 %v1126
    %2765 = vmatpush1.bf16.msra.mxu0 %v1125
    %2766 = vmatprep.subr.bf16.mxu0 %v1134
    %2767 = vmatpush1.bf16.msra.mxu0 %v1133
    %2768 = vmatprep.subr.bf16.mxu0 %v1142
    %2769 = vmatpush1.bf16.msra.mxu0 %v1141
    %2770 = vmatprep.subr.bf16.mxu0 %v1150
    %2771 = vmatpush1.bf16.msra.mxu0 %v1149
    %2772 = vmatprep.subr.bf16.mxu0 %v1158
    %2773 = vmatpush1.bf16.msra.mxu0 %v1157
    %2774 = vmatprep.subr.bf16.mxu0 %v1166
    %2775 = vmatpush1.bf16.msra.mxu0 %v1165
    %2776 = vmatprep.subr.bf16.mxu0 %v1174
    %2777 = vmatpush1.bf16.msra.mxu0 %v1173
    %2778 = vmatprep.subr.bf16.mxu0 %v1182
    %2779 = vmatpush1.bf16.msra.mxu0 %v1181
    %2780 = vmatprep.subr.bf16.mxu0 %v1190
    %2781 = vmatpush1.bf16.msra.mxu0 %v1189
    %2782 = vmatprep.subr.bf16.mxu0 %v1198
    %2783 = vmatpush1.bf16.msra.mxu0 %v1197
    %2784 = vmatprep.subr.bf16.mxu0 %v1206
    %2785 = vmatpush1.bf16.msra.mxu0 %v1205
    %2786 = vmatprep.subr.bf16.mxu0 %v1214
    %2787 = vmatpush1.bf16.msra.mxu0 %v1213
    %2788 = vmatprep.subr.bf16.mxu0 %v1222
    %2789 = vmatpush1.bf16.msra.mxu0 %v1221
    %2790 = vmatprep.subr.bf16.mxu0 %v1230
    %2791 = vmatpush1.bf16.msra.mxu0 %v1229
    %2792 = vmatprep.subr.bf16.mxu0 %v1238
    %2793 = vmatpush1.bf16.msra.mxu0 %v1237
    %2794 = vmatprep.subr.bf16.mxu0 %v1246
    %2795 = vmatpush1.bf16.msra.mxu0 %v1245
    %2796 = vmatprep.mubr.bf16.mxu0 %v2640
    %2797 = vmatmul.mubr.bf16.gmra.mrb[0].mxu0 %v2639
    %v2798 = vpop.f32.mrb[0].mxu0
    %v2799 = vadd.f32 0.0, %v2798
    %v2800 = vpop.f32.mrb[0].mxu0
    %v2801 = vadd.f32 0.0, %v2800
    %v2802 = vpop.f32.mrb[0].mxu0
    %v2803 = vpop.f32.mrb[0].mxu0
    %2804 = vdwg.mxu0
    %v2805 = vadd.f32 %v2631, %v2676
    %v2806 = vadd.f32 %v2632, %v2678
    %v2807 = vadd.f32 %v2633, %v2717
    %v2808 = vadd.f32 %v2634, %v2719
    %v2809 = vadd.f32 %v2635, %v2758
    %v2810 = vadd.f32 %v2636, %v2760
    %v2811 = vadd.f32 %v2637, %v2799
    %v2812 = vadd.f32 %v2638, %v2801
    %v2813 = vxor.u32 %v2805, 2147483648
    %v2814 = vxor.u32 %v2806, 2147483648
    %v2815 = vxor.u32 %v2807, 2147483648
    %v2816 = vxor.u32 %v2808, 2147483648
    %v2817 = vxor.u32 %v2809, 2147483648
    %v2818 = vxor.u32 %v2810, 2147483648
    %v2819 = vmul.f32 %v2813, 1.442695
    %v2820 = vpow.pop %v2819
    %v2821 = vmul.f32 %v2814, 1.442695
    %v2822 = vpow.pop %v2821
    %v2823 = vmul.f32 %v2815, 1.442695
    %v2824 = vpow.pop %v2823
    %v2825 = vmul.f32 %v2816, 1.442695
    %v2826 = vpow.pop %v2825
    %v2827 = vmul.f32 %v2817, 1.442695
    %v2828 = vpow.pop %v2827
    %v2829 = vmul.f32 %v2818, 1.442695
    %v2830 = vpow.pop %v2829
    %v2831 = vadd.f32 %v2820, 1.0
    %v2832 = vadd.f32 %v2822, 1.0
    %v2833 = vadd.f32 %v2824, 1.0
    %v2834 = vadd.f32 %v2826, 1.0
    %v2835 = vadd.f32 %v2828, 1.0
    %v2836 = vadd.f32 %v2830, 1.0
    %v2837 = vrcp.pop %v2831
    %v2838 = vmul.f32 1.0, %v2837
    %v2839 = vrcp.pop %v2832
    %v2840 = vmul.f32 1.0, %v2839
    %v2841 = vrcp.pop %v2833
    %v2842 = vmul.f32 1.0, %v2841
    %v2843 = vrcp.pop %v2834
    %v2844 = vmul.f32 1.0, %v2843
    %v2845 = vrcp.pop %v2835
    %v2846 = vmul.f32 1.0, %v2845
    %v2847 = vrcp.pop %v2836
    %v2848 = vmul.f32 1.0, %v2847
    %v2849 = vtanh.pop %v2811
    %v2850 = vtanh.pop %v2812
    %v2851 = vmul.f32 %v2842, %v2624
    %v2852 = vmul.f32 %v2844, %v2625
    %v2853 = vmul.f32 %v2838, %v2849
    %v2854 = vmul.f32 %v2840, %v2850
    %v2855 = vadd.f32 %v2851, %v2853
    %v2856 = vadd.f32 %v2852, %v2854
    %v2857 = vtanh.pop %v2855
    %v2858 = vtanh.pop %v2856
    %v2859 = vmul.f32 %v2846, %v2857
    %v2860 = vmul.f32 %v2848, %v2858
    %s2861 = scalar_lea.vmem [#allocation2], 448
    %v2862 = vld [vmem:[%s2861] sm:$0xff]
    %v2863 = vld [vmem:[%s2861 + $0x8] sm:$0xff]
    %v2864 = vld [vmem:[%s2861 + $0x10] sm:$0xff]
    %v2865 = vld [vmem:[%s2861 + $0x18] sm:$0xff]
    %v2866 = vld [vmem:[%s2861 + $0x20] sm:$0xff]
    %v2867 = vld [vmem:[%s2861 + $0x28] sm:$0xff]
    %v2868 = vld [vmem:[%s2861 + $0x30] sm:$0xff]
    %v2869 = vld [vmem:[%s2861 + $0x38] sm:$0xff]
    %v2870 = vpack.c.bf16 %v2859, %v2859
    %v2871 = vpack.c.bf16 %v2860, %v2860
    %2872 = vmatprep.subr.bf16.mxu0 %v1120
    %2873 = vmatpush1.bf16.msra.mxu0 %v1119
    %2874 = vmatprep.subr.bf16.mxu0 %v1128
    %2875 = vmatpush1.bf16.msra.mxu0 %v1127
    %2876 = vmatprep.subr.bf16.mxu0 %v1136
    %2877 = vmatpush1.bf16.msra.mxu0 %v1135
    %2878 = vmatprep.subr.bf16.mxu0 %v1144
    %2879 = vmatpush1.bf16.msra.mxu0 %v1143
    %2880 = vmatprep.subr.bf16.mxu0 %v1152
    %2881 = vmatpush1.bf16.msra.mxu0 %v1151
    %2882 = vmatprep.subr.bf16.mxu0 %v1160
    %2883 = vmatpush1.bf16.msra.mxu0 %v1159
    %2884 = vmatprep.subr.bf16.mxu0 %v1168
    %2885 = vmatpush1.bf16.msra.mxu0 %v1167
    %2886 = vmatprep.subr.bf16.mxu0 %v1176
    %2887 = vmatpush1.bf16.msra.mxu0 %v1175
    %2888 = vmatprep.subr.bf16.mxu0 %v1184
    %2889 = vmatpush1.bf16.msra.mxu0 %v1183
    %2890 = vmatprep.subr.bf16.mxu0 %v1192
    %2891 = vmatpush1.bf16.msra.mxu0 %v1191
    %2892 = vmatprep.subr.bf16.mxu0 %v1200
    %2893 = vmatpush1.bf16.msra.mxu0 %v1199
    %2894 = vmatprep.subr.bf16.mxu0 %v1208
    %2895 = vmatpush1.bf16.msra.mxu0 %v1207
    %2896 = vmatprep.subr.bf16.mxu0 %v1216
    %2897 = vmatpush1.bf16.msra.mxu0 %v1215
    %2898 = vmatprep.subr.bf16.mxu0 %v1224
    %2899 = vmatpush1.bf16.msra.mxu0 %v1223
    %2900 = vmatprep.subr.bf16.mxu0 %v1232
    %2901 = vmatpush1.bf16.msra.mxu0 %v1231
    %2902 = vmatprep.subr.bf16.mxu0 %v1240
    %2903 = vmatpush1.bf16.msra.mxu0 %v1239
    %2904 = vmatprep.mubr.bf16.mxu0 %v2871
    %2905 = vmatmul.mubr.bf16.gmra.mrb[0].mxu0 %v2870
    %v2906 = vpop.f32.mrb[0].mxu0
    %v2907 = vadd.f32 0.0, %v2906
    %v2908 = vpop.f32.mrb[0].mxu0
    %v2909 = vadd.f32 0.0, %v2908
    %v2910 = vpop.f32.mrb[0].mxu0
    %v2911 = vpop.f32.mrb[0].mxu0
    %2912 = vdwg.mxu0
    %2913 = vmatprep.subr.bf16.mxu0 %v1122
    %2914 = vmatpush1.bf16.msra.mxu0 %v1121
    %2915 = vmatprep.subr.bf16.mxu0 %v1130
    %2916 = vmatpush1.bf16.msra.mxu0 %v1129
    %2917 = vmatprep.subr.bf16.mxu0 %v1138
    %2918 = vmatpush1.bf16.msra.mxu0 %v1137
    %2919 = vmatprep.subr.bf16.mxu0 %v1146
    %2920 = vmatpush1.bf16.msra.mxu0 %v1145
    %2921 = vmatprep.subr.bf16.mxu0 %v1154
    %2922 = vmatpush1.bf16.msra.mxu0 %v1153
    %2923 = vmatprep.subr.bf16.mxu0 %v1162
    %2924 = vmatpush1.bf16.msra.mxu0 %v1161
    %2925 = vmatprep.subr.bf16.mxu0 %v1170
    %2926 = vmatpush1.bf16.msra.mxu0 %v1169
    %2927 = vmatprep.subr.bf16.mxu0 %v1178
    %2928 = vmatpush1.bf16.msra.mxu0 %v1177
    %2929 = vmatprep.subr.bf16.mxu0 %v1186
    %2930 = vmatpush1.bf16.msra.mxu0 %v1185
    %2931 = vmatprep.subr.bf16.mxu0 %v1194
    %2932 = vmatpush1.bf16.msra.mxu0 %v1193
    %2933 = vmatprep.subr.bf16.mxu0 %v1202
    %2934 = vmatpush1.bf16.msra.mxu0 %v1201
    %2935 = vmatprep.subr.bf16.mxu0 %v1210
    %2936 = vmatpush1.bf16.msra.mxu0 %v1209
    %2937 = vmatprep.subr.bf16.mxu0 %v1218
    %2938 = vmatpush1.bf16.msra.mxu0 %v1217
    %2939 = vmatprep.subr.bf16.mxu0 %v1226
    %2940 = vmatpush1.bf16.msra.mxu0 %v1225
    %2941 = vmatprep.subr.bf16.mxu0 %v1234
    %2942 = vmatpush1.bf16.msra.mxu0 %v1233
    %2943 = vmatprep.subr.bf16.mxu0 %v1242
    %2944 = vmatpush1.bf16.msra.mxu0 %v1241
    %2945 = vmatprep.mubr.bf16.mxu0 %v2871
    %2946 = vmatmul.mubr.bf16.gmra.mrb[0].mxu0 %v2870
    %v2947 = vpop.f32.mrb[0].mxu0
    %v2948 = vadd.f32 0.0, %v2947
    %v2949 = vpop.f32.mrb[0].mxu0
    %v2950 = vadd.f32 0.0, %v2949
    %v2951 = vpop.f32.mrb[0].mxu0
    %v2952 = vpop.f32.mrb[0].mxu0
    %2953 = vdwg.mxu0
    %2954 = vmatprep.subr.bf16.mxu0 %v1124
    %2955 = vmatpush1.bf16.msra.mxu0 %v1123
    %2956 = vmatprep.subr.bf16.mxu0 %v1132
    %2957 = vmatpush1.bf16.msra.mxu0 %v1131
    %2958 = vmatprep.subr.bf16.mxu0 %v1140
    %2959 = vmatpush1.bf16.msra.mxu0 %v1139
    %2960 = vmatprep.subr.bf16.mxu0 %v1148
    %2961 = vmatpush1.bf16.msra.mxu0 %v1147
    %2962 = vmatprep.subr.bf16.mxu0 %v1156
    %2963 = vmatpush1.bf16.msra.mxu0 %v1155
    %2964 = vmatprep.subr.bf16.mxu0 %v1164
    %2965 = vmatpush1.bf16.msra.mxu0 %v1163
    %2966 = vmatprep.subr.bf16.mxu0 %v1172
    %2967 = vmatpush1.bf16.msra.mxu0 %v1171
    %2968 = vmatprep.subr.bf16.mxu0 %v1180
    %2969 = vmatpush1.bf16.msra.mxu0 %v1179
    %2970 = vmatprep.subr.bf16.mxu0 %v1188
    %2971 = vmatpush1.bf16.msra.mxu0 %v1187
    %2972 = vmatprep.subr.bf16.mxu0 %v1196
    %2973 = vmatpush1.bf16.msra.mxu0 %v1195
    %2974 = vmatprep.subr.bf16.mxu0 %v1204
    %2975 = vmatpush1.bf16.msra.mxu0 %v1203
    %2976 = vmatprep.subr.bf16.mxu0 %v1212
    %2977 = vmatpush1.bf16.msra.mxu0 %v1211
    %2978 = vmatprep.subr.bf16.mxu0 %v1220
    %2979 = vmatpush1.bf16.msra.mxu0 %v1219
    %2980 = vmatprep.subr.bf16.mxu0 %v1228
    %2981 = vmatpush1.bf16.msra.mxu0 %v1227
    %2982 = vmatprep.subr.bf16.mxu0 %v1236
    %2983 = vmatpush1.bf16.msra.mxu0 %v1235
    %2984 = vmatprep.subr.bf16.mxu0 %v1244
    %2985 = vmatpush1.bf16.msra.mxu0 %v1243
    %2986 = vmatprep.mubr.bf16.mxu0 %v2871
    %2987 = vmatmul.mubr.bf16.gmra.mrb[0].mxu0 %v2870
    %v2988 = vpop.f32.mrb[0].mxu0
    %v2989 = vadd.f32 0.0, %v2988
    %v2990 = vpop.f32.mrb[0].mxu0
    %v2991 = vadd.f32 0.0, %v2990
    %v2992 = vpop.f32.mrb[0].mxu0
    %v2993 = vpop.f32.mrb[0].mxu0
    %2994 = vdwg.mxu0
    %2995 = vmatprep.subr.bf16.mxu0 %v1126
    %2996 = vmatpush1.bf16.msra.mxu0 %v1125
    %2997 = vmatprep.subr.bf16.mxu0 %v1134
    %2998 = vmatpush1.bf16.msra.mxu0 %v1133
    %2999 = vmatprep.subr.bf16.mxu0 %v1142
    %3000 = vmatpush1.bf16.msra.mxu0 %v1141
    %3001 = vmatprep.subr.bf16.mxu0 %v1150
    %3002 = vmatpush1.bf16.msra.mxu0 %v1149
    %3003 = vmatprep.subr.bf16.mxu0 %v1158
    %3004 = vmatpush1.bf16.msra.mxu0 %v1157
    %3005 = vmatprep.subr.bf16.mxu0 %v1166
    %3006 = vmatpush1.bf16.msra.mxu0 %v1165
    %3007 = vmatprep.subr.bf16.mxu0 %v1174
    %3008 = vmatpush1.bf16.msra.mxu0 %v1173
    %3009 = vmatprep.subr.bf16.mxu0 %v1182
    %3010 = vmatpush1.bf16.msra.mxu0 %v1181
    %3011 = vmatprep.subr.bf16.mxu0 %v1190
    %3012 = vmatpush1.bf16.msra.mxu0 %v1189
    %3013 = vmatprep.subr.bf16.mxu0 %v1198
    %3014 = vmatpush1.bf16.msra.mxu0 %v1197
    %3015 = vmatprep.subr.bf16.mxu0 %v1206
    %3016 = vmatpush1.bf16.msra.mxu0 %v1205
    %3017 = vmatprep.subr.bf16.mxu0 %v1214
    %3018 = vmatpush1.bf16.msra.mxu0 %v1213
    %3019 = vmatprep.subr.bf16.mxu0 %v1222
    %3020 = vmatpush1.bf16.msra.mxu0 %v1221
    %3021 = vmatprep.subr.bf16.mxu0 %v1230
    %3022 = vmatpush1.bf16.msra.mxu0 %v1229
    %3023 = vmatprep.subr.bf16.mxu0 %v1238
    %3024 = vmatpush1.bf16.msra.mxu0 %v1237
    %3025 = vmatprep.subr.bf16.mxu0 %v1246
    %3026 = vmatpush1.bf16.msra.mxu0 %v1245
    %3027 = vmatprep.mubr.bf16.mxu0 %v2871
    %3028 = vmatmul.mubr.bf16.gmra.mrb[0].mxu0 %v2870
    %v3029 = vpop.f32.mrb[0].mxu0
    %v3030 = vadd.f32 0.0, %v3029
    %v3031 = vpop.f32.mrb[0].mxu0
    %v3032 = vadd.f32 0.0, %v3031
    %v3033 = vpop.f32.mrb[0].mxu0
    %v3034 = vpop.f32.mrb[0].mxu0
    %3035 = vdwg.mxu0
    %v3036 = vadd.f32 %v2862, %v2907
    %v3037 = vadd.f32 %v2863, %v2909
    %v3038 = vadd.f32 %v2864, %v2948
    %v3039 = vadd.f32 %v2865, %v2950
    %v3040 = vadd.f32 %v2866, %v2989
    %v3041 = vadd.f32 %v2867, %v2991
    %v3042 = vadd.f32 %v2868, %v3030
    %v3043 = vadd.f32 %v2869, %v3032
    %v3044 = vxor.u32 %v3036, 2147483648
    %v3045 = vxor.u32 %v3037, 2147483648
    %v3046 = vxor.u32 %v3038, 2147483648
    %v3047 = vxor.u32 %v3039, 2147483648
    %v3048 = vxor.u32 %v3040, 2147483648
    %v3049 = vxor.u32 %v3041, 2147483648
    %v3050 = vmul.f32 %v3044, 1.442695
    %v3051 = vpow.pop %v3050
    %v3052 = vmul.f32 %v3045, 1.442695
    %v3053 = vpow.pop %v3052
    %v3054 = vmul.f32 %v3046, 1.442695
    %v3055 = vpow.pop %v3054
    %v3056 = vmul.f32 %v3047, 1.442695
    %v3057 = vpow.pop %v3056
    %v3058 = vmul.f32 %v3048, 1.442695
    %v3059 = vpow.pop %v3058
    %v3060 = vmul.f32 %v3049, 1.442695
    %v3061 = vpow.pop %v3060
    %v3062 = vadd.f32 %v3051, 1.0
    %v3063 = vadd.f32 %v3053, 1.0
    %v3064 = vadd.f32 %v3055, 1.0
    %v3065 = vadd.f32 %v3057, 1.0
    %v3066 = vadd.f32 %v3059, 1.0
    %v3067 = vadd.f32 %v3061, 1.0
    %v3068 = vrcp.pop %v3062
    %v3069 = vmul.f32 1.0, %v3068
    %v3070 = vrcp.pop %v3063
    %v3071 = vmul.f32 1.0, %v3070
    %v3072 = vrcp.pop %v3064
    %v3073 = vmul.f32 1.0, %v3072
    %v3074 = vrcp.pop %v3065
    %v3075 = vmul.f32 1.0, %v3074
    %v3076 = vrcp.pop %v3066
    %v3077 = vmul.f32 1.0, %v3076
    %v3078 = vrcp.pop %v3067
    %v3079 = vmul.f32 1.0, %v3078
    %v3080 = vtanh.pop %v3042
    %v3081 = vtanh.pop %v3043
    %v3082 = vmul.f32 %v3073, %v2855
    %v3083 = vmul.f32 %v3075, %v2856
    %v3084 = vmul.f32 %v3069, %v3080
    %v3085 = vmul.f32 %v3071, %v3081
    %v3086 = vadd.f32 %v3082, %v3084
    %v3087 = vadd.f32 %v3083, %v3085
    %v3088 = vtanh.pop %v3086
    %v3089 = vtanh.pop %v3087
    %v3090 = vmul.f32 %v3077, %v3088
    %v3091 = vmul.f32 %v3079, %v3089
    %v3092 = vld [vmem:[%s3] sm:$0xff]
    %v3093 = vld [vmem:[%s3 + $0x8] sm:$0xff]
    %v3094 = vld [vmem:[%s3 + $0x10] sm:$0xff]
    %v3095 = vld [vmem:[%s3 + $0x18] sm:$0xff]
    %v3096 = vld [vmem:[%s3 + $0x20] sm:$0xff]
    %v3097 = vld [vmem:[%s3 + $0x28] sm:$0xff]
    %v3098 = vld [vmem:[%s3 + $0x30] sm:$0xff]
    %v3099 = vld [vmem:[%s3 + $0x38] sm:$0xff]
    %v3100 = vld [vmem:[%s3 + $0x40] sm:$0xff]
    %v3101 = vld [vmem:[%s3 + $0x48] sm:$0xff]
    %v3102 = vld [vmem:[%s3 + $0x50] sm:$0xff]
    %v3103 = vld [vmem:[%s3 + $0x58] sm:$0xff]
    %v3104 = vld [vmem:[%s3 + $0x60] sm:$0xff]
    %v3105 = vld [vmem:[%s3 + $0x68] sm:$0xff]
    %v3106 = vld [vmem:[%s3 + $0x70] sm:$0xff]
    %v3107 = vld [vmem:[%s3 + $0x78] sm:$0xff]
    %v3108 = vld [vmem:[%s3 + $0x80] sm:$0xff]
    %v3109 = vld [vmem:[%s3 + $0x88] sm:$0xff]
    %v3110 = vld [vmem:[%s3 + $0x90] sm:$0xff]
    %v3111 = vld [vmem:[%s3 + $0x98] sm:$0xff]
    %v3112 = vld [vmem:[%s3 + $0xa0] sm:$0xff]
    %v3113 = vld [vmem:[%s3 + $0xa8] sm:$0xff]
    %v3114 = vld [vmem:[%s3 + $0xb0] sm:$0xff]
    %v3115 = vld [vmem:[%s3 + $0xb8] sm:$0xff]
    %v3116 = vld [vmem:[%s3 + $0xc0] sm:$0xff]
    %v3117 = vld [vmem:[%s3 + $0xc8] sm:$0xff]
    %v3118 = vld [vmem:[%s3 + $0xd0] sm:$0xff]
    %v3119 = vld [vmem:[%s3 + $0xd8] sm:$0xff]
    %v3120 = vld [vmem:[%s3 + $0xe0] sm:$0xff]
    %v3121 = vld [vmem:[%s3 + $0xe8] sm:$0xff]
    %v3122 = vld [vmem:[%s3 + $0xf0] sm:$0xff]
    %v3123 = vld [vmem:[%s3 + $0xf8] sm:$0xff]
    %v3124 = vld [vmem:[%s4] sm:$0x1]
    %v3126 = vlaneseq
    %v3127 = vshrl.u32 %v3126, 7
    %v3128 = vsub.s32 0, %v3127
    %v3129 = vrot.slane %v3124, %v3128
    %3131 = vmatprep.subr.mxu0 0.0
    %3132 = vmatpush1.msra.mxu0 %v3092
    %3133 = vmatprep.subr.mxu0 0.0
    %3134 = vmatpush1.msra.mxu0 %v3093
    %3135 = vmatprep.subr.mxu0 0.0
    %3136 = vmatpush1.msra.mxu0 %v3094
    %3137 = vmatprep.subr.mxu0 0.0
    %3138 = vmatpush1.msra.mxu0 %v3095
    %3139 = vmatprep.subr.mxu0 0.0
    %3140 = vmatpush1.msra.mxu0 %v3096
    %3141 = vmatprep.subr.mxu0 0.0
    %3142 = vmatpush1.msra.mxu0 %v3097
    %3143 = vmatprep.subr.mxu0 0.0
    %3144 = vmatpush1.msra.mxu0 %v3098
    %3145 = vmatprep.subr.mxu0 0.0
    %3146 = vmatpush1.msra.mxu0 %v3099
    %3147 = vmatprep.subr.mxu0 0.0
    %3148 = vmatpush1.msra.mxu0 %v3100
    %3149 = vmatprep.subr.mxu0 0.0
    %3150 = vmatpush1.msra.mxu0 %v3101
    %3151 = vmatprep.subr.mxu0 0.0
    %3152 = vmatpush1.msra.mxu0 %v3102
    %3153 = vmatprep.subr.mxu0 0.0
    %3154 = vmatpush1.msra.mxu0 %v3103
    %3155 = vmatprep.subr.mxu0 0.0
    %3156 = vmatpush1.msra.mxu0 %v3104
    %3157 = vmatprep.subr.mxu0 0.0
    %3158 = vmatpush1.msra.mxu0 %v3105
    %3159 = vmatprep.subr.mxu0 0.0
    %3160 = vmatpush1.msra.mxu0 %v3106
    %3161 = vmatprep.subr.mxu0 0.0
    %3162 = vmatpush1.msra.mxu0 %v3107
    %3163 = vmatprep.subr.mxu0 0.0
    %3164 = vmatpush1.msra.mxu0 %v3108
    %3165 = vmatprep.subr.mxu0 0.0
    %3166 = vmatpush1.msra.mxu0 %v3109
    %3167 = vmatprep.subr.mxu0 0.0
    %3168 = vmatpush1.msra.mxu0 %v3110
    %3169 = vmatprep.subr.mxu0 0.0
    %3170 = vmatpush1.msra.mxu0 %v3111
    %3171 = vmatprep.subr.mxu0 0.0
    %3172 = vmatpush1.msra.mxu0 %v3112
    %3173 = vmatprep.subr.mxu0 0.0
    %3174 = vmatpush1.msra.mxu0 %v3113
    %3175 = vmatprep.subr.mxu0 0.0
    %3176 = vmatpush1.msra.mxu0 %v3114
    %3177 = vmatprep.subr.mxu0 0.0
    %3178 = vmatpush1.msra.mxu0 %v3115
    %3179 = vmatprep.subr.mxu0 0.0
    %3180 = vmatpush1.msra.mxu0 %v3116
    %3181 = vmatprep.subr.mxu0 0.0
    %3182 = vmatpush1.msra.mxu0 %v3117
    %3183 = vmatprep.subr.mxu0 0.0
    %3184 = vmatpush1.msra.mxu0 %v3118
    %3185 = vmatprep.subr.mxu0 0.0
    %3186 = vmatpush1.msra.mxu0 %v3119
    %3187 = vmatprep.subr.mxu0 0.0
    %3188 = vmatpush1.msra.mxu0 %v3120
    %3189 = vmatprep.subr.mxu0 0.0
    %3190 = vmatpush1.msra.mxu0 %v3121
    %3191 = vmatprep.subr.mxu0 0.0
    %3192 = vmatpush1.msra.mxu0 %v3122
    %3193 = vmatprep.subr.mxu0 0.0
    %3194 = vmatpush1.msra.mxu0 %v3123
    %3195 = vmatprep.mubr.f32.mxu0 %v3091
    %3196 = vmatmul.mubr.f32.gmra.mrb[0].mxu0 %v3090
    %v3197 = vpop.f32.mrb[0].mxu0
    %v3198 = vadd.f32 %v3129, %v3197
    %v3199 = vpop.f32.mrb[0].mxu0
    %3200 = vdwg.mxu0
    %vm3201 = vcmask 39936
    %3202 = vst.msk [vmem:[%s6] sm:$0xff] %vm3201, %v3198
    // Predicated region
    $region22: #{timeseries_classifier.1} parent=1 // pred_check
      _
    $region23: #{timeseries_classifier.1} parent=1 // pred_check_branch
      %3204 = sbr.rel (0) target = $region25
    $region24: #{timeseries_classifier.1} parent=1 // pred_region
      _
    $region25: #{timeseries_classifier.1} parent=1 // pred_fallthru
      _
    // Predicated region
    $region26: #{timeseries_classifier.1} parent=1 // pred_check
      _
    $region27: #{timeseries_classifier.1} parent=1 // pred_check_branch
      %3206 = sbr.rel (0) target = $region29
    $region28: #{timeseries_classifier.1} parent=1 // pred_region
      _
    $region29: #{timeseries_classifier.1} parent=1 // pred_fallthru
      _
  %3207 = vsyncmov [#allocation4]
  %s3208 = vpop.sfrf %3207
  %p3209 = scmp.eq.s32.totalorder %s3208, 0
  %p3210 = pneg %p3209
  %3212 = shalt.err (%p3210)

</llo_original>
